<compile_context>
chip_gen: v7x
topology: tpu7x:2x2x1
jax: 0.10.0
libtpu: 0.0.40
codegen_flags: <defaults>
</compile_context>

<pallas_src>
import functools

import jax
import jax.numpy as jnp
from jax.experimental import pallas as pl
from jax.experimental.pallas import tpu as pltpu


def wave_block_kernel(x_hbm, w0_ref, b0_ref, wfg_ref, bfg_ref, wr_ref, br_ref,
                      out_ref, x_buf, dma_sem, *,
                      num_rates, kernel_size, t_block, halo, seq_len, dot_dtype):
    """One (batch, time-tile) pair per grid step; channels-first (C, T).

    x_hbm  : (B, Cin, T_up + 2*halo)   raw HBM ref (memory_space=pl.ANY)
    w0_ref : (Cout, Cin)               b0_ref : (Cout, 1)
    wfg_ref: (R, 2*Cout, K*Cout)       bfg_ref: (R, 2*Cout, 1)   (filter;gate fused)
    wr_ref : (R, Cout, Cout)           br_ref : (R, Cout, 1)
    out_ref: (1, Cout, t_block)
    x_buf  : VMEM (Cin, t_block + 2*halo) scratch, dma_sem: DMA semaphore
    """
    b = pl.program_id(0)
    t = pl.program_id(1)
    cout = w0_ref.shape[0]
    ext = t_block + 2 * halo                       # extended (haloed) tile width

    # DMA only this tile's haloed window into VMEM (x_hbm is already left-padded
    # by `halo`, so the window for tile t starts at element t*t_block).
    start = pl.multiple_of(t * t_block, 128)
    cp = pltpu.make_async_copy(x_hbm.at[b, :, pl.ds(start, ext)], x_buf, dma_sem)
    cp.start()
    cp.wait()

    # Columns whose global time index is outside [0, seq_len) play the role of
    # the PyTorch convs' zero padding -> force them to zero after every conv.
    # Broadcast the mask ONCE and reuse it (JAX does not CSE broadcast_in_dim).
    col = jax.lax.broadcasted_iota(jnp.int32, (1, ext), 1)
    gpos = col + (t * t_block - halo)
    keep = jnp.broadcast_to(jnp.logical_and(gpos >= 0, gpos < seq_len), (cout, ext))

    # conv[0]: 1x1 conv == (Cout, Cin) @ (Cin, ext), f32 accumulation.
    x_win = x_buf[...].astype(dot_dtype)
    h = jnp.dot(w0_ref[...], x_win, preferred_element_type=jnp.float32)
    h = h + b0_ref[...]
    h = jnp.where(keep, h, 0.0)
    res = h                                                          # (Cout, ext)

    for i in range(num_rates):                      # static unroll over rates
        d = 2 ** i
        pad = (d * (kernel_size - 1)) // 2

        # Fused filter+gate dilated conv as ONE matmul per rate:
        # stack the K dilated shifts along the contraction axis ->
        # (2*Cout, K*Cout) @ (K*Cout, ext).  Dilated time shifts are lane
        # rolls; wraparound garbage stays within the halo and never reaches
        # the central t_block columns (halo >= total receptive-field growth).
        h_lp = h.astype(dot_dtype)
        taps = []
        for k in range(kernel_size):
            shift = (pad - k * d) % ext
            taps.append(pltpu.roll(h_lp, shift=shift, axis=1) if shift else h_lp)
        stacked = jnp.concatenate(taps, axis=0)                      # (K*Cout, ext)

        fg = jnp.dot(wfg_ref[i], stacked, preferred_element_type=jnp.float32)
        fg = fg + bfg_ref[i]                                         # (2*Cout, ext)

        filt = jnp.tanh(fg[:cout])
        gate = 0.5 * (1.0 + jnp.tanh(0.5 * fg[cout:]))   # sigmoid via tanh (1 EUP op)
        gated = (filt * gate).astype(dot_dtype)                      # (Cout, ext)

        # conv[i+1]: 1x1 conv
        h = jnp.dot(wr_ref[i], gated, preferred_element_type=jnp.float32)
        h = h + br_ref[i]
        h = jnp.where(keep, h, 0.0)
        res = res + h

    # halo is a multiple of 128 -> aligned slice, lane-dense store.
    out_ref[0] = res[:, halo:halo + t_block].astype(out_ref.dtype)


def wave_block_pallas(x_nct, params, *, num_rates, kernel_size, t_block=512,
                      dot_dtype=None, vmem_limit_bytes=48 * 1024 * 1024):
    """x_nct: (B, Cin, T) channels-first (same layout PyTorch uses).

    Returns (B, Cout, T).  `t_block` is the time tile (tune per generation:
    ~512-1024 on v7x, up to ~1024-2048 on v5e/v6e).  `dot_dtype=jnp.bfloat16`
    enables the bf16 MXU path (f32 accumulation) for v6e/v7x.
    """
    # Even kernel_size makes the module's int(d*(K-1)/2) padding asymmetric
    # (output length changes and the residual add breaks in PyTorch too).
    assert kernel_size % 2 == 1, "Wave_Block requires odd kernel_size"

    B, Cin, T = x_nct.shape
    Cout = params["w0"].shape[0]
    Rw, two_cout, KC = params["wfg"].shape          # (R, 2*Cout, K*Cout)
    assert Rw == num_rates and two_cout == 2 * Cout

    if dot_dtype is None:
        dot_dtype = x_nct.dtype

    # Lane-aligned time tile; don't let it exceed the (128-rounded) seq length.
    t_block = max(128, (int(t_block) // 128) * 128)
    t_block = min(t_block, max(128, ((T + 127) // 128) * 128))
    n_t = -(-T // t_block)
    T_up = n_t * t_block

    # Per-side halo >= total receptive-field growth over all rates, rounded up
    # to 128 so the extended window and output extraction stay lane-aligned.
    true_halo = sum((2 ** i * (kernel_size - 1)) // 2 for i in range(num_rates))
    halo = max(128, ((true_halo + 127) // 128) * 128)
    ext = t_block + 2 * halo

    # Left pad = halo; right pad = halo + (T_up - T).  Out-of-sequence columns
    # are re-zeroed in-kernel after every conv (bias removal), reproducing the
    # PyTorch zero-padding semantics exactly; extra output columns are sliced.
    x_padded = jnp.pad(x_nct, ((0, 0), (0, 0), (halo, halo + (T_up - T))))

    # Weights feed the MXU in dot_dtype (bf16 on v6e/v7x); biases stay f32 and
    # are added to the f32 accumulators.
    w0 = params["w0"].astype(dot_dtype)
    wfg = params["wfg"].astype(dot_dtype)
    wr = params["wr"].astype(dot_dtype)
    b0 = params["b0"].astype(jnp.float32)
    bfg = params["bfg"].astype(jnp.float32)
    br = params["br"].astype(jnp.float32)

    kernel = functools.partial(
        wave_block_kernel,
        num_rates=num_rates, kernel_size=kernel_size,
        t_block=t_block, halo=halo, seq_len=T, dot_dtype=dot_dtype)

    def run(single_buffer_weights):
        def wspec(shape, index_map):
            # Constant-index-map weights only need a single resident buffer.
            if single_buffer_weights:
                return pl.BlockSpec(shape, index_map,
                                    pipeline_mode=pl.Buffered(1))
            return pl.BlockSpec(shape, index_map)

        return pl.pallas_call(
            kernel,
            out_shape=jax.ShapeDtypeStruct((B, Cout, T_up), x_nct.dtype),
            grid=(B, n_t),
            in_specs=[
                pl.BlockSpec(memory_space=pl.ANY),                  # x stays in HBM
                wspec((Cout, Cin), lambda b, t: (0, 0)),
                wspec((Cout, 1), lambda b, t: (0, 0)),
                wspec((num_rates, 2 * Cout, KC), lambda b, t: (0, 0, 0)),
                wspec((num_rates, 2 * Cout, 1), lambda b, t: (0, 0, 0)),
                wspec((num_rates, Cout, Cout), lambda b, t: (0, 0, 0)),
                wspec((num_rates, Cout, 1), lambda b, t: (0, 0, 0)),
            ],
            out_specs=pl.BlockSpec((1, Cout, t_block), lambda b, t: (b, 0, t)),
            scratch_shapes=[
                pltpu.VMEM((Cin, ext), x_padded.dtype),   # haloed input window
                pltpu.SemaphoreType.DMA,
            ],
            compiler_params=pltpu.CompilerParams(
                dimension_semantics=("parallel", "parallel"),
                vmem_limit_bytes=vmem_limit_bytes),
        )(x_padded, w0, b0, wfg, bfg, wr, br)

    try:
        out = jax.block_until_ready(run(True))
    except Exception:
        # pipeline_mode=pl.Buffered(1) unsupported on this jax version/backend:
        # fall back to default double-buffered weight blocks (same numerics).
        out = run(False)

    return out[:, :, :T]


def pack_wave_block_params(w0_t, b0_t, wf_t, bf_t, wg_t, bg_t, wr_t, br_t):
    """Convert PyTorch-layout Conv1d weights to the kernel's channels-first
    matmul layout.  Filter/gate weights are fused (stacked on the output
    channel axis) AND the K taps are packed along the contraction axis so the
    kernel does ONE (2*Cout, K*Cout) @ (K*Cout, ext) matmul per rate."""
    R, Cout, _, K = wf_t.shape
    wfg = jnp.concatenate([wf_t, wg_t], axis=1)               # (R, 2*Cout, Cout, K)
    # Pack so that column index (k*Cout + c_in) matches the kernel's tap stack.
    wfg = jnp.transpose(wfg, (0, 1, 3, 2)).reshape(R, 2 * Cout, K * Cout)
    return {
        "w0": w0_t[:, :, 0],                                  # (Cout, Cin)
        "b0": b0_t.reshape(Cout, 1),
        "wfg": wfg,                                           # (R, 2*Cout, K*Cout)
        "bfg": jnp.concatenate([bf_t, bg_t], axis=1).reshape(R, 2 * Cout, 1),
        "wr": wr_t[:, :, :, 0],                               # (R, Cout, Cout)
        "br": br_t.reshape(R, Cout, 1),
    }


# ---------------- reference (plain JAX, PyTorch Conv1d semantics) -------------

def _conv1d_ref(x_nct, w_oik, b, dilation, padding):
    out = jax.lax.conv_general_dilated(
        x_nct, w_oik, window_strides=(1,), padding=[(padding, padding)],
        rhs_dilation=(dilation,), dimension_numbers=("NCH", "OIH", "NCH"),
        precision=jax.lax.Precision.HIGHEST)
    return out + b[None, :, None]


def wave_block_ref(x_nct, torch_params, *, num_rates, kernel_size):
    w0, b0 = torch_params["conv0"]
    x = _conv1d_ref(x_nct, w0, b0, dilation=1, padding=0)
    res = x
    for i in range(num_rates):
        d = 2 ** i
        pad = int(d * (kernel_size - 1) / 2)
        wf, bf = torch_params["filter"][i]
        wg, bg = torch_params["gate"][i]
        wr, br = torch_params["res"][i]
        x = jnp.tanh(_conv1d_ref(x, wf, bf, d, pad)) * \
            jax.nn.sigmoid(_conv1d_ref(x, wg, bg, d, pad))
        x = _conv1d_ref(x, wr, br, dilation=1, padding=0)
        res = res + x
    return res


# ---------------------------------- main --------------------------------------

if __name__ == "__main__":
    B, Cin, Cout, T = 2, 8, 16, 640          # T not a multiple of t_block: tests padding
    num_rates, K = 3, 3

    key = jax.random.PRNGKey(0)
    keys = jax.random.split(key, 9)

    # PyTorch-layout parameters (O, I, K) for convs, deterministic init.
    scale = 0.1
    w0_t = scale * jax.random.normal(keys[0], (Cout, Cin, 1), jnp.float32)
    b0_t = scale * jax.random.normal(keys[1], (Cout,), jnp.float32)
    wf_t = scale * jax.random.normal(keys[2], (num_rates, Cout, Cout, K), jnp.float32)
    bf_t = scale * jax.random.normal(keys[3], (num_rates, Cout), jnp.float32)
    wg_t = scale * jax.random.normal(keys[4], (num_rates, Cout, Cout, K), jnp.float32)
    bg_t = scale * jax.random.normal(keys[5], (num_rates, Cout), jnp.float32)
    wr_t = scale * jax.random.normal(keys[6], (num_rates, Cout, Cout, 1), jnp.float32)
    br_t = scale * jax.random.normal(keys[7], (num_rates, Cout), jnp.float32)

    x_nct = jax.random.normal(keys[8], (B, Cin, T), jnp.float32)   # PyTorch NCT input

    params = pack_wave_block_params(w0_t, b0_t, wf_t, bf_t, wg_t, bg_t, wr_t, br_t)

    # f32 MXU path (default): tight check against the f32 reference.
    out_nct = wave_block_pallas(x_nct, params, num_rates=num_rates, kernel_size=K,
                                t_block=512)
    out_nct = jax.block_until_ready(out_nct)

    torch_params = {
        "conv0": (w0_t, b0_t),
        "filter": [(wf_t[i], bf_t[i]) for i in range(num_rates)],
        "gate": [(wg_t[i], bg_t[i]) for i in range(num_rates)],
        "res": [(wr_t[i], br_t[i]) for i in range(num_rates)],
    }
    ref = wave_block_ref(x_nct, torch_params, num_rates=num_rates, kernel_size=K)
    ref = jax.block_until_ready(ref)

    assert out_nct.shape == (B, Cout, T)
    max_err = float(jnp.max(jnp.abs(out_nct - ref)))
    assert max_err < 2e-3, f"f32 path mismatch vs reference: {max_err}"

    # bf16 MXU path (v6e/v7x feedback): f32 accumulation, looser tolerance.
    out_bf = wave_block_pallas(x_nct, params, num_rates=num_rates, kernel_size=K,
                               t_block=512, dot_dtype=jnp.bfloat16)
    out_bf = jax.block_until_ready(out_bf)
    max_err_bf = float(jnp.max(jnp.abs(out_bf - ref)))
    assert max_err_bf < 5e-2, f"bf16 path mismatch vs reference: {max_err_bf}"

    print("KERNEL_OK")
</pallas_src>

<mosaic_0001>
module attributes {stable_mosaic.version = 11 : i64} {
  func.func @wave_block_kernel(%arg0: i32, %arg1: i32, %arg2: memref<2x8x1280xf32, #tpu.memory_space<any>>, %arg3: memref<16x8xf32, #tpu.memory_space<vmem>>, %arg4: memref<16x1xf32, #tpu.memory_space<vmem>>, %arg5: memref<3x32x48xf32, #tpu.memory_space<vmem>>, %arg6: memref<3x32x1xf32, #tpu.memory_space<vmem>>, %arg7: memref<3x16x16xf32, #tpu.memory_space<vmem>>, %arg8: memref<3x16x1xf32, #tpu.memory_space<vmem>>, %arg9: memref<1x16x512xf32, #tpu.memory_space<vmem>>, %arg10: memref<8x768xf32, #tpu.memory_space<vmem>>, %arg11: memref<!tpu.dma_semaphore, #tpu.memory_space<semaphore_mem>>) attributes {dimension_semantics = [#tpu.dimension_semantics<parallel>, #tpu.dimension_semantics<parallel>], iteration_bounds = array<i64: 2, 2>, scalar_prefetch = 0 : i64, scratch_operands = 2 : i64, tpu.core_type = #tpu.core_type<tc>, window_params = [{}, {pipeline_mode = #tpu.pipeline_mode<synchronous>, transform_indices = @transform_1, window_bounds = array<i64: 16, 8>}, {pipeline_mode = #tpu.pipeline_mode<synchronous>, transform_indices = @transform_2, window_bounds = array<i64: 16, 1>}, {pipeline_mode = #tpu.pipeline_mode<synchronous>, transform_indices = @transform_3, window_bounds = array<i64: 3, 32, 48>}, {pipeline_mode = #tpu.pipeline_mode<synchronous>, transform_indices = @transform_4, window_bounds = array<i64: 3, 32, 1>}, {pipeline_mode = #tpu.pipeline_mode<synchronous>, transform_indices = @transform_5, window_bounds = array<i64: 3, 16, 16>}, {pipeline_mode = #tpu.pipeline_mode<synchronous>, transform_indices = @transform_6, window_bounds = array<i64: 3, 16, 1>}, {transform_indices = @transform_7, window_bounds = array<i64: 1, 16, 512>}]} {
    %c512_i32 = arith.constant 512 : i32
    %0 = arith.muli %arg1, %c512_i32 : i32
    %1 = tpu.assume_multiple %0, 128 : i32
    %c0_i32 = arith.constant 0 : i32
    %2 = tpu.memref_slice %arg2[%arg0, %c0_i32, %1] : memref<2x8x1280xf32, #tpu.memory_space<any>> -> memref<1x8x768xf32, #tpu.memory_space<any>>
    %3 = tpu.memref_squeeze %2 : memref<1x8x768xf32, #tpu.memory_space<any>> -> memref<8x768xf32, #tpu.memory_space<any>>
    tpu.enqueue_dma source(%3 : memref<8x768xf32, #tpu.memory_space<any>>) target(%arg10 : memref<8x768xf32, #tpu.memory_space<vmem>>) target_semaphore(%arg11 : memref<!tpu.dma_semaphore, #tpu.memory_space<semaphore_mem>>)
    %c0_i32_0 = arith.constant 0 : i32
    %4 = tpu.memref_slice %arg2[%arg0, %c0_i32_0, %1] : memref<2x8x1280xf32, #tpu.memory_space<any>> -> memref<1x8x768xf32, #tpu.memory_space<any>>
    %5 = tpu.memref_squeeze %4 : memref<1x8x768xf32, #tpu.memory_space<any>> -> memref<8x768xf32, #tpu.memory_space<any>>
    tpu.wait_dma2 semaphore(%arg11 : memref<!tpu.dma_semaphore, #tpu.memory_space<semaphore_mem>>) src(%5 : memref<8x768xf32, #tpu.memory_space<any>>) dst(%arg10 : memref<8x768xf32, #tpu.memory_space<vmem>>)
    %6 = tpu.iota {dimensions = array<i32: 1>} : vector<1x768xi32>
    %c512_i32_1 = arith.constant 512 : i32
    %7 = arith.muli %arg1, %c512_i32_1 : i32
    %c128_i32 = arith.constant 128 : i32
    %8 = arith.subi %7, %c128_i32 : i32
    %9 = vector.broadcast %8 : i32 to vector<1x768xi32>
    %10 = arith.addi %6, %9 : vector<1x768xi32>
    %c0_i32_2 = arith.constant 0 : i32
    %11 = vector.broadcast %c0_i32_2 : i32 to vector<1x768xi32>
    %12 = arith.cmpi sge, %10, %11 : vector<1x768xi32>
    %c640_i32 = arith.constant 640 : i32
    %13 = vector.broadcast %c640_i32 : i32 to vector<1x768xi32>
    %14 = arith.cmpi slt, %10, %13 : vector<1x768xi32>
    %15 = arith.andi %12, %14 : vector<1x768xi1>
    %16 = vector.shape_cast %15 : vector<1x768xi1> to vector<1x768xi1>
    %17 = vector.broadcast %16 : vector<1x768xi1> to vector<16x768xi1>
    %c0 = arith.constant 0 : index
    %c0_3 = arith.constant 0 : index
    %18 = vector.load %arg10[%c0, %c0_3] : memref<8x768xf32, #tpu.memory_space<vmem>>, vector<8x768xf32>
    %c0_4 = arith.constant 0 : index
    %c0_5 = arith.constant 0 : index
    %19 = vector.load %arg3[%c0_4, %c0_5] : memref<16x8xf32, #tpu.memory_space<vmem>>, vector<16x8xf32>
    %cst = arith.constant dense<0.000000e+00> : vector<16x768xf32>
    %20 = tpu.matmul %19, %18, %cst {dimension_numbers = #tpu.dot_dimension_numbers<[1], [0], [0], [1], [0, 0, 1, 1], [], []>} : vector<16x8xf32>, vector<8x768xf32>, vector<16x768xf32> -> vector<16x768xf32>
    %c0_6 = arith.constant 0 : index
    %c0_7 = arith.constant 0 : index
    %21 = vector.load %arg4[%c0_6, %c0_7] : memref<16x1xf32, #tpu.memory_space<vmem>>, vector<16x1xf32>
    %22 = vector.broadcast %21 : vector<16x1xf32> to vector<16x768xf32>
    %23 = arith.addf %20, %22 : vector<16x768xf32>
    %cst_8 = arith.constant 0.000000e+00 : f32
    %24 = vector.broadcast %cst_8 : f32 to vector<16x768xf32>
    %25 = arith.select %17, %23, %24 : vector<16x768xi1>, vector<16x768xf32>
    %c1_i32 = arith.constant 1 : i32
    %26 = tpu.dynamic_rotate %25 by %c1_i32 dim 1 : vector<16x768xf32>, i32 -> vector<16x768xf32>
    %c767_i32 = arith.constant 767 : i32
    %27 = tpu.dynamic_rotate %25 by %c767_i32 dim 1 : vector<16x768xf32>, i32 -> vector<16x768xf32>
    %28 = tpu.concatenate %26, %25, %27 in 0 : vector<16x768xf32>, vector<16x768xf32>, vector<16x768xf32> -> vector<48x768xf32>
    %c0_9 = arith.constant 0 : index
    %c0_10 = arith.constant 0 : index
    %c0_11 = arith.constant 0 : index
    %29 = vector.load %arg5[%c0_9, %c0_10, %c0_11] : memref<3x32x48xf32, #tpu.memory_space<vmem>>, vector<1x32x48xf32>
    %30 = vector.shape_cast %29 : vector<1x32x48xf32> to vector<32x48xf32>
    %cst_12 = arith.constant dense<0.000000e+00> : vector<32x768xf32>
    %31 = tpu.matmul %30, %28, %cst_12 {dimension_numbers = #tpu.dot_dimension_numbers<[1], [0], [0], [1], [0, 0, 1, 1], [], []>} : vector<32x48xf32>, vector<48x768xf32>, vector<32x768xf32> -> vector<32x768xf32>
    %c0_13 = arith.constant 0 : index
    %c0_14 = arith.constant 0 : index
    %c0_15 = arith.constant 0 : index
    %32 = vector.load %arg6[%c0_13, %c0_14, %c0_15] : memref<3x32x1xf32, #tpu.memory_space<vmem>>, vector<1x32x1xf32>
    %33 = vector.shape_cast %32 : vector<1x32x1xf32> to vector<32x1xf32>
    %34 = vector.broadcast %33 : vector<32x1xf32> to vector<32x768xf32>
    %35 = arith.addf %31, %34 : vector<32x768xf32>
    %36 = vector.extract_strided_slice %35 {offsets = [0, 0], sizes = [16, 768], strides = [1, 1]} : vector<32x768xf32> to vector<16x768xf32>
    %37 = math.tanh %36 : vector<16x768xf32>
    %38 = vector.extract_strided_slice %35 {offsets = [16, 0], sizes = [16, 768], strides = [1, 1]} : vector<32x768xf32> to vector<16x768xf32>
    %cst_16 = arith.constant 5.000000e-01 : f32
    %39 = vector.broadcast %cst_16 : f32 to vector<16x768xf32>
    %40 = arith.mulf %39, %38 : vector<16x768xf32>
    %41 = math.tanh %40 : vector<16x768xf32>
    %cst_17 = arith.constant 1.000000e+00 : f32
    %42 = vector.broadcast %cst_17 : f32 to vector<16x768xf32>
    %43 = arith.addf %42, %41 : vector<16x768xf32>
    %cst_18 = arith.constant 5.000000e-01 : f32
    %44 = vector.broadcast %cst_18 : f32 to vector<16x768xf32>
    %45 = arith.mulf %44, %43 : vector<16x768xf32>
    %46 = arith.mulf %37, %45 : vector<16x768xf32>
    %c0_19 = arith.constant 0 : index
    %c0_20 = arith.constant 0 : index
    %c0_21 = arith.constant 0 : index
    %47 = vector.load %arg7[%c0_19, %c0_20, %c0_21] : memref<3x16x16xf32, #tpu.memory_space<vmem>>, vector<1x16x16xf32>
    %48 = vector.shape_cast %47 : vector<1x16x16xf32> to vector<16x16xf32>
    %cst_22 = arith.constant dense<0.000000e+00> : vector<16x768xf32>
    %49 = tpu.matmul %48, %46, %cst_22 {dimension_numbers = #tpu.dot_dimension_numbers<[1], [0], [0], [1], [0, 0, 1, 1], [], []>} : vector<16x16xf32>, vector<16x768xf32>, vector<16x768xf32> -> vector<16x768xf32>
    %c0_23 = arith.constant 0 : index
    %c0_24 = arith.constant 0 : index
    %c0_25 = arith.constant 0 : index
    %50 = vector.load %arg8[%c0_23, %c0_24, %c0_25] : memref<3x16x1xf32, #tpu.memory_space<vmem>>, vector<1x16x1xf32>
    %51 = vector.shape_cast %50 : vector<1x16x1xf32> to vector<16x1xf32>
    %52 = vector.broadcast %51 : vector<16x1xf32> to vector<16x768xf32>
    %53 = arith.addf %49, %52 : vector<16x768xf32>
    %cst_26 = arith.constant 0.000000e+00 : f32
    %54 = vector.broadcast %cst_26 : f32 to vector<16x768xf32>
    %55 = arith.select %17, %53, %54 : vector<16x768xi1>, vector<16x768xf32>
    %56 = arith.addf %25, %55 : vector<16x768xf32>
    %c2_i32 = arith.constant 2 : i32
    %57 = tpu.dynamic_rotate %55 by %c2_i32 dim 1 : vector<16x768xf32>, i32 -> vector<16x768xf32>
    %c766_i32 = arith.constant 766 : i32
    %58 = tpu.dynamic_rotate %55 by %c766_i32 dim 1 : vector<16x768xf32>, i32 -> vector<16x768xf32>
    %59 = tpu.concatenate %57, %55, %58 in 0 : vector<16x768xf32>, vector<16x768xf32>, vector<16x768xf32> -> vector<48x768xf32>
    %c1 = arith.constant 1 : index
    %c0_27 = arith.constant 0 : index
    %c0_28 = arith.constant 0 : index
    %60 = vector.load %arg5[%c1, %c0_27, %c0_28] : memref<3x32x48xf32, #tpu.memory_space<vmem>>, vector<1x32x48xf32>
    %61 = vector.shape_cast %60 : vector<1x32x48xf32> to vector<32x48xf32>
    %cst_29 = arith.constant dense<0.000000e+00> : vector<32x768xf32>
    %62 = tpu.matmul %61, %59, %cst_29 {dimension_numbers = #tpu.dot_dimension_numbers<[1], [0], [0], [1], [0, 0, 1, 1], [], []>} : vector<32x48xf32>, vector<48x768xf32>, vector<32x768xf32> -> vector<32x768xf32>
    %c1_30 = arith.constant 1 : index
    %c0_31 = arith.constant 0 : index
    %c0_32 = arith.constant 0 : index
    %63 = vector.load %arg6[%c1_30, %c0_31, %c0_32] : memref<3x32x1xf32, #tpu.memory_space<vmem>>, vector<1x32x1xf32>
    %64 = vector.shape_cast %63 : vector<1x32x1xf32> to vector<32x1xf32>
    %65 = vector.broadcast %64 : vector<32x1xf32> to vector<32x768xf32>
    %66 = arith.addf %62, %65 : vector<32x768xf32>
    %67 = vector.extract_strided_slice %66 {offsets = [0, 0], sizes = [16, 768], strides = [1, 1]} : vector<32x768xf32> to vector<16x768xf32>
    %68 = math.tanh %67 : vector<16x768xf32>
    %69 = vector.extract_strided_slice %66 {offsets = [16, 0], sizes = [16, 768], strides = [1, 1]} : vector<32x768xf32> to vector<16x768xf32>
    %cst_33 = arith.constant 5.000000e-01 : f32
    %70 = vector.broadcast %cst_33 : f32 to vector<16x768xf32>
    %71 = arith.mulf %70, %69 : vector<16x768xf32>
    %72 = math.tanh %71 : vector<16x768xf32>
    %cst_34 = arith.constant 1.000000e+00 : f32
    %73 = vector.broadcast %cst_34 : f32 to vector<16x768xf32>
    %74 = arith.addf %73, %72 : vector<16x768xf32>
    %cst_35 = arith.constant 5.000000e-01 : f32
    %75 = vector.broadcast %cst_35 : f32 to vector<16x768xf32>
    %76 = arith.mulf %75, %74 : vector<16x768xf32>
    %77 = arith.mulf %68, %76 : vector<16x768xf32>
    %c1_36 = arith.constant 1 : index
    %c0_37 = arith.constant 0 : index
    %c0_38 = arith.constant 0 : index
    %78 = vector.load %arg7[%c1_36, %c0_37, %c0_38] : memref<3x16x16xf32, #tpu.memory_space<vmem>>, vector<1x16x16xf32>
    %79 = vector.shape_cast %78 : vector<1x16x16xf32> to vector<16x16xf32>
    %cst_39 = arith.constant dense<0.000000e+00> : vector<16x768xf32>
    %80 = tpu.matmul %79, %77, %cst_39 {dimension_numbers = #tpu.dot_dimension_numbers<[1], [0], [0], [1], [0, 0, 1, 1], [], []>} : vector<16x16xf32>, vector<16x768xf32>, vector<16x768xf32> -> vector<16x768xf32>
    %c1_40 = arith.constant 1 : index
    %c0_41 = arith.constant 0 : index
    %c0_42 = arith.constant 0 : index
    %81 = vector.load %arg8[%c1_40, %c0_41, %c0_42] : memref<3x16x1xf32, #tpu.memory_space<vmem>>, vector<1x16x1xf32>
    %82 = vector.shape_cast %81 : vector<1x16x1xf32> to vector<16x1xf32>
    %83 = vector.broadcast %82 : vector<16x1xf32> to vector<16x768xf32>
    %84 = arith.addf %80, %83 : vector<16x768xf32>
    %cst_43 = arith.constant 0.000000e+00 : f32
    %85 = vector.broadcast %cst_43 : f32 to vector<16x768xf32>
    %86 = arith.select %17, %84, %85 : vector<16x768xi1>, vector<16x768xf32>
    %87 = arith.addf %56, %86 : vector<16x768xf32>
    %c4_i32 = arith.constant 4 : i32
    %88 = tpu.dynamic_rotate %86 by %c4_i32 dim 1 : vector<16x768xf32>, i32 -> vector<16x768xf32>
    %c764_i32 = arith.constant 764 : i32
    %89 = tpu.dynamic_rotate %86 by %c764_i32 dim 1 : vector<16x768xf32>, i32 -> vector<16x768xf32>
    %90 = tpu.concatenate %88, %86, %89 in 0 : vector<16x768xf32>, vector<16x768xf32>, vector<16x768xf32> -> vector<48x768xf32>
    %c2 = arith.constant 2 : index
    %c0_44 = arith.constant 0 : index
    %c0_45 = arith.constant 0 : index
    %91 = vector.load %arg5[%c2, %c0_44, %c0_45] : memref<3x32x48xf32, #tpu.memory_space<vmem>>, vector<1x32x48xf32>
    %92 = vector.shape_cast %91 : vector<1x32x48xf32> to vector<32x48xf32>
    %cst_46 = arith.constant dense<0.000000e+00> : vector<32x768xf32>
    %93 = tpu.matmul %92, %90, %cst_46 {dimension_numbers = #tpu.dot_dimension_numbers<[1], [0], [0], [1], [0, 0, 1, 1], [], []>} : vector<32x48xf32>, vector<48x768xf32>, vector<32x768xf32> -> vector<32x768xf32>
    %c2_47 = arith.constant 2 : index
    %c0_48 = arith.constant 0 : index
    %c0_49 = arith.constant 0 : index
    %94 = vector.load %arg6[%c2_47, %c0_48, %c0_49] : memref<3x32x1xf32, #tpu.memory_space<vmem>>, vector<1x32x1xf32>
    %95 = vector.shape_cast %94 : vector<1x32x1xf32> to vector<32x1xf32>
    %96 = vector.broadcast %95 : vector<32x1xf32> to vector<32x768xf32>
    %97 = arith.addf %93, %96 : vector<32x768xf32>
    %98 = vector.extract_strided_slice %97 {offsets = [0, 0], sizes = [16, 768], strides = [1, 1]} : vector<32x768xf32> to vector<16x768xf32>
    %99 = math.tanh %98 : vector<16x768xf32>
    %100 = vector.extract_strided_slice %97 {offsets = [16, 0], sizes = [16, 768], strides = [1, 1]} : vector<32x768xf32> to vector<16x768xf32>
    %cst_50 = arith.constant 5.000000e-01 : f32
    %101 = vector.broadcast %cst_50 : f32 to vector<16x768xf32>
    %102 = arith.mulf %101, %100 : vector<16x768xf32>
    %103 = math.tanh %102 : vector<16x768xf32>
    %cst_51 = arith.constant 1.000000e+00 : f32
    %104 = vector.broadcast %cst_51 : f32 to vector<16x768xf32>
    %105 = arith.addf %104, %103 : vector<16x768xf32>
    %cst_52 = arith.constant 5.000000e-01 : f32
    %106 = vector.broadcast %cst_52 : f32 to vector<16x768xf32>
    %107 = arith.mulf %106, %105 : vector<16x768xf32>
    %108 = arith.mulf %99, %107 : vector<16x768xf32>
    %c2_53 = arith.constant 2 : index
    %c0_54 = arith.constant 0 : index
    %c0_55 = arith.constant 0 : index
    %109 = vector.load %arg7[%c2_53, %c0_54, %c0_55] : memref<3x16x16xf32, #tpu.memory_space<vmem>>, vector<1x16x16xf32>
    %110 = vector.shape_cast %109 : vector<1x16x16xf32> to vector<16x16xf32>
    %cst_56 = arith.constant dense<0.000000e+00> : vector<16x768xf32>
    %111 = tpu.matmul %110, %108, %cst_56 {dimension_numbers = #tpu.dot_dimension_numbers<[1], [0], [0], [1], [0, 0, 1, 1], [], []>} : vector<16x16xf32>, vector<16x768xf32>, vector<16x768xf32> -> vector<16x768xf32>
    %c2_57 = arith.constant 2 : index
    %c0_58 = arith.constant 0 : index
    %c0_59 = arith.constant 0 : index
    %112 = vector.load %arg8[%c2_57, %c0_58, %c0_59] : memref<3x16x1xf32, #tpu.memory_space<vmem>>, vector<1x16x1xf32>
    %113 = vector.shape_cast %112 : vector<1x16x1xf32> to vector<16x1xf32>
    %114 = vector.broadcast %113 : vector<16x1xf32> to vector<16x768xf32>
    %115 = arith.addf %111, %114 : vector<16x768xf32>
    %cst_60 = arith.constant 0.000000e+00 : f32
    %116 = vector.broadcast %cst_60 : f32 to vector<16x768xf32>
    %117 = arith.select %17, %115, %116 : vector<16x768xi1>, vector<16x768xf32>
    %118 = arith.addf %87, %117 : vector<16x768xf32>
    %119 = vector.extract_strided_slice %118 {offsets = [0, 128], sizes = [16, 512], strides = [1, 1]} : vector<16x768xf32> to vector<16x512xf32>
    %c0_61 = arith.constant 0 : index
    %c0_62 = arith.constant 0 : index
    %c0_63 = arith.constant 0 : index
    %120 = vector.load %arg9[%c0_61, %c0_62, %c0_63] : memref<1x16x512xf32, #tpu.memory_space<vmem>>, vector<1x16x512xf32>
    %121 = vector.shape_cast %120 : vector<1x16x512xf32> to vector<16x512xf32>
    %122 = vector.shape_cast %119 : vector<16x512xf32> to vector<1x16x512xf32>
    tpu.vector_store %arg9[%c0_61, %c0_62, %c0_63], %122 {strides = array<i32>} : memref<1x16x512xf32, #tpu.memory_space<vmem>>, vector<1x16x512xf32>,
    return
  }
  func.func @transform_1(%arg0: i32, %arg1: i32) -> (i32, i32) {
    %c0_i32 = arith.constant 0 : i32
    %c0_i32_0 = arith.constant 0 : i32
    %c0_i32_1 = arith.constant 0 : i32
    return %c0_i32, %c0_i32_0 : i32, i32
  }
  func.func @transform_2(%arg0: i32, %arg1: i32) -> (i32, i32) {
    %c0_i32 = arith.constant 0 : i32
    %c0_i32_0 = arith.constant 0 : i32
    %c0_i32_1 = arith.constant 0 : i32
    return %c0_i32, %c0_i32_0 : i32, i32
  }
  func.func @transform_3(%arg0: i32, %arg1: i32) -> (i32, i32, i32) {
    %c0_i32 = arith.constant 0 : i32
    %c0_i32_0 = arith.constant 0 : i32
    %c0_i32_1 = arith.constant 0 : i32
    %c0_i32_2 = arith.constant 0 : i32
    return %c0_i32, %c0_i32_0, %c0_i32_1 : i32, i32, i32
  }
  func.func @transform_4(%arg0: i32, %arg1: i32) -> (i32, i32, i32) {
    %c0_i32 = arith.constant 0 : i32
    %c0_i32_0 = arith.constant 0 : i32
    %c0_i32_1 = arith.constant 0 : i32
    %c0_i32_2 = arith.constant 0 : i32
    return %c0_i32, %c0_i32_0, %c0_i32_1 : i32, i32, i32
  }
  func.func @transform_5(%arg0: i32, %arg1: i32) -> (i32, i32, i32) {
    %c0_i32 = arith.constant 0 : i32
    %c0_i32_0 = arith.constant 0 : i32
    %c0_i32_1 = arith.constant 0 : i32
    %c0_i32_2 = arith.constant 0 : i32
    return %c0_i32, %c0_i32_0, %c0_i32_1 : i32, i32, i32
  }
  func.func @transform_6(%arg0: i32, %arg1: i32) -> (i32, i32, i32) {
    %c0_i32 = arith.constant 0 : i32
    %c0_i32_0 = arith.constant 0 : i32
    %c0_i32_1 = arith.constant 0 : i32
    %c0_i32_2 = arith.constant 0 : i32
    return %c0_i32, %c0_i32_0, %c0_i32_1 : i32, i32, i32
  }
  func.func @transform_7(%arg0: i32, %arg1: i32) -> (i32, i32, i32) {
    %c0_i32 = arith.constant 0 : i32
    %c0_i32_0 = arith.constant 0 : i32
    return %arg0, %c0_i32, %arg1 : i32, i32, i32
  }
}

module attributes {stable_mosaic.version = 11 : i64} {
  func.func @wave_block_kernel(%arg0: i32, %arg1: i32, %arg2: memref<2x8x1280xf32, #tpu.memory_space<any>>, %arg3: memref<16x8xf32, #tpu.memory_space<vmem>>, %arg4: memref<16x1xf32, #tpu.memory_space<vmem>>, %arg5: memref<3x32x48xf32, #tpu.memory_space<vmem>>, %arg6: memref<3x32x1xf32, #tpu.memory_space<vmem>>, %arg7: memref<3x16x16xf32, #tpu.memory_space<vmem>>, %arg8: memref<3x16x1xf32, #tpu.memory_space<vmem>>, %arg9: memref<1x16x512xf32, #tpu.memory_space<vmem>>, %arg10: memref<8x768xf32, #tpu.memory_space<vmem>>, %arg11: memref<!tpu.dma_semaphore, #tpu.memory_space<semaphore_mem>>) attributes {dimension_semantics = [#tpu.dimension_semantics<parallel>, #tpu.dimension_semantics<parallel>], iteration_bounds = array<i64: 2, 2>, scalar_prefetch = 0 : i64, scratch_operands = 2 : i64, tpu.core_type = #tpu.core_type<tc>, window_params = [{}, {pipeline_mode = #tpu.pipeline_mode<synchronous>, transform_indices = @transform_1, window_bounds = array<i64: 16, 8>}, {pipeline_mode = #tpu.pipeline_mode<synchronous>, transform_indices = @transform_2, window_bounds = array<i64: 16, 1>}, {pipeline_mode = #tpu.pipeline_mode<synchronous>, transform_indices = @transform_3, window_bounds = array<i64: 3, 32, 48>}, {pipeline_mode = #tpu.pipeline_mode<synchronous>, transform_indices = @transform_4, window_bounds = array<i64: 3, 32, 1>}, {pipeline_mode = #tpu.pipeline_mode<synchronous>, transform_indices = @transform_5, window_bounds = array<i64: 3, 16, 16>}, {pipeline_mode = #tpu.pipeline_mode<synchronous>, transform_indices = @transform_6, window_bounds = array<i64: 3, 16, 1>}, {transform_indices = @transform_7, window_bounds = array<i64: 1, 16, 512>}]} {
    %c512_i32 = arith.constant 512 : i32
    %0 = arith.muli %arg1, %c512_i32 : i32
    %1 = tpu.assume_multiple %0, 128 : i32
    %c0_i32 = arith.constant 0 : i32
    %2 = tpu.memref_slice %arg2[%arg0, %c0_i32, %1] : memref<2x8x1280xf32, #tpu.memory_space<any>> -> memref<1x8x768xf32, #tpu.memory_space<any>>
    %3 = tpu.memref_squeeze %2 : memref<1x8x768xf32, #tpu.memory_space<any>> -> memref<8x768xf32, #tpu.memory_space<any>>
    tpu.enqueue_dma source(%3 : memref<8x768xf32, #tpu.memory_space<any>>) target(%arg10 : memref<8x768xf32, #tpu.memory_space<vmem>>) target_semaphore(%arg11 : memref<!tpu.dma_semaphore, #tpu.memory_space<semaphore_mem>>)
    %c0_i32_0 = arith.constant 0 : i32
    %4 = tpu.memref_slice %arg2[%arg0, %c0_i32_0, %1] : memref<2x8x1280xf32, #tpu.memory_space<any>> -> memref<1x8x768xf32, #tpu.memory_space<any>>
    %5 = tpu.memref_squeeze %4 : memref<1x8x768xf32, #tpu.memory_space<any>> -> memref<8x768xf32, #tpu.memory_space<any>>
    tpu.wait_dma2 semaphore(%arg11 : memref<!tpu.dma_semaphore, #tpu.memory_space<semaphore_mem>>) src(%5 : memref<8x768xf32, #tpu.memory_space<any>>) dst(%arg10 : memref<8x768xf32, #tpu.memory_space<vmem>>)
    %6 = tpu.iota {dimensions = array<i32: 1>} : vector<1x768xi32>
    %c512_i32_1 = arith.constant 512 : i32
    %7 = arith.muli %arg1, %c512_i32_1 : i32
    %c128_i32 = arith.constant 128 : i32
    %8 = arith.subi %7, %c128_i32 : i32
    %9 = vector.broadcast %8 : i32 to vector<1x768xi32>
    %10 = arith.addi %6, %9 : vector<1x768xi32>
    %c0_i32_2 = arith.constant 0 : i32
    %11 = vector.broadcast %c0_i32_2 : i32 to vector<1x768xi32>
    %12 = arith.cmpi sge, %10, %11 : vector<1x768xi32>
    %c640_i32 = arith.constant 640 : i32
    %13 = vector.broadcast %c640_i32 : i32 to vector<1x768xi32>
    %14 = arith.cmpi slt, %10, %13 : vector<1x768xi32>
    %15 = arith.andi %12, %14 : vector<1x768xi1>
    %16 = vector.shape_cast %15 : vector<1x768xi1> to vector<1x768xi1>
    %17 = vector.broadcast %16 : vector<1x768xi1> to vector<16x768xi1>
    %c0 = arith.constant 0 : index
    %c0_3 = arith.constant 0 : index
    %18 = vector.load %arg10[%c0, %c0_3] : memref<8x768xf32, #tpu.memory_space<vmem>>, vector<8x768xf32>
    %c0_4 = arith.constant 0 : index
    %c0_5 = arith.constant 0 : index
    %19 = vector.load %arg3[%c0_4, %c0_5] : memref<16x8xf32, #tpu.memory_space<vmem>>, vector<16x8xf32>
    %cst = arith.constant dense<0.000000e+00> : vector<16x768xf32>
    %20 = tpu.matmul %19, %18, %cst {dimension_numbers = #tpu.dot_dimension_numbers<[1], [0], [0], [1], [0, 0, 1, 1], [], []>} : vector<16x8xf32>, vector<8x768xf32>, vector<16x768xf32> -> vector<16x768xf32>
    %c0_6 = arith.constant 0 : index
    %c0_7 = arith.constant 0 : index
    %21 = vector.load %arg4[%c0_6, %c0_7] : memref<16x1xf32, #tpu.memory_space<vmem>>, vector<16x1xf32>
    %22 = vector.broadcast %21 : vector<16x1xf32> to vector<16x768xf32>
    %23 = arith.addf %20, %22 : vector<16x768xf32>
    %cst_8 = arith.constant 0.000000e+00 : f32
    %24 = vector.broadcast %cst_8 : f32 to vector<16x768xf32>
    %25 = arith.select %17, %23, %24 : vector<16x768xi1>, vector<16x768xf32>
    %c1_i32 = arith.constant 1 : i32
    %26 = tpu.dynamic_rotate %25 by %c1_i32 dim 1 : vector<16x768xf32>, i32 -> vector<16x768xf32>
    %c767_i32 = arith.constant 767 : i32
    %27 = tpu.dynamic_rotate %25 by %c767_i32 dim 1 : vector<16x768xf32>, i32 -> vector<16x768xf32>
    %28 = tpu.concatenate %26, %25, %27 in 0 : vector<16x768xf32>, vector<16x768xf32>, vector<16x768xf32> -> vector<48x768xf32>
    %c0_9 = arith.constant 0 : index
    %c0_10 = arith.constant 0 : index
    %c0_11 = arith.constant 0 : index
    %29 = vector.load %arg5[%c0_9, %c0_10, %c0_11] : memref<3x32x48xf32, #tpu.memory_space<vmem>>, vector<1x32x48xf32>
    %30 = vector.shape_cast %29 : vector<1x32x48xf32> to vector<32x48xf32>
    %cst_12 = arith.constant dense<0.000000e+00> : vector<32x768xf32>
    %31 = tpu.matmul %30, %28, %cst_12 {dimension_numbers = #tpu.dot_dimension_numbers<[1], [0], [0], [1], [0, 0, 1, 1], [], []>} : vector<32x48xf32>, vector<48x768xf32>, vector<32x768xf32> -> vector<32x768xf32>
    %c0_13 = arith.constant 0 : index
    %c0_14 = arith.constant 0 : index
    %c0_15 = arith.constant 0 : index
    %32 = vector.load %arg6[%c0_13, %c0_14, %c0_15] : memref<3x32x1xf32, #tpu.memory_space<vmem>>, vector<1x32x1xf32>
    %33 = vector.shape_cast %32 : vector<1x32x1xf32> to vector<32x1xf32>
    %34 = vector.broadcast %33 : vector<32x1xf32> to vector<32x768xf32>
    %35 = arith.addf %31, %34 : vector<32x768xf32>
    %36 = vector.extract_strided_slice %35 {offsets = [0, 0], sizes = [16, 768], strides = [1, 1]} : vector<32x768xf32> to vector<16x768xf32>
    %37 = math.tanh %36 : vector<16x768xf32>
    %38 = vector.extract_strided_slice %35 {offsets = [16, 0], sizes = [16, 768], strides = [1, 1]} : vector<32x768xf32> to vector<16x768xf32>
    %cst_16 = arith.constant 5.000000e-01 : f32
    %39 = vector.broadcast %cst_16 : f32 to vector<16x768xf32>
    %40 = arith.mulf %39, %38 : vector<16x768xf32>
    %41 = math.tanh %40 : vector<16x768xf32>
    %cst_17 = arith.constant 1.000000e+00 : f32
    %42 = vector.broadcast %cst_17 : f32 to vector<16x768xf32>
    %43 = arith.addf %42, %41 : vector<16x768xf32>
    %cst_18 = arith.constant 5.000000e-01 : f32
    %44 = vector.broadcast %cst_18 : f32 to vector<16x768xf32>
    %45 = arith.mulf %44, %43 : vector<16x768xf32>
    %46 = arith.mulf %37, %45 : vector<16x768xf32>
    %c0_19 = arith.constant 0 : index
    %c0_20 = arith.constant 0 : index
    %c0_21 = arith.constant 0 : index
    %47 = vector.load %arg7[%c0_19, %c0_20, %c0_21] : memref<3x16x16xf32, #tpu.memory_space<vmem>>, vector<1x16x16xf32>
    %48 = vector.shape_cast %47 : vector<1x16x16xf32> to vector<16x16xf32>
    %cst_22 = arith.constant dense<0.000000e+00> : vector<16x768xf32>
    %49 = tpu.matmul %48, %46, %cst_22 {dimension_numbers = #tpu.dot_dimension_numbers<[1], [0], [0], [1], [0, 0, 1, 1], [], []>} : vector<16x16xf32>, vector<16x768xf32>, vector<16x768xf32> -> vector<16x768xf32>
    %c0_23 = arith.constant 0 : index
    %c0_24 = arith.constant 0 : index
    %c0_25 = arith.constant 0 : index
    %50 = vector.load %arg8[%c0_23, %c0_24, %c0_25] : memref<3x16x1xf32, #tpu.memory_space<vmem>>, vector<1x16x1xf32>
    %51 = vector.shape_cast %50 : vector<1x16x1xf32> to vector<16x1xf32>
    %52 = vector.broadcast %51 : vector<16x1xf32> to vector<16x768xf32>
    %53 = arith.addf %49, %52 : vector<16x768xf32>
    %cst_26 = arith.constant 0.000000e+00 : f32
    %54 = vector.broadcast %cst_26 : f32 to vector<16x768xf32>
    %55 = arith.select %17, %53, %54 : vector<16x768xi1>, vector<16x768xf32>
    %56 = arith.addf %25, %55 : vector<16x768xf32>
    %c2_i32 = arith.constant 2 : i32
    %57 = tpu.dynamic_rotate %55 by %c2_i32 dim 1 : vector<16x768xf32>, i32 -> vector<16x768xf32>
    %c766_i32 = arith.constant 766 : i32
    %58 = tpu.dynamic_rotate %55 by %c766_i32 dim 1 : vector<16x768xf32>, i32 -> vector<16x768xf32>
    %59 = tpu.concatenate %57, %55, %58 in 0 : vector<16x768xf32>, vector<16x768xf32>, vector<16x768xf32> -> vector<48x768xf32>
    %c1 = arith.constant 1 : index
    %c0_27 = arith.constant 0 : index
    %c0_28 = arith.constant 0 : index
    %60 = vector.load %arg5[%c1, %c0_27, %c0_28] : memref<3x32x48xf32, #tpu.memory_space<vmem>>, vector<1x32x48xf32>
    %61 = vector.shape_cast %60 : vector<1x32x48xf32> to vector<32x48xf32>
    %cst_29 = arith.constant dense<0.000000e+00> : vector<32x768xf32>
    %62 = tpu.matmul %61, %59, %cst_29 {dimension_numbers = #tpu.dot_dimension_numbers<[1], [0], [0], [1], [0, 0, 1, 1], [], []>} : vector<32x48xf32>, vector<48x768xf32>, vector<32x768xf32> -> vector<32x768xf32>
    %c1_30 = arith.constant 1 : index
    %c0_31 = arith.constant 0 : index
    %c0_32 = arith.constant 0 : index
    %63 = vector.load %arg6[%c1_30, %c0_31, %c0_32] : memref<3x32x1xf32, #tpu.memory_space<vmem>>, vector<1x32x1xf32>
    %64 = vector.shape_cast %63 : vector<1x32x1xf32> to vector<32x1xf32>
    %65 = vector.broadcast %64 : vector<32x1xf32> to vector<32x768xf32>
    %66 = arith.addf %62, %65 : vector<32x768xf32>
    %67 = vector.extract_strided_slice %66 {offsets = [0, 0], sizes = [16, 768], strides = [1, 1]} : vector<32x768xf32> to vector<16x768xf32>
    %68 = math.tanh %67 : vector<16x768xf32>
    %69 = vector.extract_strided_slice %66 {offsets = [16, 0], sizes = [16, 768], strides = [1, 1]} : vector<32x768xf32> to vector<16x768xf32>
    %cst_33 = arith.constant 5.000000e-01 : f32
    %70 = vector.broadcast %cst_33 : f32 to vector<16x768xf32>
    %71 = arith.mulf %70, %69 : vector<16x768xf32>
    %72 = math.tanh %71 : vector<16x768xf32>
    %cst_34 = arith.constant 1.000000e+00 : f32
    %73 = vector.broadcast %cst_34 : f32 to vector<16x768xf32>
    %74 = arith.addf %73, %72 : vector<16x768xf32>
    %cst_35 = arith.constant 5.000000e-01 : f32
    %75 = vector.broadcast %cst_35 : f32 to vector<16x768xf32>
    %76 = arith.mulf %75, %74 : vector<16x768xf32>
    %77 = arith.mulf %68, %76 : vector<16x768xf32>
    %c1_36 = arith.constant 1 : index
    %c0_37 = arith.constant 0 : index
    %c0_38 = arith.constant 0 : index
    %78 = vector.load %arg7[%c1_36, %c0_37, %c0_38] : memref<3x16x16xf32, #tpu.memory_space<vmem>>, vector<1x16x16xf32>
    %79 = vector.shape_cast %78 : vector<1x16x16xf32> to vector<16x16xf32>
    %cst_39 = arith.constant dense<0.000000e+00> : vector<16x768xf32>
    %80 = tpu.matmul %79, %77, %cst_39 {dimension_numbers = #tpu.dot_dimension_numbers<[1], [0], [0], [1], [0, 0, 1, 1], [], []>} : vector<16x16xf32>, vector<16x768xf32>, vector<16x768xf32> -> vector<16x768xf32>
    %c1_40 = arith.constant 1 : index
    %c0_41 = arith.constant 0 : index
    %c0_42 = arith.constant 0 : index
    %81 = vector.load %arg8[%c1_40, %c0_41, %c0_42] : memref<3x16x1xf32, #tpu.memory_space<vmem>>, vector<1x16x1xf32>
    %82 = vector.shape_cast %81 : vector<1x16x1xf32> to vector<16x1xf32>
    %83 = vector.broadcast %82 : vector<16x1xf32> to vector<16x768xf32>
    %84 = arith.addf %80, %83 : vector<16x768xf32>
    %cst_43 = arith.constant 0.000000e+00 : f32
    %85 = vector.broadcast %cst_43 : f32 to vector<16x768xf32>
    %86 = arith.select %17, %84, %85 : vector<16x768xi1>, vector<16x768xf32>
    %87 = arith.addf %56, %86 : vector<16x768xf32>
    %c4_i32 = arith.constant 4 : i32
    %88 = tpu.dynamic_rotate %86 by %c4_i32 dim 1 : vector<16x768xf32>, i32 -> vector<16x768xf32>
    %c764_i32 = arith.constant 764 : i32
    %89 = tpu.dynamic_rotate %86 by %c764_i32 dim 1 : vector<16x768xf32>, i32 -> vector<16x768xf32>
    %90 = tpu.concatenate %88, %86, %89 in 0 : vector<16x768xf32>, vector<16x768xf32>, vector<16x768xf32> -> vector<48x768xf32>
    %c2 = arith.constant 2 : index
    %c0_44 = arith.constant 0 : index
    %c0_45 = arith.constant 0 : index
    %91 = vector.load %arg5[%c2, %c0_44, %c0_45] : memref<3x32x48xf32, #tpu.memory_space<vmem>>, vector<1x32x48xf32>
    %92 = vector.shape_cast %91 : vector<1x32x48xf32> to vector<32x48xf32>
    %cst_46 = arith.constant dense<0.000000e+00> : vector<32x768xf32>
    %93 = tpu.matmul %92, %90, %cst_46 {dimension_numbers = #tpu.dot_dimension_numbers<[1], [0], [0], [1], [0, 0, 1, 1], [], []>} : vector<32x48xf32>, vector<48x768xf32>, vector<32x768xf32> -> vector<32x768xf32>
    %c2_47 = arith.constant 2 : index
    %c0_48 = arith.constant 0 : index
    %c0_49 = arith.constant 0 : index
    %94 = vector.load %arg6[%c2_47, %c0_48, %c0_49] : memref<3x32x1xf32, #tpu.memory_space<vmem>>, vector<1x32x1xf32>
    %95 = vector.shape_cast %94 : vector<1x32x1xf32> to vector<32x1xf32>
    %96 = vector.broadcast %95 : vector<32x1xf32> to vector<32x768xf32>
    %97 = arith.addf %93, %96 : vector<32x768xf32>
    %98 = vector.extract_strided_slice %97 {offsets = [0, 0], sizes = [16, 768], strides = [1, 1]} : vector<32x768xf32> to vector<16x768xf32>
    %99 = math.tanh %98 : vector<16x768xf32>
    %100 = vector.extract_strided_slice %97 {offsets = [16, 0], sizes = [16, 768], strides = [1, 1]} : vector<32x768xf32> to vector<16x768xf32>
    %cst_50 = arith.constant 5.000000e-01 : f32
    %101 = vector.broadcast %cst_50 : f32 to vector<16x768xf32>
    %102 = arith.mulf %101, %100 : vector<16x768xf32>
    %103 = math.tanh %102 : vector<16x768xf32>
    %cst_51 = arith.constant 1.000000e+00 : f32
    %104 = vector.broadcast %cst_51 : f32 to vector<16x768xf32>
    %105 = arith.addf %104, %103 : vector<16x768xf32>
    %cst_52 = arith.constant 5.000000e-01 : f32
    %106 = vector.broadcast %cst_52 : f32 to vector<16x768xf32>
    %107 = arith.mulf %106, %105 : vector<16x768xf32>
    %108 = arith.mulf %99, %107 : vector<16x768xf32>
    %c2_53 = arith.constant 2 : index
    %c0_54 = arith.constant 0 : index
    %c0_55 = arith.constant 0 : index
    %109 = vector.load %arg7[%c2_53, %c0_54, %c0_55] : memref<3x16x16xf32, #tpu.memory_space<vmem>>, vector<1x16x16xf32>
    %110 = vector.shape_cast %109 : vector<1x16x16xf32> to vector<16x16xf32>
    %cst_56 = arith.constant dense<0.000000e+00> : vector<16x768xf32>
    %111 = tpu.matmul %110, %108, %cst_56 {dimension_numbers = #tpu.dot_dimension_numbers<[1], [0], [0], [1], [0, 0, 1, 1], [], []>} : vector<16x16xf32>, vector<16x768xf32>, vector<16x768xf32> -> vector<16x768xf32>
    %c2_57 = arith.constant 2 : index
    %c0_58 = arith.constant 0 : index
    %c0_59 = arith.constant 0 : index
    %112 = vector.load %arg8[%c2_57, %c0_58, %c0_59] : memref<3x16x1xf32, #tpu.memory_space<vmem>>, vector<1x16x1xf32>
    %113 = vector.shape_cast %112 : vector<1x16x1xf32> to vector<16x1xf32>
    %114 = vector.broadcast %113 : vector<16x1xf32> to vector<16x768xf32>
    %115 = arith.addf %111, %114 : vector<16x768xf32>
    %cst_60 = arith.constant 0.000000e+00 : f32
    %116 = vector.broadcast %cst_60 : f32 to vector<16x768xf32>
    %117 = arith.select %17, %115, %116 : vector<16x768xi1>, vector<16x768xf32>
    %118 = arith.addf %87, %117 : vector<16x768xf32>
    %119 = vector.extract_strided_slice %118 {offsets = [0, 128], sizes = [16, 512], strides = [1, 1]} : vector<16x768xf32> to vector<16x512xf32>
    %c0_61 = arith.constant 0 : index
    %c0_62 = arith.constant 0 : index
    %c0_63 = arith.constant 0 : index
    %120 = vector.load %arg9[%c0_61, %c0_62, %c0_63] : memref<1x16x512xf32, #tpu.memory_space<vmem>>, vector<1x16x512xf32>
    %121 = vector.shape_cast %120 : vector<1x16x512xf32> to vector<16x512xf32>
    %122 = vector.shape_cast %119 : vector<16x512xf32> to vector<1x16x512xf32>
    tpu.vector_store %arg9[%c0_61, %c0_62, %c0_63], %122 {strides = array<i32>} : memref<1x16x512xf32, #tpu.memory_space<vmem>>, vector<1x16x512xf32>,
    return
  }
  func.func @transform_1(%arg0: i32, %arg1: i32) -> (i32, i32) {
    %c0_i32 = arith.constant 0 : i32
    %c0_i32_0 = arith.constant 0 : i32
    %c0_i32_1 = arith.constant 0 : i32
    return %c0_i32, %c0_i32_0 : i32, i32
  }
  func.func @transform_2(%arg0: i32, %arg1: i32) -> (i32, i32) {
    %c0_i32 = arith.constant 0 : i32
    %c0_i32_0 = arith.constant 0 : i32
    %c0_i32_1 = arith.constant 0 : i32
    return %c0_i32, %c0_i32_0 : i32, i32
  }
  func.func @transform_3(%arg0: i32, %arg1: i32) -> (i32, i32, i32) {
    %c0_i32 = arith.constant 0 : i32
    %c0_i32_0 = arith.constant 0 : i32
    %c0_i32_1 = arith.constant 0 : i32
    %c0_i32_2 = arith.constant 0 : i32
    return %c0_i32, %c0_i32_0, %c0_i32_1 : i32, i32, i32
  }
  func.func @transform_4(%arg0: i32, %arg1: i32) -> (i32, i32, i32) {
    %c0_i32 = arith.constant 0 : i32
    %c0_i32_0 = arith.constant 0 : i32
    %c0_i32_1 = arith.constant 0 : i32
    %c0_i32_2 = arith.constant 0 : i32
    return %c0_i32, %c0_i32_0, %c0_i32_1 : i32, i32, i32
  }
  func.func @transform_5(%arg0: i32, %arg1: i32) -> (i32, i32, i32) {
    %c0_i32 = arith.constant 0 : i32
    %c0_i32_0 = arith.constant 0 : i32
    %c0_i32_1 = arith.constant 0 : i32
    %c0_i32_2 = arith.constant 0 : i32
    return %c0_i32, %c0_i32_0, %c0_i32_1 : i32, i32, i32
  }
  func.func @transform_6(%arg0: i32, %arg1: i32) -> (i32, i32, i32) {
    %c0_i32 = arith.constant 0 : i32
    %c0_i32_0 = arith.constant 0 : i32
    %c0_i32_1 = arith.constant 0 : i32
    %c0_i32_2 = arith.constant 0 : i32
    return %c0_i32, %c0_i32_0, %c0_i32_1 : i32, i32, i32
  }
  func.func @transform_7(%arg0: i32, %arg1: i32) -> (i32, i32, i32) {
    %c0_i32 = arith.constant 0 : i32
    %c0_i32_0 = arith.constant 0 : i32
    return %arg0, %c0_i32, %arg1 : i32, i32, i32
  }
}

</mosaic_0001>

<llo_original>
// kernel: tpu_custom_call.1
$region0: #{tpu_custom_call.1}
  #allocation0 [shape = 'u32[]', space=smem, size = 0x4, offset = 0x4, fixed_abs, tag = 'smem constant byte address 0x4 - core index']
  #allocation1 [shape = 'u32[144,128]{1,0:T(1,128)}', space=vmem, size = 0x12000, scoped, tag = 'internal scratch']
  #allocation2 [shape = 'f32[8,768]{1,0:T(8,128)}', space=vmem, size = 0x6000, scoped, tag = 'scratch operand']
  #allocation3 [shape = 's32[1]{0}', space=sflag, size = 0x4, scoped, tag = 'scratch operand']
  #allocation8 [shape = 's32[]', space=sflag, size = 0x4, offset = 0, fixed_abs, tag = 'sflag constant byte address 0x0 - dummy sync flag']
  %s0 = inlined_call_operand.vmem [shape: f32[2,8,1280], index: 0, kind: input, shape index: {}]
  %s1 = inlined_call_operand.vmem [shape: f32[16,8], index: 1, kind: input, shape index: {}]
  %s2 = inlined_call_operand.vmem [shape: f32[16,1], index: 2, kind: input, shape index: {}]
  %s3 = inlined_call_operand.hbm [shape: f32[3,32,48], index: 3, kind: input, shape index: {}]
  %s4 = inlined_call_operand.vmem [shape: f32[3,32,1], index: 4, kind: input, shape index: {}]
  %s5 = inlined_call_operand.vmem [shape: f32[3,16,16], index: 5, kind: input, shape index: {}]
  %s6 = inlined_call_operand.vmem [shape: f32[3,16,1], index: 6, kind: input, shape index: {}]
  %s7 = inlined_call_operand.hbm [shape: f32[2,16,1024], index: 7, kind: output, shape index: {}]
  %s8 = sld [smem:[#allocation0]]
  $region95: #{tpu_custom_call.1} parent=0
    _
  %s10 = ssub.s32 1, %s8
  %s11 = scalar_select 0, %s10, %s8
  $region1: #{tpu_custom_call.1} parent=0
    #allocation4 [shape = 'u8[49152]{0}', space=vmem, size = 0xc000, scoped, tag = 'input window, operand 3, single buffered']
    #allocation5 [shape = 's32[2]{0}', space=sflag, size = 0x8, scoped, tag = 'scoped memory for tpu_custom_call.1']
    #allocation6 [shape = 's32[2]{0}', space=sflag, size = 0x8, scoped, tag = 'scoped memory for tpu_custom_call.1']
    #allocation7 [shape = 'u8[65536]{0}', space=vmem, size = 0x10000, scoped, tag = 'output window, operand 0']
    %12 = vsyncpa [#allocation5], 0
    %13 = vsyncpa [#allocation6], 0
    %s14 = scalar_lea.sflag [#allocation6], 1
    %15 = vsyncpa %s14, 0
    loop: start=0, step=1, limit=6
    $region2: #{tpu_custom_call.1} parent=1 // loop_pre_header
      _
    $region3: #{tpu_custom_call.1} parent=1 // loop_header
      %s17 = sphi 0, %s21
      %p18 = scmp.ge.s32.totalorder %s17, 6
      %s24 = sphi 0, %s36
      %s25 = sphi 0, %s32
      %s26 = sphi 0, %s24
      %s27 = sphi 0, %s25
      %s28 = sphi 0, %s26
      %s29 = sphi 0, %s27
      %s37 = sphi 0, %s37
      %s39 = sphi 0, %s37
      %s40 = sphi 0, %s39
      %s54 = sphi 0, %s40
      %s58 = sphi 0, %s58
      %s60 = sphi 0, %s58
      %s61 = sphi 0, %s60
      %s75 = sphi 0, %s61
      %s79 = sphi 0, %s79
      %s81 = sphi 0, %s79
      %s82 = sphi 0, %s81
      %s96 = sphi 0, %s82
      %s100 = sphi 0, %s100
      %s102 = sphi 0, %s100
      %s103 = sphi 0, %s102
      %s117 = sphi 0, %s103
      %s121 = sphi 0, %s121
      %s123 = sphi 0, %s121
      %s124 = sphi 0, %s123
      %s138 = sphi 0, %s124
      %s142 = sphi 0, %s142
      %s144 = sphi 0, %s142
      %s145 = sphi 0, %s144
      %s159 = sphi 0, %s145
      %s167 = sphi 0, %s169
      %s170 = sphi 0, %s167
      %s171 = sphi 0, %s170
      %s187 = sphi 0, %s171
    $region4: #{tpu_custom_call.1} parent=1 // loop_header_branch
      %20 = sbr.rel (%p18) target = $region8
    $region5: #{tpu_custom_call.1} parent=1 // loop_body
      %s22 = ssub.s32 %s17, 1
      %s23 = ssub.s32 %s17, 2
      %s30 = sadd.s32 1, %s25
      %p31 = scmp.ge.s32.totalorder %s30, 2
      %s32 = scalar_select %p31, 0, %s30
      %s33 = sadd.s32 1, %s24
      %s34 = scalar_select %p31, %s33, %s24
      %p35 = scmp.ge.s32.totalorder %s34, 2
      %s36 = scalar_select %p35, 0, %s34
      %s38 = sadd.s32 %s37, 1
      %p41 = scmp.eq.s32.totalorder %s17, 3
      %p42 = scmp.ne.s32.totalorder %s37, %s39
      %p43 = scmp.eq.s32.totalorder %s17, 0
      %p44 = por %p42, %p43
      %p45 = scmp.ne.s32.totalorder %s37, %s39
      %p46 = scmp.eq.s32.totalorder %s22, 3
      %p47 = por %p45, %p46
      %p48 = scmp.ne.s32.totalorder %s39, %s40
      %p49 = scmp.eq.s32.totalorder %s22, 0
      %p50 = por %p48, %p49
      %p51 = scmp.ne.s32.totalorder %s39, %s40
      %p52 = scmp.eq.s32.totalorder %s23, 3
      %p53 = por %p51, %p52
      %p55 = scmp.ne.s32.totalorder %s40, %s54
      %p56 = scmp.eq.s32.totalorder %s23, 0
      %p57 = por %p55, %p56
      %s59 = sadd.s32 %s58, 1
      %p62 = scmp.eq.s32.totalorder %s17, 3
      %p63 = scmp.ne.s32.totalorder %s58, %s60
      %p64 = scmp.eq.s32.totalorder %s17, 0
      %p65 = por %p63, %p64
      %p66 = scmp.ne.s32.totalorder %s58, %s60
      %p67 = scmp.eq.s32.totalorder %s22, 3
      %p68 = por %p66, %p67
      %p69 = scmp.ne.s32.totalorder %s60, %s61
      %p70 = scmp.eq.s32.totalorder %s22, 0
      %p71 = por %p69, %p70
      %p72 = scmp.ne.s32.totalorder %s60, %s61
      %p73 = scmp.eq.s32.totalorder %s23, 3
      %p74 = por %p72, %p73
      %p76 = scmp.ne.s32.totalorder %s61, %s75
      %p77 = scmp.eq.s32.totalorder %s23, 0
      %p78 = por %p76, %p77
      %s80 = sadd.s32 %s79, 1
      %p83 = scmp.eq.s32.totalorder %s17, 3
      %p84 = scmp.ne.s32.totalorder %s79, %s81
      %p85 = scmp.eq.s32.totalorder %s17, 0
      %p86 = por %p84, %p85
      %p87 = scmp.ne.s32.totalorder %s79, %s81
      %p88 = scmp.eq.s32.totalorder %s22, 3
      %p89 = por %p87, %p88
      %p90 = scmp.ne.s32.totalorder %s81, %s82
      %p91 = scmp.eq.s32.totalorder %s22, 0
      %p92 = por %p90, %p91
      %p93 = scmp.ne.s32.totalorder %s81, %s82
      %p94 = scmp.eq.s32.totalorder %s23, 3
      %p95 = por %p93, %p94
      %p97 = scmp.ne.s32.totalorder %s82, %s96
      %p98 = scmp.eq.s32.totalorder %s23, 0
      %p99 = por %p97, %p98
      %s101 = sadd.s32 %s100, 1
      %p104 = scmp.eq.s32.totalorder %s17, 3
      %p105 = scmp.ne.s32.totalorder %s100, %s102
      %p106 = scmp.eq.s32.totalorder %s17, 0
      %p107 = por %p105, %p106
      %p108 = scmp.ne.s32.totalorder %s100, %s102
      %p109 = scmp.eq.s32.totalorder %s22, 3
      %p110 = por %p108, %p109
      %p111 = scmp.ne.s32.totalorder %s102, %s103
      %p112 = scmp.eq.s32.totalorder %s22, 0
      %p113 = por %p111, %p112
      %p114 = scmp.ne.s32.totalorder %s102, %s103
      %p115 = scmp.eq.s32.totalorder %s23, 3
      %p116 = por %p114, %p115
      %p118 = scmp.ne.s32.totalorder %s103, %s117
      %p119 = scmp.eq.s32.totalorder %s23, 0
      %p120 = por %p118, %p119
      %s122 = sadd.s32 %s121, 1
      %p125 = scmp.eq.s32.totalorder %s17, 3
      %p126 = scmp.ne.s32.totalorder %s121, %s123
      %p127 = scmp.eq.s32.totalorder %s17, 0
      %p128 = por %p126, %p127
      %p129 = scmp.ne.s32.totalorder %s121, %s123
      %p130 = scmp.eq.s32.totalorder %s22, 3
      %p131 = por %p129, %p130
      %p132 = scmp.ne.s32.totalorder %s123, %s124
      %p133 = scmp.eq.s32.totalorder %s22, 0
      %p134 = por %p132, %p133
      %p135 = scmp.ne.s32.totalorder %s123, %s124
      %p136 = scmp.eq.s32.totalorder %s23, 3
      %p137 = por %p135, %p136
      %p139 = scmp.ne.s32.totalorder %s124, %s138
      %p140 = scmp.eq.s32.totalorder %s23, 0
      %p141 = por %p139, %p140
      %s143 = sadd.s32 %s142, 1
      %p146 = scmp.eq.s32.totalorder %s17, 3
      %p147 = scmp.ne.s32.totalorder %s142, %s144
      %p148 = scmp.eq.s32.totalorder %s17, 0
      %p149 = por %p147, %p148
      %p150 = scmp.ne.s32.totalorder %s142, %s144
      %p151 = scmp.eq.s32.totalorder %s22, 3
      %p152 = por %p150, %p151
      %p153 = scmp.ne.s32.totalorder %s144, %s145
      %p154 = scmp.eq.s32.totalorder %s22, 0
      %p155 = por %p153, %p154
      %p156 = scmp.ne.s32.totalorder %s144, %s145
      %p157 = scmp.eq.s32.totalorder %s23, 3
      %p158 = por %p156, %p157
      %p160 = scmp.ne.s32.totalorder %s145, %s159
      %p161 = scmp.eq.s32.totalorder %s23, 0
      %p162 = por %p160, %p161
      %s163 = ssub.s32 %s24, %s36
      %s164 = ssub.s32 %s25, %s32
      %s165 = sor.u32 %s163, %s164
      %p166 = scmp.eq.s32.totalorder %s165, 0
      %s168 = sadd.s32 %s167, 1
      %s169 = scalar_select %p166, %s167, %s168
      %p172 = pneg %p166
      %p173 = scmp.eq.s32.totalorder %s17, 3
      %p174 = por %p172, %p173
      %p175 = scmp.ne.s32.totalorder %s167, %s170
      %p176 = scmp.eq.s32.totalorder %s17, 0
      %p177 = por %p175, %p176
      %p178 = scmp.ne.s32.totalorder %s167, %s170
      %p179 = scmp.eq.s32.totalorder %s22, 3
      %p180 = por %p178, %p179
      %p181 = scmp.ne.s32.totalorder %s170, %s171
      %p182 = scmp.eq.s32.totalorder %s22, 0
      %p183 = por %p181, %p182
      %p184 = scmp.ne.s32.totalorder %s170, %s171
      %p185 = scmp.eq.s32.totalorder %s23, 3
      %p186 = por %p184, %p185
      %p188 = scmp.ne.s32.totalorder %s171, %s187
      %p189 = scmp.eq.s32.totalorder %s23, 0
      %p190 = por %p188, %p189
      %p191 = scmp.le.s32.totalorder 1, %s17
      %p192 = scmp.lt.s32.totalorder %s17, 5
      %p193 = pnand %p191, %p192
      %p194 = pneg %p193
      // Predicated region
      $region9: #{tpu_custom_call.1} parent=5 // pred_check
        _
      $region10: #{tpu_custom_call.1} parent=5 // pred_check_branch
        %196 = sbr.rel (%p193) target = $region12
      $region11: #{tpu_custom_call.1} parent=5 // pred_region
        %s197 = ssub.s32 %s17, 1
        // Predicated region
        $region13: #{tpu_custom_call.1} parent=11 // pred_check
          %p198 = pneg %p50
        $region14: #{tpu_custom_call.1} parent=11 // pred_check_branch
          %200 = sbr.rel (%p198) target = $region16
        $region15: #{tpu_custom_call.1} parent=11 // pred_region
          _
        $region16: #{tpu_custom_call.1} parent=11 // pred_fallthru
          _
        // Predicated region
        $region17: #{tpu_custom_call.1} parent=11 // pred_check
          %p201 = pneg %p71
        $region18: #{tpu_custom_call.1} parent=11 // pred_check_branch
          %203 = sbr.rel (%p201) target = $region20
        $region19: #{tpu_custom_call.1} parent=11 // pred_region
          _
        $region20: #{tpu_custom_call.1} parent=11 // pred_fallthru
          _
        // Predicated region
        $region21: #{tpu_custom_call.1} parent=11 // pred_check
          %p204 = pneg %p92
        $region22: #{tpu_custom_call.1} parent=11 // pred_check_branch
          %206 = sbr.rel (%p204) target = $region24
        $region23: #{tpu_custom_call.1} parent=11 // pred_region
          %s208 = ssub.s32 1536, 1536
          %209 = vsyncadd [#allocation5], %s208
          %s210 = sshll.u32 [#allocation4], 4
          %s211 = int_to_ptr.vmem [resolvable:$true] %s210
          %216 = dma.hbm_to_vmem [thread:$0]  %s3, 1536, %s211, [#allocation5], 128, 128, 8
        $region24: #{tpu_custom_call.1} parent=11 // pred_fallthru
          _
        // Predicated region
        $region25: #{tpu_custom_call.1} parent=11 // pred_check
          %p217 = pneg %p113
        $region26: #{tpu_custom_call.1} parent=11 // pred_check_branch
          %219 = sbr.rel (%p217) target = $region28
        $region27: #{tpu_custom_call.1} parent=11 // pred_region
          _
        $region28: #{tpu_custom_call.1} parent=11 // pred_fallthru
          _
        // Predicated region
        $region29: #{tpu_custom_call.1} parent=11 // pred_check
          %p220 = pneg %p134
        $region30: #{tpu_custom_call.1} parent=11 // pred_check_branch
          %222 = sbr.rel (%p220) target = $region32
        $region31: #{tpu_custom_call.1} parent=11 // pred_region
          _
        $region32: #{tpu_custom_call.1} parent=11 // pred_fallthru
          _
        // Predicated region
        $region33: #{tpu_custom_call.1} parent=11 // pred_check
          %p223 = pneg %p155
        $region34: #{tpu_custom_call.1} parent=11 // pred_check_branch
          %225 = sbr.rel (%p223) target = $region36
        $region35: #{tpu_custom_call.1} parent=11 // pred_region
          _
        $region36: #{tpu_custom_call.1} parent=11 // pred_fallthru
          _
      $region12: #{tpu_custom_call.1} parent=5 // pred_fallthru
        _
      %p226 = scmp.lt.s32.totalorder %s17, 4
      // Predicated region
      $region37: #{tpu_custom_call.1} parent=5 // pred_check
        %p227 = pneg %p226
      $region38: #{tpu_custom_call.1} parent=5 // pred_check_branch
        %229 = sbr.rel (%p227) target = $region40
      $region39: #{tpu_custom_call.1} parent=5 // pred_region
        _
      $region40: #{tpu_custom_call.1} parent=5 // pred_fallthru
        _
      %p230 = scmp.le.s32.totalorder 1, %s17
      %p231 = scmp.lt.s32.totalorder %s17, 5
      %p232 = pnand %p230, %p231
      %p233 = pneg %p232
      // Predicated region
      $region41: #{tpu_custom_call.1} parent=5 // pred_check
        _
      $region42: #{tpu_custom_call.1} parent=5 // pred_check_branch
        %235 = sbr.rel (%p232) target = $region44
      $region43: #{tpu_custom_call.1} parent=5 // pred_region
        %s236 = ssub.s32 %s17, 1
        // Predicated region
        $region45: #{tpu_custom_call.1} parent=43 // pred_check
          %p237 = pneg %p92
        $region46: #{tpu_custom_call.1} parent=43 // pred_check_branch
          %239 = sbr.rel (%p237) target = $region48
        $region47: #{tpu_custom_call.1} parent=43 // pred_region
          %240 = dma.done [#allocation5], 1536
        $region48: #{tpu_custom_call.1} parent=43 // pred_fallthru
          _
        %p241 = pneg %p50
        %p242 = pneg %p47
        %p243 = pneg %p71
        %p244 = pneg %p68
        %p245 = pneg %p92
        %p246 = pneg %p89
        %p247 = pneg %p113
        %p248 = pneg %p110
        %p249 = pneg %p134
        %p250 = pneg %p131
        %p251 = pneg %p155
        %p252 = pneg %p152
        %p253 = pneg %p183
        %p254 = pneg %p180
        %s255 = sand.u32 %s170, 1
        %s256 = scalar_lea.sflag [#allocation6], %s255
        %s257 = sand.u32 %s170, 1
        %s258 = smul.addr %s257, 64
        %s259 = scalar_lea.vmem [#allocation7], %s258
        %s260 = smul.u32 4, %s27
        %s261 = smul.u32 %s27, 512
        %s262 = sshra.s32 %s261, 7
        %s263 = sand.u32 %s261, 127
        %s264 = smul.u32 %s26, 10
        %s265 = sadd.s32 %s262, %s264
        %s266 = smul.addr %s265, 8
        %s267 = scalar_lea.vmem %s0, %s266
        %p269 = scmp.lt.u32.totalorder 48, 8
        %p270 = pneg %p269
        // Predicated region
        $region49: #{tpu_custom_call.1} parent=43 // pred_check
          _
        $region50: #{tpu_custom_call.1} parent=43 // pred_check_branch
          %272 = sbr.rel (%p269) target = $region52
        $region51: #{tpu_custom_call.1} parent=43 // pred_region
          %s287 = sand.u32 48, 7
          %p288 = scmp.eq.s32.totalorder %s287, 0
          // Predicated region
          $region64: #{tpu_custom_call.1} parent=51 // pred_check
            %p289 = pneg %p288
          $region65: #{tpu_custom_call.1} parent=51 // pred_check_branch
            %291 = sbr.rel (%p289) target = $region67
          $region66: #{tpu_custom_call.1} parent=51 // pred_region
            loop: start=0, step=1, limit=1
            $region68: #{tpu_custom_call.1} parent=66 // loop_pre_header
              _
            $region69: #{tpu_custom_call.1} parent=66 // loop_header
              %s293 = sphi 0, %s297
              %p294 = scmp.ge.s32.totalorder %s293, 1
              %s298 = sphi %s267, %s267
              %s299 = sphi [#allocation2], [#allocation2]
            $region70: #{tpu_custom_call.1} parent=66 // loop_header_branch
              %296 = sbr.rel (%p294) target = $region74
            $region71: #{tpu_custom_call.1} parent=66 // loop_body
              %v300 = vld [vmem:[%s298] sm:$0xff]
              %301 = vst [vmem:[%s299] sm:$0xff] %v300
              %v302 = vld [vmem:[%s298 + $0x8] sm:$0xff]
              %303 = vst [vmem:[%s299 + $0x8] sm:$0xff] %v302
              %v304 = vld [vmem:[%s298 + $0x10] sm:$0xff]
              %305 = vst [vmem:[%s299 + $0x10] sm:$0xff] %v304
              %v306 = vld [vmem:[%s298 + $0x18] sm:$0xff]
              %307 = vst [vmem:[%s299 + $0x18] sm:$0xff] %v306
              %v308 = vld [vmem:[%s298 + $0x20] sm:$0xff]
              %309 = vst [vmem:[%s299 + $0x20] sm:$0xff] %v308
              %v310 = vld [vmem:[%s298 + $0x28] sm:$0xff]
              %311 = vst [vmem:[%s299 + $0x28] sm:$0xff] %v310
            $region72: #{tpu_custom_call.1} parent=66 // loop_footer
              %s297 = sadd.s32 1, %s293
            $region73: #{tpu_custom_call.1} parent=66 // loop_footer_branch
              %292 = sbr.rel target = $region69
            $region74: #{tpu_custom_call.1} parent=66 // loop_exit
              _
          $region67: #{tpu_custom_call.1} parent=51 // pred_fallthru
            _
          %p312 = pneg %p288
          // Predicated region
          $region75: #{tpu_custom_call.1} parent=51 // pred_check
            _
          $region76: #{tpu_custom_call.1} parent=51 // pred_check_branch
            %314 = sbr.rel (%p288) target = $region78
          $region77: #{tpu_custom_call.1} parent=51 // pred_region
            %s315 = sand.u32 48, 7
          $region78: #{tpu_custom_call.1} parent=51 // pred_fallthru
            _
        $region52: #{tpu_custom_call.1} parent=43 // pred_fallthru
          _
        // Predicated region
        $region53: #{tpu_custom_call.1} parent=43 // pred_check
          %p273 = pneg %p269
        $region54: #{tpu_custom_call.1} parent=43 // pred_check_branch
          %275 = sbr.rel (%p273) target = $region56
        $region55: #{tpu_custom_call.1} parent=43 // pred_region
          %s276 = sshllo.u32 0, 48
          loop: start=0, step=1, limit=1
          $region57: #{tpu_custom_call.1} parent=55 // loop_pre_header
            _
          $region58: #{tpu_custom_call.1} parent=55 // loop_header
            %s278 = sphi 0, %s282
            %p279 = scmp.ge.s32.totalorder %s278, 1
            %s283 = sphi %s267, %s267
            %s284 = sphi [#allocation2], [#allocation2]
          $region59: #{tpu_custom_call.1} parent=55 // loop_header_branch
            %281 = sbr.rel (%p279) target = $region63
          $region60: #{tpu_custom_call.1} parent=55 // loop_body
            %v285 = vld [vmem:[%s283] sm:%s276]
            %286 = vst [vmem:[%s284] sm:%s276] %v285
          $region61: #{tpu_custom_call.1} parent=55 // loop_footer
            %s282 = sadd.s32 1, %s278
          $region62: #{tpu_custom_call.1} parent=55 // loop_footer_branch
            %277 = sbr.rel target = $region58
          $region63: #{tpu_custom_call.1} parent=55 // loop_exit
            _
        $region56: #{tpu_custom_call.1} parent=43 // pred_fallthru
          _
        // Predicated region
        $region79: #{tpu_custom_call.1} parent=43 // pred_check
          _
        $region80: #{tpu_custom_call.1} parent=43 // pred_check_branch
          %318 = sbr.rel (0) target = $region82
        $region81: #{tpu_custom_call.1} parent=43 // pred_region
          %319 = vsyncadd [#allocation3], 768
        $region82: #{tpu_custom_call.1} parent=43 // pred_fallthru
          _
        %s320 = smul.u32 8, 1
        %s321 = smul.u32 %s320, 6
        %s322 = sshll.u32 %s321, 4
        %323 = dma.done [#allocation3], %s322
        %v324 = vlaneseq
        %v325 = vand.u32 %v324, 127
        %v326 = vadd.s32 %v325, 128
        %v327 = vadd.s32 %v325, 256
        %v328 = vadd.s32 %v325, 384
        %v329 = vadd.s32 %v325, 512
        %v330 = vadd.s32 %v325, 640
        %s331 = ssub.s32 %s261, 128
        %v332 = vstv %s331
        %v333 = vadd.s32 %v325, %v332
        %v334 = vadd.s32 %v326, %v332
        %v335 = vadd.s32 %v327, %v332
        %v336 = vadd.s32 %v328, %v332
        %v337 = vadd.s32 %v329, %v332
        %v338 = vadd.s32 %v330, %v332
        %vm339 = vcmp.ge.s32.totalorder %v333, 0
        %vm340 = vcmp.ge.s32.totalorder %v334, 0
        %vm341 = vcmp.ge.s32.totalorder %v335, 0
        %vm342 = vcmp.ge.s32.totalorder %v336, 0
        %vm343 = vcmp.ge.s32.totalorder %v337, 0
        %vm344 = vcmp.ge.s32.totalorder %v338, 0
        %vm345 = vcmp.lt.s32.totalorder %v333, 640
        %vm346 = vcmp.lt.s32.totalorder %v334, 640
        %vm347 = vcmp.lt.s32.totalorder %v335, 640
        %vm348 = vcmp.lt.s32.totalorder %v336, 640
        %vm349 = vcmp.lt.s32.totalorder %v337, 640
        %vm350 = vcmp.lt.s32.totalorder %v338, 640
        %vm351 = vmand %vm339, %vm345
        %vm352 = vmand %vm340, %vm346
        %vm353 = vmand %vm341, %vm347
        %vm354 = vmand %vm342, %vm348
        %vm355 = vmand %vm343, %vm349
        %vm356 = vmand %vm344, %vm350
        %v357 = vsel %vm351, 1, 0
        %v358 = vsel %vm352, 1, 0
        %v359 = vsel %vm353, 1, 0
        %v360 = vsel %vm354, 1, 0
        %v361 = vsel %vm355, 1, 0
        %v362 = vsel %vm356, 1, 0
        %vm363 = vcmp.eq.s32.totalorder %v357, 1
        %vm364 = vcmp.eq.s32.totalorder %v358, 1
        %vm365 = vcmp.eq.s32.totalorder %v359, 1
        %vm366 = vcmp.eq.s32.totalorder %v360, 1
        %vm367 = vcmp.eq.s32.totalorder %v361, 1
        %vm368 = vcmp.eq.s32.totalorder %v362, 1
        %v369 = vld [vmem:[#allocation2] sm:$0xff]
        %v370 = vld [vmem:[#allocation2 + $0x8] sm:$0xff]
        %v371 = vld [vmem:[#allocation2 + $0x10] sm:$0xff]
        %v372 = vld [vmem:[#allocation2 + $0x18] sm:$0xff]
        %v373 = vld [vmem:[#allocation2 + $0x20] sm:$0xff]
        %v374 = vld [vmem:[#allocation2 + $0x28] sm:$0xff]
        %v375 = vld [vmem:[%s1] sm:$0xff]
        %v376 = vld [vmem:[%s1 + $0x8] sm:$0xff]
        %v377 = vld [vmem:[%s2] sm:$0xff]
        %v378 = vld [vmem:[%s2 + $0x8] sm:$0xff]
        %380 = vset.pattern.permute.xlu0 0
        %381 = vperm.xlu0 %380, %v377
        %v382 = vpop.permute.xlu0 %381
        %385 = vset.pattern.permute.xlu0 0
        %386 = vperm.xlu0 %385, %v378
        %v387 = vpop.permute.xlu0 %386
        %vm389 = vcmask 64512
        %v391 = vsel %vm389, %v375, 0
        %v394 = vsel %vm389, %v376, 0
        %396 = vmatprep.subr.mxu0 %v370
        %397 = vmatpush1.msra.mxu0 %v369
        %398 = vmatprep.subr.mxu0 0.0
        %399 = vmatpush1.msra.mxu0 0.0
        %400 = vmatprep.subr.mxu0 0.0
        %401 = vmatpush1.msra.mxu0 0.0
        %402 = vmatprep.subr.mxu0 0.0
        %403 = vmatpush1.msra.mxu0 0.0
        %404 = vmatprep.subr.mxu0 0.0
        %405 = vmatpush1.msra.mxu0 0.0
        %406 = vmatprep.subr.mxu0 0.0
        %407 = vmatpush1.msra.mxu0 0.0
        %408 = vmatprep.subr.mxu0 0.0
        %409 = vmatpush1.msra.mxu0 0.0
        %410 = vmatprep.subr.mxu0 0.0
        %411 = vmatpush1.msra.mxu0 0.0
        %412 = vmatprep.subr.mxu0 0.0
        %413 = vmatpush1.msra.mxu0 0.0
        %414 = vmatprep.subr.mxu0 0.0
        %415 = vmatpush1.msra.mxu0 0.0
        %416 = vmatprep.subr.mxu0 0.0
        %417 = vmatpush1.msra.mxu0 0.0
        %418 = vmatprep.subr.mxu0 0.0
        %419 = vmatpush1.msra.mxu0 0.0
        %420 = vmatprep.subr.mxu0 0.0
        %421 = vmatpush1.msra.mxu0 0.0
        %422 = vmatprep.subr.mxu0 0.0
        %423 = vmatpush1.msra.mxu0 0.0
        %424 = vmatprep.subr.mxu0 0.0
        %425 = vmatpush1.msra.mxu0 0.0
        %426 = vmatprep.subr.mxu0 0.0
        %427 = vmatpush1.msra.mxu0 0.0
        %428 = vmatprep.subr.mxu0 0.0
        %429 = vmatpush1.msra.mxu0 0.0
        %430 = vmatprep.subr.mxu0 0.0
        %431 = vmatpush1.msra.mxu0 0.0
        %432 = vmatprep.subr.mxu0 0.0
        %433 = vmatpush1.msra.mxu0 0.0
        %434 = vmatprep.subr.mxu0 0.0
        %435 = vmatpush1.msra.mxu0 0.0
        %436 = vmatprep.subr.mxu0 0.0
        %437 = vmatpush1.msra.mxu0 0.0
        %438 = vmatprep.subr.mxu0 0.0
        %439 = vmatpush1.msra.mxu0 0.0
        %440 = vmatprep.subr.mxu0 0.0
        %441 = vmatpush1.msra.mxu0 0.0
        %442 = vmatprep.subr.mxu0 0.0
        %443 = vmatpush1.msra.mxu0 0.0
        %444 = vmatprep.subr.mxu0 0.0
        %445 = vmatpush1.msra.mxu0 0.0
        %446 = vmatprep.subr.mxu0 0.0
        %447 = vmatpush1.msra.mxu0 0.0
        %448 = vmatprep.subr.mxu0 0.0
        %449 = vmatpush1.msra.mxu0 0.0
        %450 = vmatprep.subr.mxu0 0.0
        %451 = vmatpush1.msra.mxu0 0.0
        %452 = vmatprep.subr.mxu0 0.0
        %453 = vmatpush1.msra.mxu0 0.0
        %454 = vmatprep.subr.mxu0 0.0
        %455 = vmatpush1.msra.mxu0 0.0
        %456 = vmatprep.subr.mxu0 0.0
        %457 = vmatpush1.msra.mxu0 0.0
        %458 = vmatprep.subr.mxu0 0.0
        %459 = vmatpush1.msra.mxu0 0.0
        %460 = vmatprep.mubr.f32.mxu0 0.0
        %461 = vmatmul.mubr.f32.gmra.mrb[0].mxu0 %v391
        %v462 = vpop.f32.mrb[0].mxu0
        %v463 = vadd.f32 %v382, %v462
        %v464 = vpop.f32.mrb[0].mxu0
        %v465 = vadd.f32 %v382, %v464
        %466 = vmatprep.mubr.f32.mxu0 0.0
        %467 = vmatmul.mubr.f32.gmra.mrb[0].mxu0 %v394
        %v468 = vpop.f32.mrb[0].mxu0
        %v469 = vadd.f32 %v387, %v468
        %v470 = vpop.f32.mrb[0].mxu0
        %v471 = vadd.f32 %v387, %v470
        %472 = vdwg.mxu0
        %473 = vmatprep.subr.mxu0 %v372
        %474 = vmatpush1.msra.mxu0 %v371
        %475 = vmatprep.subr.mxu0 0.0
        %476 = vmatpush1.msra.mxu0 0.0
        %477 = vmatprep.subr.mxu0 0.0
        %478 = vmatpush1.msra.mxu0 0.0
        %479 = vmatprep.subr.mxu0 0.0
        %480 = vmatpush1.msra.mxu0 0.0
        %481 = vmatprep.subr.mxu0 0.0
        %482 = vmatpush1.msra.mxu0 0.0
        %483 = vmatprep.subr.mxu0 0.0
        %484 = vmatpush1.msra.mxu0 0.0
        %485 = vmatprep.subr.mxu0 0.0
        %486 = vmatpush1.msra.mxu0 0.0
        %487 = vmatprep.subr.mxu0 0.0
        %488 = vmatpush1.msra.mxu0 0.0
        %489 = vmatprep.subr.mxu0 0.0
        %490 = vmatpush1.msra.mxu0 0.0
        %491 = vmatprep.subr.mxu0 0.0
        %492 = vmatpush1.msra.mxu0 0.0
        %493 = vmatprep.subr.mxu0 0.0
        %494 = vmatpush1.msra.mxu0 0.0
        %495 = vmatprep.subr.mxu0 0.0
        %496 = vmatpush1.msra.mxu0 0.0
        %497 = vmatprep.subr.mxu0 0.0
        %498 = vmatpush1.msra.mxu0 0.0
        %499 = vmatprep.subr.mxu0 0.0
        %500 = vmatpush1.msra.mxu0 0.0
        %501 = vmatprep.subr.mxu0 0.0
        %502 = vmatpush1.msra.mxu0 0.0
        %503 = vmatprep.subr.mxu0 0.0
        %504 = vmatpush1.msra.mxu0 0.0
        %505 = vmatprep.subr.mxu0 0.0
        %506 = vmatpush1.msra.mxu0 0.0
        %507 = vmatprep.subr.mxu0 0.0
        %508 = vmatpush1.msra.mxu0 0.0
        %509 = vmatprep.subr.mxu0 0.0
        %510 = vmatpush1.msra.mxu0 0.0
        %511 = vmatprep.subr.mxu0 0.0
        %512 = vmatpush1.msra.mxu0 0.0
        %513 = vmatprep.subr.mxu0 0.0
        %514 = vmatpush1.msra.mxu0 0.0
        %515 = vmatprep.subr.mxu0 0.0
        %516 = vmatpush1.msra.mxu0 0.0
        %517 = vmatprep.subr.mxu0 0.0
        %518 = vmatpush1.msra.mxu0 0.0
        %519 = vmatprep.subr.mxu0 0.0
        %520 = vmatpush1.msra.mxu0 0.0
        %521 = vmatprep.subr.mxu0 0.0
        %522 = vmatpush1.msra.mxu0 0.0
        %523 = vmatprep.subr.mxu0 0.0
        %524 = vmatpush1.msra.mxu0 0.0
        %525 = vmatprep.subr.mxu0 0.0
        %526 = vmatpush1.msra.mxu0 0.0
        %527 = vmatprep.subr.mxu0 0.0
        %528 = vmatpush1.msra.mxu0 0.0
        %529 = vmatprep.subr.mxu0 0.0
        %530 = vmatpush1.msra.mxu0 0.0
        %531 = vmatprep.subr.mxu0 0.0
        %532 = vmatpush1.msra.mxu0 0.0
        %533 = vmatprep.subr.mxu0 0.0
        %534 = vmatpush1.msra.mxu0 0.0
        %535 = vmatprep.subr.mxu0 0.0
        %536 = vmatpush1.msra.mxu0 0.0
        %537 = vmatprep.mubr.f32.mxu0 0.0
        %538 = vmatmul.mubr.f32.gmra.mrb[0].mxu0 %v391
        %v539 = vpop.f32.mrb[0].mxu0
        %v540 = vadd.f32 %v382, %v539
        %v541 = vpop.f32.mrb[0].mxu0
        %v542 = vadd.f32 %v382, %v541
        %543 = vmatprep.mubr.f32.mxu0 0.0
        %544 = vmatmul.mubr.f32.gmra.mrb[0].mxu0 %v394
        %v545 = vpop.f32.mrb[0].mxu0
        %v546 = vadd.f32 %v387, %v545
        %v547 = vpop.f32.mrb[0].mxu0
        %v548 = vadd.f32 %v387, %v547
        %549 = vdwg.mxu0
        %550 = vmatprep.subr.mxu0 %v374
        %551 = vmatpush1.msra.mxu0 %v373
        %552 = vmatprep.subr.mxu0 0.0
        %553 = vmatpush1.msra.mxu0 0.0
        %554 = vmatprep.subr.mxu0 0.0
        %555 = vmatpush1.msra.mxu0 0.0
        %556 = vmatprep.subr.mxu0 0.0
        %557 = vmatpush1.msra.mxu0 0.0
        %558 = vmatprep.subr.mxu0 0.0
        %559 = vmatpush1.msra.mxu0 0.0
        %560 = vmatprep.subr.mxu0 0.0
        %561 = vmatpush1.msra.mxu0 0.0
        %562 = vmatprep.subr.mxu0 0.0
        %563 = vmatpush1.msra.mxu0 0.0
        %564 = vmatprep.subr.mxu0 0.0
        %565 = vmatpush1.msra.mxu0 0.0
        %566 = vmatprep.subr.mxu0 0.0
        %567 = vmatpush1.msra.mxu0 0.0
        %568 = vmatprep.subr.mxu0 0.0
        %569 = vmatpush1.msra.mxu0 0.0
        %570 = vmatprep.subr.mxu0 0.0
        %571 = vmatpush1.msra.mxu0 0.0
        %572 = vmatprep.subr.mxu0 0.0
        %573 = vmatpush1.msra.mxu0 0.0
        %574 = vmatprep.subr.mxu0 0.0
        %575 = vmatpush1.msra.mxu0 0.0
        %576 = vmatprep.subr.mxu0 0.0
        %577 = vmatpush1.msra.mxu0 0.0
        %578 = vmatprep.subr.mxu0 0.0
        %579 = vmatpush1.msra.mxu0 0.0
        %580 = vmatprep.subr.mxu0 0.0
        %581 = vmatpush1.msra.mxu0 0.0
        %582 = vmatprep.subr.mxu0 0.0
        %583 = vmatpush1.msra.mxu0 0.0
        %584 = vmatprep.subr.mxu0 0.0
        %585 = vmatpush1.msra.mxu0 0.0
        %586 = vmatprep.subr.mxu0 0.0
        %587 = vmatpush1.msra.mxu0 0.0
        %588 = vmatprep.subr.mxu0 0.0
        %589 = vmatpush1.msra.mxu0 0.0
        %590 = vmatprep.subr.mxu0 0.0
        %591 = vmatpush1.msra.mxu0 0.0
        %592 = vmatprep.subr.mxu0 0.0
        %593 = vmatpush1.msra.mxu0 0.0
        %594 = vmatprep.subr.mxu0 0.0
        %595 = vmatpush1.msra.mxu0 0.0
        %596 = vmatprep.subr.mxu0 0.0
        %597 = vmatpush1.msra.mxu0 0.0
        %598 = vmatprep.subr.mxu0 0.0
        %599 = vmatpush1.msra.mxu0 0.0
        %600 = vmatprep.subr.mxu0 0.0
        %601 = vmatpush1.msra.mxu0 0.0
        %602 = vmatprep.subr.mxu0 0.0
        %603 = vmatpush1.msra.mxu0 0.0
        %604 = vmatprep.subr.mxu0 0.0
        %605 = vmatpush1.msra.mxu0 0.0
        %606 = vmatprep.subr.mxu0 0.0
        %607 = vmatpush1.msra.mxu0 0.0
        %608 = vmatprep.subr.mxu0 0.0
        %609 = vmatpush1.msra.mxu0 0.0
        %610 = vmatprep.subr.mxu0 0.0
        %611 = vmatpush1.msra.mxu0 0.0
        %612 = vmatprep.subr.mxu0 0.0
        %613 = vmatpush1.msra.mxu0 0.0
        %614 = vmatprep.mubr.f32.mxu0 0.0
        %615 = vmatmul.mubr.f32.gmra.mrb[0].mxu0 %v391
        %v616 = vpop.f32.mrb[0].mxu0
        %v617 = vadd.f32 %v382, %v616
        %v618 = vpop.f32.mrb[0].mxu0
        %v619 = vadd.f32 %v382, %v618
        %620 = vmatprep.mubr.f32.mxu0 0.0
        %621 = vmatmul.mubr.f32.gmra.mrb[0].mxu0 %v394
        %v622 = vpop.f32.mrb[0].mxu0
        %v623 = vadd.f32 %v387, %v622
        %v624 = vpop.f32.mrb[0].mxu0
        %v625 = vadd.f32 %v387, %v624
        %626 = vdwg.mxu0
        %v627 = vsel %vm363, %v463, 0.0
        %v628 = vsel %vm364, %v465, 0.0
        %v629 = vsel %vm365, %v540, 0.0
        %v630 = vsel %vm366, %v542, 0.0
        %v631 = vsel %vm367, %v617, 0.0
        %v632 = vsel %vm368, %v619, 0.0
        %v633 = vsel %vm363, %v469, 0.0
        %v634 = vsel %vm364, %v471, 0.0
        %v635 = vsel %vm365, %v546, 0.0
        %v636 = vsel %vm366, %v548, 0.0
        %v637 = vsel %vm367, %v623, 0.0
        %v638 = vsel %vm368, %v625, 0.0
        %639 = vrot.lane.b32.xlu0 %v627, 1
        %v640 = vpop.permute.xlu0 %639
        %641 = vrot.lane.b32.xlu0 %v633, 1
        %v642 = vpop.permute.xlu0 %641
        %643 = vrot.lane.b32.xlu0 %v628, 1
        %v644 = vpop.permute.xlu0 %643
        %645 = vrot.lane.b32.xlu0 %v634, 1
        %v646 = vpop.permute.xlu0 %645
        %647 = vrot.lane.b32.xlu0 %v629, 1
        %v648 = vpop.permute.xlu0 %647
        %649 = vrot.lane.b32.xlu0 %v635, 1
        %v650 = vpop.permute.xlu0 %649
        %651 = vrot.lane.b32.xlu0 %v630, 1
        %v652 = vpop.permute.xlu0 %651
        %653 = vrot.lane.b32.xlu0 %v636, 1
        %v654 = vpop.permute.xlu0 %653
        %655 = vrot.lane.b32.xlu0 %v631, 1
        %v656 = vpop.permute.xlu0 %655
        %657 = vrot.lane.b32.xlu0 %v637, 1
        %v658 = vpop.permute.xlu0 %657
        %659 = vrot.lane.b32.xlu0 %v632, 1
        %v660 = vpop.permute.xlu0 %659
        %661 = vrot.lane.b32.xlu0 %v638, 1
        %v662 = vpop.permute.xlu0 %661
        %vm663 = vcmp.lt.s32.totalorder %v325, 1
        %v664 = vsel %vm663, %v656, %v660
        %v665 = vsel %vm663, %v658, %v662
        %v666 = vsel %vm663, %v652, %v656
        %v667 = vsel %vm663, %v654, %v658
        %v668 = vsel %vm663, %v648, %v652
        %v669 = vsel %vm663, %v650, %v654
        %v670 = vsel %vm663, %v644, %v648
        %v671 = vsel %vm663, %v646, %v650
        %v672 = vsel %vm663, %v640, %v644
        %v673 = vsel %vm663, %v642, %v646
        %v674 = vsel %vm663, %v660, %v640
        %v675 = vsel %vm663, %v662, %v642
        %676 = vrot.lane.b32.xlu0 %v627, 127
        %v677 = vpop.permute.xlu0 %676
        %678 = vrot.lane.b32.xlu0 %v633, 127
        %v679 = vpop.permute.xlu0 %678
        %680 = vrot.lane.b32.xlu0 %v628, 127
        %v681 = vpop.permute.xlu0 %680
        %682 = vrot.lane.b32.xlu0 %v634, 127
        %v683 = vpop.permute.xlu0 %682
        %684 = vrot.lane.b32.xlu0 %v629, 127
        %v685 = vpop.permute.xlu0 %684
        %686 = vrot.lane.b32.xlu0 %v635, 127
        %v687 = vpop.permute.xlu0 %686
        %688 = vrot.lane.b32.xlu0 %v630, 127
        %v689 = vpop.permute.xlu0 %688
        %690 = vrot.lane.b32.xlu0 %v636, 127
        %v691 = vpop.permute.xlu0 %690
        %692 = vrot.lane.b32.xlu0 %v631, 127
        %v693 = vpop.permute.xlu0 %692
        %694 = vrot.lane.b32.xlu0 %v637, 127
        %v695 = vpop.permute.xlu0 %694
        %696 = vrot.lane.b32.xlu0 %v632, 127
        %v697 = vpop.permute.xlu0 %696
        %698 = vrot.lane.b32.xlu0 %v638, 127
        %v699 = vpop.permute.xlu0 %698
        %vm700 = vcmp.lt.s32.totalorder %v325, 127
        %v701 = vsel %vm700, %v693, %v697
        %v702 = vsel %vm700, %v695, %v699
        %v703 = vsel %vm700, %v689, %v693
        %v704 = vsel %vm700, %v691, %v695
        %v705 = vsel %vm700, %v685, %v689
        %v706 = vsel %vm700, %v687, %v691
        %v707 = vsel %vm700, %v681, %v685
        %v708 = vsel %vm700, %v683, %v687
        %v709 = vsel %vm700, %v677, %v681
        %v710 = vsel %vm700, %v679, %v683
        %v711 = vsel %vm700, %v697, %v677
        %v712 = vsel %vm700, %v699, %v679
        %v713 = vld [vmem:[#allocation4] sm:$0xff]
        %v714 = vld [vmem:[#allocation4 + $0x8] sm:$0xff]
        %v715 = vld [vmem:[#allocation4 + $0x10] sm:$0xff]
        %v716 = vld [vmem:[#allocation4 + $0x18] sm:$0xff]
        %v717 = vld [vmem:[%s4] sm:$0xff]
        %v718 = vld [vmem:[%s4 + $0x8] sm:$0xff]
        %v719 = vld [vmem:[%s4 + $0x10] sm:$0xff]
        %v720 = vld [vmem:[%s4 + $0x18] sm:$0xff]
        %722 = vset.pattern.permute.xlu0 0
        %723 = vperm.xlu0 %722, %v717
        %v724 = vpop.permute.xlu0 %723
        %727 = vset.pattern.permute.xlu0 0
        %728 = vperm.xlu0 %727, %v718
        %v729 = vpop.permute.xlu0 %728
        %732 = vset.pattern.permute.xlu0 0
        %733 = vperm.xlu0 %732, %v719
        %v734 = vpop.permute.xlu0 %733
        %737 = vset.pattern.permute.xlu0 0
        %738 = vperm.xlu0 %737, %v720
        %v739 = vpop.permute.xlu0 %738
        %vm741 = vcmask 392192
        %v743 = vsel %vm741, %v713, 0
        %v746 = vsel %vm741, %v714, 0
        %v749 = vsel %vm741, %v715, 0
        %v752 = vsel %vm741, %v716, 0
        %754 = vmatprep.subr.mxu0 %v672
        %755 = vmatpush1.msra.mxu0 %v674
        %756 = vmatprep.subr.mxu0 %v673
        %757 = vmatpush1.msra.mxu0 %v675
        %758 = vmatprep.subr.mxu0 %v628
        %759 = vmatpush1.msra.mxu0 %v627
        %760 = vmatprep.subr.mxu0 %v634
        %761 = vmatpush1.msra.mxu0 %v633
        %762 = vmatprep.subr.mxu0 %v707
        %763 = vmatpush1.msra.mxu0 %v709
        %764 = vmatprep.subr.mxu0 %v708
        %765 = vmatpush1.msra.mxu0 %v710
        %766 = vmatprep.subr.mxu0 0.0
        %767 = vmatpush1.msra.mxu0 0.0
        %768 = vmatprep.subr.mxu0 0.0
        %769 = vmatpush1.msra.mxu0 0.0
        %770 = vmatprep.subr.mxu0 0.0
        %771 = vmatpush1.msra.mxu0 0.0
        %772 = vmatprep.subr.mxu0 0.0
        %773 = vmatpush1.msra.mxu0 0.0
        %774 = vmatprep.subr.mxu0 0.0
        %775 = vmatpush1.msra.mxu0 0.0
        %776 = vmatprep.subr.mxu0 0.0
        %777 = vmatpush1.msra.mxu0 0.0
        %778 = vmatprep.subr.mxu0 0.0
        %779 = vmatpush1.msra.mxu0 0.0
        %780 = vmatprep.subr.mxu0 0.0
        %781 = vmatpush1.msra.mxu0 0.0
        %782 = vmatprep.subr.mxu0 0.0
        %783 = vmatpush1.msra.mxu0 0.0
        %784 = vmatprep.subr.mxu0 0.0
        %785 = vmatpush1.msra.mxu0 0.0
        %786 = vmatprep.subr.mxu0 0.0
        %787 = vmatpush1.msra.mxu0 0.0
        %788 = vmatprep.subr.mxu0 0.0
        %789 = vmatpush1.msra.mxu0 0.0
        %790 = vmatprep.subr.mxu0 0.0
        %791 = vmatpush1.msra.mxu0 0.0
        %792 = vmatprep.subr.mxu0 0.0
        %793 = vmatpush1.msra.mxu0 0.0
        %794 = vmatprep.subr.mxu0 0.0
        %795 = vmatpush1.msra.mxu0 0.0
        %796 = vmatprep.subr.mxu0 0.0
        %797 = vmatpush1.msra.mxu0 0.0
        %798 = vmatprep.subr.mxu0 0.0
        %799 = vmatpush1.msra.mxu0 0.0
        %800 = vmatprep.subr.mxu0 0.0
        %801 = vmatpush1.msra.mxu0 0.0
        %802 = vmatprep.subr.mxu0 0.0
        %803 = vmatpush1.msra.mxu0 0.0
        %804 = vmatprep.subr.mxu0 0.0
        %805 = vmatpush1.msra.mxu0 0.0
        %806 = vmatprep.subr.mxu0 0.0
        %807 = vmatpush1.msra.mxu0 0.0
        %808 = vmatprep.subr.mxu0 0.0
        %809 = vmatpush1.msra.mxu0 0.0
        %810 = vmatprep.subr.mxu0 0.0
        %811 = vmatpush1.msra.mxu0 0.0
        %812 = vmatprep.subr.mxu0 0.0
        %813 = vmatpush1.msra.mxu0 0.0
        %814 = vmatprep.subr.mxu0 0.0
        %815 = vmatpush1.msra.mxu0 0.0
        %816 = vmatprep.subr.mxu0 0.0
        %817 = vmatpush1.msra.mxu0 0.0
        %818 = vmatprep.mubr.f32.mxu0 0.0
        %819 = vmatmul.mubr.f32.gmra.mrb[0].mxu0 %v743
        %v820 = vpop.f32.mrb[0].mxu0
        %v821 = vadd.f32 %v724, %v820
        %v822 = vpop.f32.mrb[0].mxu0
        %v823 = vadd.f32 %v724, %v822
        %824 = vmatprep.mubr.f32.mxu0 0.0
        %825 = vmatmul.mubr.f32.gmra.mrb[0].mxu0 %v746
        %v826 = vpop.f32.mrb[0].mxu0
        %v827 = vadd.f32 %v729, %v826
        %v828 = vpop.f32.mrb[0].mxu0
        %v829 = vadd.f32 %v729, %v828
        %830 = vmatprep.mubr.f32.mxu0 0.0
        %831 = vmatmul.mubr.f32.gmra.mrb[0].mxu0 %v749
        %v832 = vpop.f32.mrb[0].mxu0
        %v833 = vadd.f32 %v734, %v832
        %v834 = vpop.f32.mrb[0].mxu0
        %v835 = vadd.f32 %v734, %v834
        %836 = vmatprep.mubr.f32.mxu0 0.0
        %837 = vmatmul.mubr.f32.gmra.mrb[0].mxu0 %v752
        %v838 = vpop.f32.mrb[0].mxu0
        %v839 = vadd.f32 %v739, %v838
        %v840 = vpop.f32.mrb[0].mxu0
        %v841 = vadd.f32 %v739, %v840
        %842 = vdwg.mxu0
        %843 = vmatprep.subr.mxu0 %v668
        %844 = vmatpush1.msra.mxu0 %v670
        %845 = vmatprep.subr.mxu0 %v669
        %846 = vmatpush1.msra.mxu0 %v671
        %847 = vmatprep.subr.mxu0 %v630
        %848 = vmatpush1.msra.mxu0 %v629
        %849 = vmatprep.subr.mxu0 %v636
        %850 = vmatpush1.msra.mxu0 %v635
        %851 = vmatprep.subr.mxu0 %v703
        %852 = vmatpush1.msra.mxu0 %v705
        %853 = vmatprep.subr.mxu0 %v704
        %854 = vmatpush1.msra.mxu0 %v706
        %855 = vmatprep.subr.mxu0 0.0
        %856 = vmatpush1.msra.mxu0 0.0
        %857 = vmatprep.subr.mxu0 0.0
        %858 = vmatpush1.msra.mxu0 0.0
        %859 = vmatprep.subr.mxu0 0.0
        %860 = vmatpush1.msra.mxu0 0.0
        %861 = vmatprep.subr.mxu0 0.0
        %862 = vmatpush1.msra.mxu0 0.0
        %863 = vmatprep.subr.mxu0 0.0
        %864 = vmatpush1.msra.mxu0 0.0
        %865 = vmatprep.subr.mxu0 0.0
        %866 = vmatpush1.msra.mxu0 0.0
        %867 = vmatprep.subr.mxu0 0.0
        %868 = vmatpush1.msra.mxu0 0.0
        %869 = vmatprep.subr.mxu0 0.0
        %870 = vmatpush1.msra.mxu0 0.0
        %871 = vmatprep.subr.mxu0 0.0
        %872 = vmatpush1.msra.mxu0 0.0
        %873 = vmatprep.subr.mxu0 0.0
        %874 = vmatpush1.msra.mxu0 0.0
        %875 = vmatprep.subr.mxu0 0.0
        %876 = vmatpush1.msra.mxu0 0.0
        %877 = vmatprep.subr.mxu0 0.0
        %878 = vmatpush1.msra.mxu0 0.0
        %879 = vmatprep.subr.mxu0 0.0
        %880 = vmatpush1.msra.mxu0 0.0
        %881 = vmatprep.subr.mxu0 0.0
        %882 = vmatpush1.msra.mxu0 0.0
        %883 = vmatprep.subr.mxu0 0.0
        %884 = vmatpush1.msra.mxu0 0.0
        %885 = vmatprep.subr.mxu0 0.0
        %886 = vmatpush1.msra.mxu0 0.0
        %887 = vmatprep.subr.mxu0 0.0
        %888 = vmatpush1.msra.mxu0 0.0
        %889 = vmatprep.subr.mxu0 0.0
        %890 = vmatpush1.msra.mxu0 0.0
        %891 = vmatprep.subr.mxu0 0.0
        %892 = vmatpush1.msra.mxu0 0.0
        %893 = vmatprep.subr.mxu0 0.0
        %894 = vmatpush1.msra.mxu0 0.0
        %895 = vmatprep.subr.mxu0 0.0
        %896 = vmatpush1.msra.mxu0 0.0
        %897 = vmatprep.subr.mxu0 0.0
        %898 = vmatpush1.msra.mxu0 0.0
        %899 = vmatprep.subr.mxu0 0.0
        %900 = vmatpush1.msra.mxu0 0.0
        %901 = vmatprep.subr.mxu0 0.0
        %902 = vmatpush1.msra.mxu0 0.0
        %903 = vmatprep.subr.mxu0 0.0
        %904 = vmatpush1.msra.mxu0 0.0
        %905 = vmatprep.subr.mxu0 0.0
        %906 = vmatpush1.msra.mxu0 0.0
        %907 = vmatprep.mubr.f32.mxu0 0.0
        %908 = vmatmul.mubr.f32.gmra.mrb[0].mxu0 %v743
        %v909 = vpop.f32.mrb[0].mxu0
        %v910 = vadd.f32 %v724, %v909
        %v911 = vpop.f32.mrb[0].mxu0
        %v912 = vadd.f32 %v724, %v911
        %913 = vmatprep.mubr.f32.mxu0 0.0
        %914 = vmatmul.mubr.f32.gmra.mrb[0].mxu0 %v746
        %v915 = vpop.f32.mrb[0].mxu0
        %v916 = vadd.f32 %v729, %v915
        %v917 = vpop.f32.mrb[0].mxu0
        %v918 = vadd.f32 %v729, %v917
        %919 = vmatprep.mubr.f32.mxu0 0.0
        %920 = vmatmul.mubr.f32.gmra.mrb[0].mxu0 %v749
        %v921 = vpop.f32.mrb[0].mxu0
        %v922 = vadd.f32 %v734, %v921
        %v923 = vpop.f32.mrb[0].mxu0
        %v924 = vadd.f32 %v734, %v923
        %925 = vmatprep.mubr.f32.mxu0 0.0
        %926 = vmatmul.mubr.f32.gmra.mrb[0].mxu0 %v752
        %v927 = vpop.f32.mrb[0].mxu0
        %v928 = vadd.f32 %v739, %v927
        %v929 = vpop.f32.mrb[0].mxu0
        %v930 = vadd.f32 %v739, %v929
        %931 = vdwg.mxu0
        %932 = vmatprep.subr.mxu0 %v664
        %933 = vmatpush1.msra.mxu0 %v666
        %934 = vmatprep.subr.mxu0 %v665
        %935 = vmatpush1.msra.mxu0 %v667
        %936 = vmatprep.subr.mxu0 %v632
        %937 = vmatpush1.msra.mxu0 %v631
        %938 = vmatprep.subr.mxu0 %v638
        %939 = vmatpush1.msra.mxu0 %v637
        %940 = vmatprep.subr.mxu0 %v711
        %941 = vmatpush1.msra.mxu0 %v701
        %942 = vmatprep.subr.mxu0 %v712
        %943 = vmatpush1.msra.mxu0 %v702
        %944 = vmatprep.subr.mxu0 0.0
        %945 = vmatpush1.msra.mxu0 0.0
        %946 = vmatprep.subr.mxu0 0.0
        %947 = vmatpush1.msra.mxu0 0.0
        %948 = vmatprep.subr.mxu0 0.0
        %949 = vmatpush1.msra.mxu0 0.0
        %950 = vmatprep.subr.mxu0 0.0
        %951 = vmatpush1.msra.mxu0 0.0
        %952 = vmatprep.subr.mxu0 0.0
        %953 = vmatpush1.msra.mxu0 0.0
        %954 = vmatprep.subr.mxu0 0.0
        %955 = vmatpush1.msra.mxu0 0.0
        %956 = vmatprep.subr.mxu0 0.0
        %957 = vmatpush1.msra.mxu0 0.0
        %958 = vmatprep.subr.mxu0 0.0
        %959 = vmatpush1.msra.mxu0 0.0
        %960 = vmatprep.subr.mxu0 0.0
        %961 = vmatpush1.msra.mxu0 0.0
        %962 = vmatprep.subr.mxu0 0.0
        %963 = vmatpush1.msra.mxu0 0.0
        %964 = vmatprep.subr.mxu0 0.0
        %965 = vmatpush1.msra.mxu0 0.0
        %966 = vmatprep.subr.mxu0 0.0
        %967 = vmatpush1.msra.mxu0 0.0
        %968 = vmatprep.subr.mxu0 0.0
        %969 = vmatpush1.msra.mxu0 0.0
        %970 = vmatprep.subr.mxu0 0.0
        %971 = vmatpush1.msra.mxu0 0.0
        %972 = vmatprep.subr.mxu0 0.0
        %973 = vmatpush1.msra.mxu0 0.0
        %974 = vmatprep.subr.mxu0 0.0
        %975 = vmatpush1.msra.mxu0 0.0
        %976 = vmatprep.subr.mxu0 0.0
        %977 = vmatpush1.msra.mxu0 0.0
        %978 = vmatprep.subr.mxu0 0.0
        %979 = vmatpush1.msra.mxu0 0.0
        %980 = vmatprep.subr.mxu0 0.0
        %981 = vmatpush1.msra.mxu0 0.0
        %982 = vmatprep.subr.mxu0 0.0
        %983 = vmatpush1.msra.mxu0 0.0
        %984 = vmatprep.subr.mxu0 0.0
        %985 = vmatpush1.msra.mxu0 0.0
        %986 = vmatprep.subr.mxu0 0.0
        %987 = vmatpush1.msra.mxu0 0.0
        %988 = vmatprep.subr.mxu0 0.0
        %989 = vmatpush1.msra.mxu0 0.0
        %990 = vmatprep.subr.mxu0 0.0
        %991 = vmatpush1.msra.mxu0 0.0
        %992 = vmatprep.subr.mxu0 0.0
        %993 = vmatpush1.msra.mxu0 0.0
        %994 = vmatprep.subr.mxu0 0.0
        %995 = vmatpush1.msra.mxu0 0.0
        %996 = vmatprep.mubr.f32.mxu0 0.0
        %997 = vmatmul.mubr.f32.gmra.mrb[0].mxu0 %v743
        %v998 = vpop.f32.mrb[0].mxu0
        %v999 = vadd.f32 %v724, %v998
        %v1000 = vpop.f32.mrb[0].mxu0
        %v1001 = vadd.f32 %v724, %v1000
        %1002 = vmatprep.mubr.f32.mxu0 0.0
        %1003 = vmatmul.mubr.f32.gmra.mrb[0].mxu0 %v746
        %v1004 = vpop.f32.mrb[0].mxu0
        %v1005 = vadd.f32 %v729, %v1004
        %v1006 = vpop.f32.mrb[0].mxu0
        %v1007 = vadd.f32 %v729, %v1006
        %1008 = vmatprep.mubr.f32.mxu0 0.0
        %1009 = vmatmul.mubr.f32.gmra.mrb[0].mxu0 %v749
        %v1010 = vpop.f32.mrb[0].mxu0
        %v1011 = vadd.f32 %v734, %v1010
        %v1012 = vpop.f32.mrb[0].mxu0
        %v1013 = vadd.f32 %v734, %v1012
        %1014 = vmatprep.mubr.f32.mxu0 0.0
        %1015 = vmatmul.mubr.f32.gmra.mrb[0].mxu0 %v752
        %v1016 = vpop.f32.mrb[0].mxu0
        %v1017 = vadd.f32 %v739, %v1016
        %v1018 = vpop.f32.mrb[0].mxu0
        %v1019 = vadd.f32 %v739, %v1018
        %1020 = vdwg.mxu0
        %v1021 = vtanh.pop %v821
        %v1022 = vtanh.pop %v823
        %v1023 = vtanh.pop %v910
        %v1024 = vtanh.pop %v912
        %v1025 = vtanh.pop %v999
        %v1026 = vtanh.pop %v1001
        %v1027 = vtanh.pop %v827
        %v1028 = vtanh.pop %v829
        %v1029 = vtanh.pop %v916
        %v1030 = vtanh.pop %v918
        %v1031 = vtanh.pop %v1005
        %v1032 = vtanh.pop %v1007
        %v1033 = vmul.f32 %v833, 0.5
        %v1034 = vmul.f32 %v835, 0.5
        %v1035 = vmul.f32 %v922, 0.5
        %v1036 = vmul.f32 %v924, 0.5
        %v1037 = vmul.f32 %v1011, 0.5
        %v1038 = vmul.f32 %v1013, 0.5
        %v1039 = vmul.f32 %v839, 0.5
        %v1040 = vmul.f32 %v841, 0.5
        %v1041 = vmul.f32 %v928, 0.5
        %v1042 = vmul.f32 %v930, 0.5
        %v1043 = vmul.f32 %v1017, 0.5
        %v1044 = vmul.f32 %v1019, 0.5
        %v1045 = vtanh.pop %v1033
        %v1046 = vtanh.pop %v1034
        %v1047 = vtanh.pop %v1035
        %v1048 = vtanh.pop %v1036
        %v1049 = vtanh.pop %v1037
        %v1050 = vtanh.pop %v1038
        %v1051 = vtanh.pop %v1039
        %v1052 = vtanh.pop %v1040
        %v1053 = vtanh.pop %v1041
        %v1054 = vtanh.pop %v1042
        %v1055 = vtanh.pop %v1043
        %v1056 = vtanh.pop %v1044
        %v1057 = vadd.f32 %v1045, 1.0
        %v1058 = vadd.f32 %v1046, 1.0
        %v1059 = vadd.f32 %v1047, 1.0
        %v1060 = vadd.f32 %v1048, 1.0
        %v1061 = vadd.f32 %v1049, 1.0
        %v1062 = vadd.f32 %v1050, 1.0
        %v1063 = vadd.f32 %v1051, 1.0
        %v1064 = vadd.f32 %v1052, 1.0
        %v1065 = vadd.f32 %v1053, 1.0
        %v1066 = vadd.f32 %v1054, 1.0
        %v1067 = vadd.f32 %v1055, 1.0
        %v1068 = vadd.f32 %v1056, 1.0
        %v1069 = vmul.f32 %v1057, 0.5
        %v1070 = vmul.f32 %v1058, 0.5
        %v1071 = vmul.f32 %v1059, 0.5
        %v1072 = vmul.f32 %v1060, 0.5
        %v1073 = vmul.f32 %v1061, 0.5
        %v1074 = vmul.f32 %v1062, 0.5
        %v1075 = vmul.f32 %v1063, 0.5
        %v1076 = vmul.f32 %v1064, 0.5
        %v1077 = vmul.f32 %v1065, 0.5
        %v1078 = vmul.f32 %v1066, 0.5
        %v1079 = vmul.f32 %v1067, 0.5
        %v1080 = vmul.f32 %v1068, 0.5
        %v1081 = vmul.f32 %v1021, %v1069
        %v1082 = vmul.f32 %v1022, %v1070
        %v1083 = vmul.f32 %v1023, %v1071
        %v1084 = vmul.f32 %v1024, %v1072
        %v1085 = vmul.f32 %v1025, %v1073
        %v1086 = vmul.f32 %v1026, %v1074
        %v1087 = vmul.f32 %v1027, %v1075
        %v1088 = vmul.f32 %v1028, %v1076
        %v1089 = vmul.f32 %v1029, %v1077
        %v1090 = vmul.f32 %v1030, %v1078
        %v1091 = vmul.f32 %v1031, %v1079
        %v1092 = vmul.f32 %v1032, %v1080
        %v1093 = vld [vmem:[%s5] sm:$0xff]
        %v1094 = vld [vmem:[%s5 + $0x8] sm:$0xff]
        %v1095 = vld [vmem:[%s6] sm:$0xff]
        %v1096 = vld [vmem:[%s6 + $0x8] sm:$0xff]
        %1098 = vset.pattern.permute.xlu0 0
        %1099 = vperm.xlu0 %1098, %v1095
        %v1100 = vpop.permute.xlu0 %1099
        %1103 = vset.pattern.permute.xlu0 0
        %1104 = vperm.xlu0 %1103, %v1096
        %v1105 = vpop.permute.xlu0 %1104
        %vm1107 = vcmask 130048
        %v1109 = vsel %vm1107, %v1093, 0
        %v1112 = vsel %vm1107, %v1094, 0
        %1114 = vmatprep.subr.mxu0 %v1082
        %1115 = vmatpush1.msra.mxu0 %v1081
        %1116 = vmatprep.subr.mxu0 %v1088
        %1117 = vmatpush1.msra.mxu0 %v1087
        %1118 = vmatprep.subr.mxu0 0.0
        %1119 = vmatpush1.msra.mxu0 0.0
        %1120 = vmatprep.subr.mxu0 0.0
        %1121 = vmatpush1.msra.mxu0 0.0
        %1122 = vmatprep.subr.mxu0 0.0
        %1123 = vmatpush1.msra.mxu0 0.0
        %1124 = vmatprep.subr.mxu0 0.0
        %1125 = vmatpush1.msra.mxu0 0.0
        %1126 = vmatprep.subr.mxu0 0.0
        %1127 = vmatpush1.msra.mxu0 0.0
        %1128 = vmatprep.subr.mxu0 0.0
        %1129 = vmatpush1.msra.mxu0 0.0
        %1130 = vmatprep.subr.mxu0 0.0
        %1131 = vmatpush1.msra.mxu0 0.0
        %1132 = vmatprep.subr.mxu0 0.0
        %1133 = vmatpush1.msra.mxu0 0.0
        %1134 = vmatprep.subr.mxu0 0.0
        %1135 = vmatpush1.msra.mxu0 0.0
        %1136 = vmatprep.subr.mxu0 0.0
        %1137 = vmatpush1.msra.mxu0 0.0
        %1138 = vmatprep.subr.mxu0 0.0
        %1139 = vmatpush1.msra.mxu0 0.0
        %1140 = vmatprep.subr.mxu0 0.0
        %1141 = vmatpush1.msra.mxu0 0.0
        %1142 = vmatprep.subr.mxu0 0.0
        %1143 = vmatpush1.msra.mxu0 0.0
        %1144 = vmatprep.subr.mxu0 0.0
        %1145 = vmatpush1.msra.mxu0 0.0
        %1146 = vmatprep.subr.mxu0 0.0
        %1147 = vmatpush1.msra.mxu0 0.0
        %1148 = vmatprep.subr.mxu0 0.0
        %1149 = vmatpush1.msra.mxu0 0.0
        %1150 = vmatprep.subr.mxu0 0.0
        %1151 = vmatpush1.msra.mxu0 0.0
        %1152 = vmatprep.subr.mxu0 0.0
        %1153 = vmatpush1.msra.mxu0 0.0
        %1154 = vmatprep.subr.mxu0 0.0
        %1155 = vmatpush1.msra.mxu0 0.0
        %1156 = vmatprep.subr.mxu0 0.0
        %1157 = vmatpush1.msra.mxu0 0.0
        %1158 = vmatprep.subr.mxu0 0.0
        %1159 = vmatpush1.msra.mxu0 0.0
        %1160 = vmatprep.subr.mxu0 0.0
        %1161 = vmatpush1.msra.mxu0 0.0
        %1162 = vmatprep.subr.mxu0 0.0
        %1163 = vmatpush1.msra.mxu0 0.0
        %1164 = vmatprep.subr.mxu0 0.0
        %1165 = vmatpush1.msra.mxu0 0.0
        %1166 = vmatprep.subr.mxu0 0.0
        %1167 = vmatpush1.msra.mxu0 0.0
        %1168 = vmatprep.subr.mxu0 0.0
        %1169 = vmatpush1.msra.mxu0 0.0
        %1170 = vmatprep.subr.mxu0 0.0
        %1171 = vmatpush1.msra.mxu0 0.0
        %1172 = vmatprep.subr.mxu0 0.0
        %1173 = vmatpush1.msra.mxu0 0.0
        %1174 = vmatprep.subr.mxu0 0.0
        %1175 = vmatpush1.msra.mxu0 0.0
        %1176 = vmatprep.subr.mxu0 0.0
        %1177 = vmatpush1.msra.mxu0 0.0
        %1178 = vmatprep.mubr.f32.mxu0 0.0
        %1179 = vmatmul.mubr.f32.gmra.mrb[0].mxu0 %v1109
        %v1180 = vpop.f32.mrb[0].mxu0
        %v1181 = vadd.f32 %v1100, %v1180
        %v1182 = vpop.f32.mrb[0].mxu0
        %v1183 = vadd.f32 %v1100, %v1182
        %1184 = vmatprep.mubr.f32.mxu0 0.0
        %1185 = vmatmul.mubr.f32.gmra.mrb[0].mxu0 %v1112
        %v1186 = vpop.f32.mrb[0].mxu0
        %v1187 = vadd.f32 %v1105, %v1186
        %v1188 = vpop.f32.mrb[0].mxu0
        %v1189 = vadd.f32 %v1105, %v1188
        %1190 = vdwg.mxu0
        %1191 = vmatprep.subr.mxu0 %v1084
        %1192 = vmatpush1.msra.mxu0 %v1083
        %1193 = vmatprep.subr.mxu0 %v1090
        %1194 = vmatpush1.msra.mxu0 %v1089
        %1195 = vmatprep.subr.mxu0 0.0
        %1196 = vmatpush1.msra.mxu0 0.0
        %1197 = vmatprep.subr.mxu0 0.0
        %1198 = vmatpush1.msra.mxu0 0.0
        %1199 = vmatprep.subr.mxu0 0.0
        %1200 = vmatpush1.msra.mxu0 0.0
        %1201 = vmatprep.subr.mxu0 0.0
        %1202 = vmatpush1.msra.mxu0 0.0
        %1203 = vmatprep.subr.mxu0 0.0
        %1204 = vmatpush1.msra.mxu0 0.0
        %1205 = vmatprep.subr.mxu0 0.0
        %1206 = vmatpush1.msra.mxu0 0.0
        %1207 = vmatprep.subr.mxu0 0.0
        %1208 = vmatpush1.msra.mxu0 0.0
        %1209 = vmatprep.subr.mxu0 0.0
        %1210 = vmatpush1.msra.mxu0 0.0
        %1211 = vmatprep.subr.mxu0 0.0
        %1212 = vmatpush1.msra.mxu0 0.0
        %1213 = vmatprep.subr.mxu0 0.0
        %1214 = vmatpush1.msra.mxu0 0.0
        %1215 = vmatprep.subr.mxu0 0.0
        %1216 = vmatpush1.msra.mxu0 0.0
        %1217 = vmatprep.subr.mxu0 0.0
        %1218 = vmatpush1.msra.mxu0 0.0
        %1219 = vmatprep.subr.mxu0 0.0
        %1220 = vmatpush1.msra.mxu0 0.0
        %1221 = vmatprep.subr.mxu0 0.0
        %1222 = vmatpush1.msra.mxu0 0.0
        %1223 = vmatprep.subr.mxu0 0.0
        %1224 = vmatpush1.msra.mxu0 0.0
        %1225 = vmatprep.subr.mxu0 0.0
        %1226 = vmatpush1.msra.mxu0 0.0
        %1227 = vmatprep.subr.mxu0 0.0
        %1228 = vmatpush1.msra.mxu0 0.0
        %1229 = vmatprep.subr.mxu0 0.0
        %1230 = vmatpush1.msra.mxu0 0.0
        %1231 = vmatprep.subr.mxu0 0.0
        %1232 = vmatpush1.msra.mxu0 0.0
        %1233 = vmatprep.subr.mxu0 0.0
        %1234 = vmatpush1.msra.mxu0 0.0
        %1235 = vmatprep.subr.mxu0 0.0
        %1236 = vmatpush1.msra.mxu0 0.0
        %1237 = vmatprep.subr.mxu0 0.0
        %1238 = vmatpush1.msra.mxu0 0.0
        %1239 = vmatprep.subr.mxu0 0.0
        %1240 = vmatpush1.msra.mxu0 0.0
        %1241 = vmatprep.subr.mxu0 0.0
        %1242 = vmatpush1.msra.mxu0 0.0
        %1243 = vmatprep.subr.mxu0 0.0
        %1244 = vmatpush1.msra.mxu0 0.0
        %1245 = vmatprep.subr.mxu0 0.0
        %1246 = vmatpush1.msra.mxu0 0.0
        %1247 = vmatprep.subr.mxu0 0.0
        %1248 = vmatpush1.msra.mxu0 0.0
        %1249 = vmatprep.subr.mxu0 0.0
        %1250 = vmatpush1.msra.mxu0 0.0
        %1251 = vmatprep.subr.mxu0 0.0
        %1252 = vmatpush1.msra.mxu0 0.0
        %1253 = vmatprep.subr.mxu0 0.0
        %1254 = vmatpush1.msra.mxu0 0.0
        %1255 = vmatprep.mubr.f32.mxu0 0.0
        %1256 = vmatmul.mubr.f32.gmra.mrb[0].mxu0 %v1109
        %v1257 = vpop.f32.mrb[0].mxu0
        %v1258 = vadd.f32 %v1100, %v1257
        %v1259 = vpop.f32.mrb[0].mxu0
        %v1260 = vadd.f32 %v1100, %v1259
        %1261 = vmatprep.mubr.f32.mxu0 0.0
        %1262 = vmatmul.mubr.f32.gmra.mrb[0].mxu0 %v1112
        %v1263 = vpop.f32.mrb[0].mxu0
        %v1264 = vadd.f32 %v1105, %v1263
        %v1265 = vpop.f32.mrb[0].mxu0
        %v1266 = vadd.f32 %v1105, %v1265
        %1267 = vdwg.mxu0
        %1268 = vmatprep.subr.mxu0 %v1086
        %1269 = vmatpush1.msra.mxu0 %v1085
        %1270 = vmatprep.subr.mxu0 %v1092
        %1271 = vmatpush1.msra.mxu0 %v1091
        %1272 = vmatprep.subr.mxu0 0.0
        %1273 = vmatpush1.msra.mxu0 0.0
        %1274 = vmatprep.subr.mxu0 0.0
        %1275 = vmatpush1.msra.mxu0 0.0
        %1276 = vmatprep.subr.mxu0 0.0
        %1277 = vmatpush1.msra.mxu0 0.0
        %1278 = vmatprep.subr.mxu0 0.0
        %1279 = vmatpush1.msra.mxu0 0.0
        %1280 = vmatprep.subr.mxu0 0.0
        %1281 = vmatpush1.msra.mxu0 0.0
        %1282 = vmatprep.subr.mxu0 0.0
        %1283 = vmatpush1.msra.mxu0 0.0
        %1284 = vmatprep.subr.mxu0 0.0
        %1285 = vmatpush1.msra.mxu0 0.0
        %1286 = vmatprep.subr.mxu0 0.0
        %1287 = vmatpush1.msra.mxu0 0.0
        %1288 = vmatprep.subr.mxu0 0.0
        %1289 = vmatpush1.msra.mxu0 0.0
        %1290 = vmatprep.subr.mxu0 0.0
        %1291 = vmatpush1.msra.mxu0 0.0
        %1292 = vmatprep.subr.mxu0 0.0
        %1293 = vmatpush1.msra.mxu0 0.0
        %1294 = vmatprep.subr.mxu0 0.0
        %1295 = vmatpush1.msra.mxu0 0.0
        %1296 = vmatprep.subr.mxu0 0.0
        %1297 = vmatpush1.msra.mxu0 0.0
        %1298 = vmatprep.subr.mxu0 0.0
        %1299 = vmatpush1.msra.mxu0 0.0
        %1300 = vmatprep.subr.mxu0 0.0
        %1301 = vmatpush1.msra.mxu0 0.0
        %1302 = vmatprep.subr.mxu0 0.0
        %1303 = vmatpush1.msra.mxu0 0.0
        %1304 = vmatprep.subr.mxu0 0.0
        %1305 = vmatpush1.msra.mxu0 0.0
        %1306 = vmatprep.subr.mxu0 0.0
        %1307 = vmatpush1.msra.mxu0 0.0
        %1308 = vmatprep.subr.mxu0 0.0
        %1309 = vmatpush1.msra.mxu0 0.0
        %1310 = vmatprep.subr.mxu0 0.0
        %1311 = vmatpush1.msra.mxu0 0.0
        %1312 = vmatprep.subr.mxu0 0.0
        %1313 = vmatpush1.msra.mxu0 0.0
        %1314 = vmatprep.subr.mxu0 0.0
        %1315 = vmatpush1.msra.mxu0 0.0
        %1316 = vmatprep.subr.mxu0 0.0
        %1317 = vmatpush1.msra.mxu0 0.0
        %1318 = vmatprep.subr.mxu0 0.0
        %1319 = vmatpush1.msra.mxu0 0.0
        %1320 = vmatprep.subr.mxu0 0.0
        %1321 = vmatpush1.msra.mxu0 0.0
        %1322 = vmatprep.subr.mxu0 0.0
        %1323 = vmatpush1.msra.mxu0 0.0
        %1324 = vmatprep.subr.mxu0 0.0
        %1325 = vmatpush1.msra.mxu0 0.0
        %1326 = vmatprep.subr.mxu0 0.0
        %1327 = vmatpush1.msra.mxu0 0.0
        %1328 = vmatprep.subr.mxu0 0.0
        %1329 = vmatpush1.msra.mxu0 0.0
        %1330 = vmatprep.subr.mxu0 0.0
        %1331 = vmatpush1.msra.mxu0 0.0
        %1332 = vmatprep.mubr.f32.mxu0 0.0
        %1333 = vmatmul.mubr.f32.gmra.mrb[0].mxu0 %v1109
        %v1334 = vpop.f32.mrb[0].mxu0
        %v1335 = vadd.f32 %v1100, %v1334
        %v1336 = vpop.f32.mrb[0].mxu0
        %v1337 = vadd.f32 %v1100, %v1336
        %1338 = vmatprep.mubr.f32.mxu0 0.0
        %1339 = vmatmul.mubr.f32.gmra.mrb[0].mxu0 %v1112
        %v1340 = vpop.f32.mrb[0].mxu0
        %v1341 = vadd.f32 %v1105, %v1340
        %v1342 = vpop.f32.mrb[0].mxu0
        %v1343 = vadd.f32 %v1105, %v1342
        %1344 = vdwg.mxu0
        %v1345 = vsel %vm363, %v1181, 0.0
        %v1346 = vsel %vm364, %v1183, 0.0
        %v1347 = vsel %vm365, %v1258, 0.0
        %v1348 = vsel %vm366, %v1260, 0.0
        %v1349 = vsel %vm367, %v1335, 0.0
        %v1350 = vsel %vm368, %v1337, 0.0
        %v1351 = vsel %vm363, %v1187, 0.0
        %v1352 = vsel %vm364, %v1189, 0.0
        %v1353 = vsel %vm365, %v1264, 0.0
        %v1354 = vsel %vm366, %v1266, 0.0
        %v1355 = vsel %vm367, %v1341, 0.0
        %v1356 = vsel %vm368, %v1343, 0.0
        %v1357 = vadd.f32 %v628, %v1346
        %v1358 = vadd.f32 %v629, %v1347
        %v1359 = vadd.f32 %v630, %v1348
        %v1360 = vadd.f32 %v631, %v1349
        %v1361 = vadd.f32 %v634, %v1352
        %v1362 = vadd.f32 %v635, %v1353
        %v1363 = vadd.f32 %v636, %v1354
        %v1364 = vadd.f32 %v637, %v1355
        %1365 = vrot.lane.b32.xlu0 %v1345, 2
        %v1366 = vpop.permute.xlu0 %1365
        %1367 = vrot.lane.b32.xlu0 %v1351, 2
        %v1368 = vpop.permute.xlu0 %1367
        %1369 = vrot.lane.b32.xlu0 %v1346, 2
        %v1370 = vpop.permute.xlu0 %1369
        %1371 = vrot.lane.b32.xlu0 %v1352, 2
        %v1372 = vpop.permute.xlu0 %1371
        %1373 = vrot.lane.b32.xlu0 %v1347, 2
        %v1374 = vpop.permute.xlu0 %1373
        %1375 = vrot.lane.b32.xlu0 %v1353, 2
        %v1376 = vpop.permute.xlu0 %1375
        %1377 = vrot.lane.b32.xlu0 %v1348, 2
        %v1378 = vpop.permute.xlu0 %1377
        %1379 = vrot.lane.b32.xlu0 %v1354, 2
        %v1380 = vpop.permute.xlu0 %1379
        %1381 = vrot.lane.b32.xlu0 %v1349, 2
        %v1382 = vpop.permute.xlu0 %1381
        %1383 = vrot.lane.b32.xlu0 %v1355, 2
        %v1384 = vpop.permute.xlu0 %1383
        %1385 = vrot.lane.b32.xlu0 %v1350, 2
        %v1386 = vpop.permute.xlu0 %1385
        %1387 = vrot.lane.b32.xlu0 %v1356, 2
        %v1388 = vpop.permute.xlu0 %1387
        %vm1389 = vcmp.lt.s32.totalorder %v325, 2
        %v1390 = vsel %vm1389, %v1382, %v1386
        %v1391 = vsel %vm1389, %v1384, %v1388
        %v1392 = vsel %vm1389, %v1378, %v1382
        %v1393 = vsel %vm1389, %v1380, %v1384
        %v1394 = vsel %vm1389, %v1374, %v1378
        %v1395 = vsel %vm1389, %v1376, %v1380
        %v1396 = vsel %vm1389, %v1370, %v1374
        %v1397 = vsel %vm1389, %v1372, %v1376
        %v1398 = vsel %vm1389, %v1366, %v1370
        %v1399 = vsel %vm1389, %v1368, %v1372
        %v1400 = vsel %vm1389, %v1386, %v1366
        %v1401 = vsel %vm1389, %v1388, %v1368
        %1402 = vrot.lane.b32.xlu0 %v1345, 126
        %v1403 = vpop.permute.xlu0 %1402
        %1404 = vrot.lane.b32.xlu0 %v1351, 126
        %v1405 = vpop.permute.xlu0 %1404
        %1406 = vrot.lane.b32.xlu0 %v1346, 126
        %v1407 = vpop.permute.xlu0 %1406
        %1408 = vrot.lane.b32.xlu0 %v1352, 126
        %v1409 = vpop.permute.xlu0 %1408
        %1410 = vrot.lane.b32.xlu0 %v1347, 126
        %v1411 = vpop.permute.xlu0 %1410
        %1412 = vrot.lane.b32.xlu0 %v1353, 126
        %v1413 = vpop.permute.xlu0 %1412
        %1414 = vrot.lane.b32.xlu0 %v1348, 126
        %v1415 = vpop.permute.xlu0 %1414
        %1416 = vrot.lane.b32.xlu0 %v1354, 126
        %v1417 = vpop.permute.xlu0 %1416
        %1418 = vrot.lane.b32.xlu0 %v1349, 126
        %v1419 = vpop.permute.xlu0 %1418
        %1420 = vrot.lane.b32.xlu0 %v1355, 126
        %v1421 = vpop.permute.xlu0 %1420
        %1422 = vrot.lane.b32.xlu0 %v1350, 126
        %v1423 = vpop.permute.xlu0 %1422
        %1424 = vrot.lane.b32.xlu0 %v1356, 126
        %v1425 = vpop.permute.xlu0 %1424
        %vm1426 = vcmp.lt.s32.totalorder %v325, 126
        %v1427 = vsel %vm1426, %v1419, %v1423
        %v1428 = vsel %vm1426, %v1421, %v1425
        %v1429 = vsel %vm1426, %v1415, %v1419
        %v1430 = vsel %vm1426, %v1417, %v1421
        %v1431 = vsel %vm1426, %v1411, %v1415
        %v1432 = vsel %vm1426, %v1413, %v1417
        %v1433 = vsel %vm1426, %v1407, %v1411
        %v1434 = vsel %vm1426, %v1409, %v1413
        %v1435 = vsel %vm1426, %v1403, %v1407
        %v1436 = vsel %vm1426, %v1405, %v1409
        %v1437 = vsel %vm1426, %v1423, %v1403
        %v1438 = vsel %vm1426, %v1425, %v1405
        %s1439 = scalar_lea.vmem [#allocation4], 32
        %v1440 = vld [vmem:[%s1439] sm:$0xff]
        %v1441 = vld [vmem:[%s1439 + $0x8] sm:$0xff]
        %v1442 = vld [vmem:[%s1439 + $0x10] sm:$0xff]
        %v1443 = vld [vmem:[%s1439 + $0x18] sm:$0xff]
        %s1444 = scalar_lea.vmem %s4, 32
        %v1445 = vld [vmem:[%s1444] sm:$0xff]
        %v1446 = vld [vmem:[%s1444 + $0x8] sm:$0xff]
        %v1447 = vld [vmem:[%s1444 + $0x10] sm:$0xff]
        %v1448 = vld [vmem:[%s1444 + $0x18] sm:$0xff]
        %1450 = vset.pattern.permute.xlu0 0
        %1451 = vperm.xlu0 %1450, %v1445
        %v1452 = vpop.permute.xlu0 %1451
        %1455 = vset.pattern.permute.xlu0 0
        %1456 = vperm.xlu0 %1455, %v1446
        %v1457 = vpop.permute.xlu0 %1456
        %1460 = vset.pattern.permute.xlu0 0
        %1461 = vperm.xlu0 %1460, %v1447
        %v1462 = vpop.permute.xlu0 %1461
        %1465 = vset.pattern.permute.xlu0 0
        %1466 = vperm.xlu0 %1465, %v1448
        %v1467 = vpop.permute.xlu0 %1466
        %v1470 = vsel %vm741, %v1440, 0
        %v1473 = vsel %vm741, %v1441, 0
        %v1476 = vsel %vm741, %v1442, 0
        %v1479 = vsel %vm741, %v1443, 0
        %1481 = vmatprep.subr.mxu0 %v1398
        %1482 = vmatpush1.msra.mxu0 %v1400
        %1483 = vmatprep.subr.mxu0 %v1399
        %1484 = vmatpush1.msra.mxu0 %v1401
        %1485 = vmatprep.subr.mxu0 %v1346
        %1486 = vmatpush1.msra.mxu0 %v1345
        %1487 = vmatprep.subr.mxu0 %v1352
        %1488 = vmatpush1.msra.mxu0 %v1351
        %1489 = vmatprep.subr.mxu0 %v1433
        %1490 = vmatpush1.msra.mxu0 %v1435
        %1491 = vmatprep.subr.mxu0 %v1434
        %1492 = vmatpush1.msra.mxu0 %v1436
        %1493 = vmatprep.subr.mxu0 0.0
        %1494 = vmatpush1.msra.mxu0 0.0
        %1495 = vmatprep.subr.mxu0 0.0
        %1496 = vmatpush1.msra.mxu0 0.0
        %1497 = vmatprep.subr.mxu0 0.0
        %1498 = vmatpush1.msra.mxu0 0.0
        %1499 = vmatprep.subr.mxu0 0.0
        %1500 = vmatpush1.msra.mxu0 0.0
        %1501 = vmatprep.subr.mxu0 0.0
        %1502 = vmatpush1.msra.mxu0 0.0
        %1503 = vmatprep.subr.mxu0 0.0
        %1504 = vmatpush1.msra.mxu0 0.0
        %1505 = vmatprep.subr.mxu0 0.0
        %1506 = vmatpush1.msra.mxu0 0.0
        %1507 = vmatprep.subr.mxu0 0.0
        %1508 = vmatpush1.msra.mxu0 0.0
        %1509 = vmatprep.subr.mxu0 0.0
        %1510 = vmatpush1.msra.mxu0 0.0
        %1511 = vmatprep.subr.mxu0 0.0
        %1512 = vmatpush1.msra.mxu0 0.0
        %1513 = vmatprep.subr.mxu0 0.0
        %1514 = vmatpush1.msra.mxu0 0.0
        %1515 = vmatprep.subr.mxu0 0.0
        %1516 = vmatpush1.msra.mxu0 0.0
        %1517 = vmatprep.subr.mxu0 0.0
        %1518 = vmatpush1.msra.mxu0 0.0
        %1519 = vmatprep.subr.mxu0 0.0
        %1520 = vmatpush1.msra.mxu0 0.0
        %1521 = vmatprep.subr.mxu0 0.0
        %1522 = vmatpush1.msra.mxu0 0.0
        %1523 = vmatprep.subr.mxu0 0.0
        %1524 = vmatpush1.msra.mxu0 0.0
        %1525 = vmatprep.subr.mxu0 0.0
        %1526 = vmatpush1.msra.mxu0 0.0
        %1527 = vmatprep.subr.mxu0 0.0
        %1528 = vmatpush1.msra.mxu0 0.0
        %1529 = vmatprep.subr.mxu0 0.0
        %1530 = vmatpush1.msra.mxu0 0.0
        %1531 = vmatprep.subr.mxu0 0.0
        %1532 = vmatpush1.msra.mxu0 0.0
        %1533 = vmatprep.subr.mxu0 0.0
        %1534 = vmatpush1.msra.mxu0 0.0
        %1535 = vmatprep.subr.mxu0 0.0
        %1536 = vmatpush1.msra.mxu0 0.0
        %1537 = vmatprep.subr.mxu0 0.0
        %1538 = vmatpush1.msra.mxu0 0.0
        %1539 = vmatprep.subr.mxu0 0.0
        %1540 = vmatpush1.msra.mxu0 0.0
        %1541 = vmatprep.subr.mxu0 0.0
        %1542 = vmatpush1.msra.mxu0 0.0
        %1543 = vmatprep.subr.mxu0 0.0
        %1544 = vmatpush1.msra.mxu0 0.0
        %1545 = vmatprep.mubr.f32.mxu0 0.0
        %1546 = vmatmul.mubr.f32.gmra.mrb[0].mxu0 %v1470
        %v1547 = vpop.f32.mrb[0].mxu0
        %v1548 = vadd.f32 %v1452, %v1547
        %v1549 = vpop.f32.mrb[0].mxu0
        %v1550 = vadd.f32 %v1452, %v1549
        %1551 = vmatprep.mubr.f32.mxu0 0.0
        %1552 = vmatmul.mubr.f32.gmra.mrb[0].mxu0 %v1473
        %v1553 = vpop.f32.mrb[0].mxu0
        %v1554 = vadd.f32 %v1457, %v1553
        %v1555 = vpop.f32.mrb[0].mxu0
        %v1556 = vadd.f32 %v1457, %v1555
        %1557 = vmatprep.mubr.f32.mxu0 0.0
        %1558 = vmatmul.mubr.f32.gmra.mrb[0].mxu0 %v1476
        %v1559 = vpop.f32.mrb[0].mxu0
        %v1560 = vadd.f32 %v1462, %v1559
        %v1561 = vpop.f32.mrb[0].mxu0
        %v1562 = vadd.f32 %v1462, %v1561
        %1563 = vmatprep.mubr.f32.mxu0 0.0
        %1564 = vmatmul.mubr.f32.gmra.mrb[0].mxu0 %v1479
        %v1565 = vpop.f32.mrb[0].mxu0
        %v1566 = vadd.f32 %v1467, %v1565
        %v1567 = vpop.f32.mrb[0].mxu0
        %v1568 = vadd.f32 %v1467, %v1567
        %1569 = vdwg.mxu0
        %1570 = vmatprep.subr.mxu0 %v1394
        %1571 = vmatpush1.msra.mxu0 %v1396
        %1572 = vmatprep.subr.mxu0 %v1395
        %1573 = vmatpush1.msra.mxu0 %v1397
        %1574 = vmatprep.subr.mxu0 %v1348
        %1575 = vmatpush1.msra.mxu0 %v1347
        %1576 = vmatprep.subr.mxu0 %v1354
        %1577 = vmatpush1.msra.mxu0 %v1353
        %1578 = vmatprep.subr.mxu0 %v1429
        %1579 = vmatpush1.msra.mxu0 %v1431
        %1580 = vmatprep.subr.mxu0 %v1430
        %1581 = vmatpush1.msra.mxu0 %v1432
        %1582 = vmatprep.subr.mxu0 0.0
        %1583 = vmatpush1.msra.mxu0 0.0
        %1584 = vmatprep.subr.mxu0 0.0
        %1585 = vmatpush1.msra.mxu0 0.0
        %1586 = vmatprep.subr.mxu0 0.0
        %1587 = vmatpush1.msra.mxu0 0.0
        %1588 = vmatprep.subr.mxu0 0.0
        %1589 = vmatpush1.msra.mxu0 0.0
        %1590 = vmatprep.subr.mxu0 0.0
        %1591 = vmatpush1.msra.mxu0 0.0
        %1592 = vmatprep.subr.mxu0 0.0
        %1593 = vmatpush1.msra.mxu0 0.0
        %1594 = vmatprep.subr.mxu0 0.0
        %1595 = vmatpush1.msra.mxu0 0.0
        %1596 = vmatprep.subr.mxu0 0.0
        %1597 = vmatpush1.msra.mxu0 0.0
        %1598 = vmatprep.subr.mxu0 0.0
        %1599 = vmatpush1.msra.mxu0 0.0
        %1600 = vmatprep.subr.mxu0 0.0
        %1601 = vmatpush1.msra.mxu0 0.0
        %1602 = vmatprep.subr.mxu0 0.0
        %1603 = vmatpush1.msra.mxu0 0.0
        %1604 = vmatprep.subr.mxu0 0.0
        %1605 = vmatpush1.msra.mxu0 0.0
        %1606 = vmatprep.subr.mxu0 0.0
        %1607 = vmatpush1.msra.mxu0 0.0
        %1608 = vmatprep.subr.mxu0 0.0
        %1609 = vmatpush1.msra.mxu0 0.0
        %1610 = vmatprep.subr.mxu0 0.0
        %1611 = vmatpush1.msra.mxu0 0.0
        %1612 = vmatprep.subr.mxu0 0.0
        %1613 = vmatpush1.msra.mxu0 0.0
        %1614 = vmatprep.subr.mxu0 0.0
        %1615 = vmatpush1.msra.mxu0 0.0
        %1616 = vmatprep.subr.mxu0 0.0
        %1617 = vmatpush1.msra.mxu0 0.0
        %1618 = vmatprep.subr.mxu0 0.0
        %1619 = vmatpush1.msra.mxu0 0.0
        %1620 = vmatprep.subr.mxu0 0.0
        %1621 = vmatpush1.msra.mxu0 0.0
        %1622 = vmatprep.subr.mxu0 0.0
        %1623 = vmatpush1.msra.mxu0 0.0
        %1624 = vmatprep.subr.mxu0 0.0
        %1625 = vmatpush1.msra.mxu0 0.0
        %1626 = vmatprep.subr.mxu0 0.0
        %1627 = vmatpush1.msra.mxu0 0.0
        %1628 = vmatprep.subr.mxu0 0.0
        %1629 = vmatpush1.msra.mxu0 0.0
        %1630 = vmatprep.subr.mxu0 0.0
        %1631 = vmatpush1.msra.mxu0 0.0
        %1632 = vmatprep.subr.mxu0 0.0
        %1633 = vmatpush1.msra.mxu0 0.0
        %1634 = vmatprep.mubr.f32.mxu0 0.0
        %1635 = vmatmul.mubr.f32.gmra.mrb[0].mxu0 %v1470
        %v1636 = vpop.f32.mrb[0].mxu0
        %v1637 = vadd.f32 %v1452, %v1636
        %v1638 = vpop.f32.mrb[0].mxu0
        %v1639 = vadd.f32 %v1452, %v1638
        %1640 = vmatprep.mubr.f32.mxu0 0.0
        %1641 = vmatmul.mubr.f32.gmra.mrb[0].mxu0 %v1473
        %v1642 = vpop.f32.mrb[0].mxu0
        %v1643 = vadd.f32 %v1457, %v1642
        %v1644 = vpop.f32.mrb[0].mxu0
        %v1645 = vadd.f32 %v1457, %v1644
        %1646 = vmatprep.mubr.f32.mxu0 0.0
        %1647 = vmatmul.mubr.f32.gmra.mrb[0].mxu0 %v1476
        %v1648 = vpop.f32.mrb[0].mxu0
        %v1649 = vadd.f32 %v1462, %v1648
        %v1650 = vpop.f32.mrb[0].mxu0
        %v1651 = vadd.f32 %v1462, %v1650
        %1652 = vmatprep.mubr.f32.mxu0 0.0
        %1653 = vmatmul.mubr.f32.gmra.mrb[0].mxu0 %v1479
        %v1654 = vpop.f32.mrb[0].mxu0
        %v1655 = vadd.f32 %v1467, %v1654
        %v1656 = vpop.f32.mrb[0].mxu0
        %v1657 = vadd.f32 %v1467, %v1656
        %1658 = vdwg.mxu0
        %1659 = vmatprep.subr.mxu0 %v1390
        %1660 = vmatpush1.msra.mxu0 %v1392
        %1661 = vmatprep.subr.mxu0 %v1391
        %1662 = vmatpush1.msra.mxu0 %v1393
        %1663 = vmatprep.subr.mxu0 %v1350
        %1664 = vmatpush1.msra.mxu0 %v1349
        %1665 = vmatprep.subr.mxu0 %v1356
        %1666 = vmatpush1.msra.mxu0 %v1355
        %1667 = vmatprep.subr.mxu0 %v1437
        %1668 = vmatpush1.msra.mxu0 %v1427
        %1669 = vmatprep.subr.mxu0 %v1438
        %1670 = vmatpush1.msra.mxu0 %v1428
        %1671 = vmatprep.subr.mxu0 0.0
        %1672 = vmatpush1.msra.mxu0 0.0
        %1673 = vmatprep.subr.mxu0 0.0
        %1674 = vmatpush1.msra.mxu0 0.0
        %1675 = vmatprep.subr.mxu0 0.0
        %1676 = vmatpush1.msra.mxu0 0.0
        %1677 = vmatprep.subr.mxu0 0.0
        %1678 = vmatpush1.msra.mxu0 0.0
        %1679 = vmatprep.subr.mxu0 0.0
        %1680 = vmatpush1.msra.mxu0 0.0
        %1681 = vmatprep.subr.mxu0 0.0
        %1682 = vmatpush1.msra.mxu0 0.0
        %1683 = vmatprep.subr.mxu0 0.0
        %1684 = vmatpush1.msra.mxu0 0.0
        %1685 = vmatprep.subr.mxu0 0.0
        %1686 = vmatpush1.msra.mxu0 0.0
        %1687 = vmatprep.subr.mxu0 0.0
        %1688 = vmatpush1.msra.mxu0 0.0
        %1689 = vmatprep.subr.mxu0 0.0
        %1690 = vmatpush1.msra.mxu0 0.0
        %1691 = vmatprep.subr.mxu0 0.0
        %1692 = vmatpush1.msra.mxu0 0.0
        %1693 = vmatprep.subr.mxu0 0.0
        %1694 = vmatpush1.msra.mxu0 0.0
        %1695 = vmatprep.subr.mxu0 0.0
        %1696 = vmatpush1.msra.mxu0 0.0
        %1697 = vmatprep.subr.mxu0 0.0
        %1698 = vmatpush1.msra.mxu0 0.0
        %1699 = vmatprep.subr.mxu0 0.0
        %1700 = vmatpush1.msra.mxu0 0.0
        %1701 = vmatprep.subr.mxu0 0.0
        %1702 = vmatpush1.msra.mxu0 0.0
        %1703 = vmatprep.subr.mxu0 0.0
        %1704 = vmatpush1.msra.mxu0 0.0
        %1705 = vmatprep.subr.mxu0 0.0
        %1706 = vmatpush1.msra.mxu0 0.0
        %1707 = vmatprep.subr.mxu0 0.0
        %1708 = vmatpush1.msra.mxu0 0.0
        %1709 = vmatprep.subr.mxu0 0.0
        %1710 = vmatpush1.msra.mxu0 0.0
        %1711 = vmatprep.subr.mxu0 0.0
        %1712 = vmatpush1.msra.mxu0 0.0
        %1713 = vmatprep.subr.mxu0 0.0
        %1714 = vmatpush1.msra.mxu0 0.0
        %1715 = vmatprep.subr.mxu0 0.0
        %1716 = vmatpush1.msra.mxu0 0.0
        %1717 = vmatprep.subr.mxu0 0.0
        %1718 = vmatpush1.msra.mxu0 0.0
        %1719 = vmatprep.subr.mxu0 0.0
        %1720 = vmatpush1.msra.mxu0 0.0
        %1721 = vmatprep.subr.mxu0 0.0
        %1722 = vmatpush1.msra.mxu0 0.0
        %1723 = vmatprep.mubr.f32.mxu0 0.0
        %1724 = vmatmul.mubr.f32.gmra.mrb[0].mxu0 %v1470
        %v1725 = vpop.f32.mrb[0].mxu0
        %v1726 = vadd.f32 %v1452, %v1725
        %v1727 = vpop.f32.mrb[0].mxu0
        %v1728 = vadd.f32 %v1452, %v1727
        %1729 = vmatprep.mubr.f32.mxu0 0.0
        %1730 = vmatmul.mubr.f32.gmra.mrb[0].mxu0 %v1473
        %v1731 = vpop.f32.mrb[0].mxu0
        %v1732 = vadd.f32 %v1457, %v1731
        %v1733 = vpop.f32.mrb[0].mxu0
        %v1734 = vadd.f32 %v1457, %v1733
        %1735 = vmatprep.mubr.f32.mxu0 0.0
        %1736 = vmatmul.mubr.f32.gmra.mrb[0].mxu0 %v1476
        %v1737 = vpop.f32.mrb[0].mxu0
        %v1738 = vadd.f32 %v1462, %v1737
        %v1739 = vpop.f32.mrb[0].mxu0
        %v1740 = vadd.f32 %v1462, %v1739
        %1741 = vmatprep.mubr.f32.mxu0 0.0
        %1742 = vmatmul.mubr.f32.gmra.mrb[0].mxu0 %v1479
        %v1743 = vpop.f32.mrb[0].mxu0
        %v1744 = vadd.f32 %v1467, %v1743
        %v1745 = vpop.f32.mrb[0].mxu0
        %v1746 = vadd.f32 %v1467, %v1745
        %1747 = vdwg.mxu0
        %v1748 = vtanh.pop %v1548
        %v1749 = vtanh.pop %v1550
        %v1750 = vtanh.pop %v1637
        %v1751 = vtanh.pop %v1639
        %v1752 = vtanh.pop %v1726
        %v1753 = vtanh.pop %v1728
        %v1754 = vtanh.pop %v1554
        %v1755 = vtanh.pop %v1556
        %v1756 = vtanh.pop %v1643
        %v1757 = vtanh.pop %v1645
        %v1758 = vtanh.pop %v1732
        %v1759 = vtanh.pop %v1734
        %v1760 = vmul.f32 %v1560, 0.5
        %v1761 = vmul.f32 %v1562, 0.5
        %v1762 = vmul.f32 %v1649, 0.5
        %v1763 = vmul.f32 %v1651, 0.5
        %v1764 = vmul.f32 %v1738, 0.5
        %v1765 = vmul.f32 %v1740, 0.5
        %v1766 = vmul.f32 %v1566, 0.5
        %v1767 = vmul.f32 %v1568, 0.5
        %v1768 = vmul.f32 %v1655, 0.5
        %v1769 = vmul.f32 %v1657, 0.5
        %v1770 = vmul.f32 %v1744, 0.5
        %v1771 = vmul.f32 %v1746, 0.5
        %v1772 = vtanh.pop %v1760
        %v1773 = vtanh.pop %v1761
        %v1774 = vtanh.pop %v1762
        %v1775 = vtanh.pop %v1763
        %v1776 = vtanh.pop %v1764
        %v1777 = vtanh.pop %v1765
        %v1778 = vtanh.pop %v1766
        %v1779 = vtanh.pop %v1767
        %v1780 = vtanh.pop %v1768
        %v1781 = vtanh.pop %v1769
        %v1782 = vtanh.pop %v1770
        %v1783 = vtanh.pop %v1771
        %v1784 = vadd.f32 %v1772, 1.0
        %v1785 = vadd.f32 %v1773, 1.0
        %v1786 = vadd.f32 %v1774, 1.0
        %v1787 = vadd.f32 %v1775, 1.0
        %v1788 = vadd.f32 %v1776, 1.0
        %v1789 = vadd.f32 %v1777, 1.0
        %v1790 = vadd.f32 %v1778, 1.0
        %v1791 = vadd.f32 %v1779, 1.0
        %v1792 = vadd.f32 %v1780, 1.0
        %v1793 = vadd.f32 %v1781, 1.0
        %v1794 = vadd.f32 %v1782, 1.0
        %v1795 = vadd.f32 %v1783, 1.0
        %v1796 = vmul.f32 %v1784, 0.5
        %v1797 = vmul.f32 %v1785, 0.5
        %v1798 = vmul.f32 %v1786, 0.5
        %v1799 = vmul.f32 %v1787, 0.5
        %v1800 = vmul.f32 %v1788, 0.5
        %v1801 = vmul.f32 %v1789, 0.5
        %v1802 = vmul.f32 %v1790, 0.5
        %v1803 = vmul.f32 %v1791, 0.5
        %v1804 = vmul.f32 %v1792, 0.5
        %v1805 = vmul.f32 %v1793, 0.5
        %v1806 = vmul.f32 %v1794, 0.5
        %v1807 = vmul.f32 %v1795, 0.5
        %v1808 = vmul.f32 %v1748, %v1796
        %v1809 = vmul.f32 %v1749, %v1797
        %v1810 = vmul.f32 %v1750, %v1798
        %v1811 = vmul.f32 %v1751, %v1799
        %v1812 = vmul.f32 %v1752, %v1800
        %v1813 = vmul.f32 %v1753, %v1801
        %v1814 = vmul.f32 %v1754, %v1802
        %v1815 = vmul.f32 %v1755, %v1803
        %v1816 = vmul.f32 %v1756, %v1804
        %v1817 = vmul.f32 %v1757, %v1805
        %v1818 = vmul.f32 %v1758, %v1806
        %v1819 = vmul.f32 %v1759, %v1807
        %s1820 = scalar_lea.vmem %s5, 16
        %v1821 = vld [vmem:[%s1820] sm:$0xff]
        %v1822 = vld [vmem:[%s1820 + $0x8] sm:$0xff]
        %s1823 = scalar_lea.vmem %s6, 16
        %v1824 = vld [vmem:[%s1823] sm:$0xff]
        %v1825 = vld [vmem:[%s1823 + $0x8] sm:$0xff]
        %1827 = vset.pattern.permute.xlu0 0
        %1828 = vperm.xlu0 %1827, %v1824
        %v1829 = vpop.permute.xlu0 %1828
        %1832 = vset.pattern.permute.xlu0 0
        %1833 = vperm.xlu0 %1832, %v1825
        %v1834 = vpop.permute.xlu0 %1833
        %v1837 = vsel %vm1107, %v1821, 0
        %v1840 = vsel %vm1107, %v1822, 0
        %1842 = vmatprep.subr.mxu0 %v1809
        %1843 = vmatpush1.msra.mxu0 %v1808
        %1844 = vmatprep.subr.mxu0 %v1815
        %1845 = vmatpush1.msra.mxu0 %v1814
        %1846 = vmatprep.subr.mxu0 0.0
        %1847 = vmatpush1.msra.mxu0 0.0
        %1848 = vmatprep.subr.mxu0 0.0
        %1849 = vmatpush1.msra.mxu0 0.0
        %1850 = vmatprep.subr.mxu0 0.0
        %1851 = vmatpush1.msra.mxu0 0.0
        %1852 = vmatprep.subr.mxu0 0.0
        %1853 = vmatpush1.msra.mxu0 0.0
        %1854 = vmatprep.subr.mxu0 0.0
        %1855 = vmatpush1.msra.mxu0 0.0
        %1856 = vmatprep.subr.mxu0 0.0
        %1857 = vmatpush1.msra.mxu0 0.0
        %1858 = vmatprep.subr.mxu0 0.0
        %1859 = vmatpush1.msra.mxu0 0.0
        %1860 = vmatprep.subr.mxu0 0.0
        %1861 = vmatpush1.msra.mxu0 0.0
        %1862 = vmatprep.subr.mxu0 0.0
        %1863 = vmatpush1.msra.mxu0 0.0
        %1864 = vmatprep.subr.mxu0 0.0
        %1865 = vmatpush1.msra.mxu0 0.0
        %1866 = vmatprep.subr.mxu0 0.0
        %1867 = vmatpush1.msra.mxu0 0.0
        %1868 = vmatprep.subr.mxu0 0.0
        %1869 = vmatpush1.msra.mxu0 0.0
        %1870 = vmatprep.subr.mxu0 0.0
        %1871 = vmatpush1.msra.mxu0 0.0
        %1872 = vmatprep.subr.mxu0 0.0
        %1873 = vmatpush1.msra.mxu0 0.0
        %1874 = vmatprep.subr.mxu0 0.0
        %1875 = vmatpush1.msra.mxu0 0.0
        %1876 = vmatprep.subr.mxu0 0.0
        %1877 = vmatpush1.msra.mxu0 0.0
        %1878 = vmatprep.subr.mxu0 0.0
        %1879 = vmatpush1.msra.mxu0 0.0
        %1880 = vmatprep.subr.mxu0 0.0
        %1881 = vmatpush1.msra.mxu0 0.0
        %1882 = vmatprep.subr.mxu0 0.0
        %1883 = vmatpush1.msra.mxu0 0.0
        %1884 = vmatprep.subr.mxu0 0.0
        %1885 = vmatpush1.msra.mxu0 0.0
        %1886 = vmatprep.subr.mxu0 0.0
        %1887 = vmatpush1.msra.mxu0 0.0
        %1888 = vmatprep.subr.mxu0 0.0
        %1889 = vmatpush1.msra.mxu0 0.0
        %1890 = vmatprep.subr.mxu0 0.0
        %1891 = vmatpush1.msra.mxu0 0.0
        %1892 = vmatprep.subr.mxu0 0.0
        %1893 = vmatpush1.msra.mxu0 0.0
        %1894 = vmatprep.subr.mxu0 0.0
        %1895 = vmatpush1.msra.mxu0 0.0
        %1896 = vmatprep.subr.mxu0 0.0
        %1897 = vmatpush1.msra.mxu0 0.0
        %1898 = vmatprep.subr.mxu0 0.0
        %1899 = vmatpush1.msra.mxu0 0.0
        %1900 = vmatprep.subr.mxu0 0.0
        %1901 = vmatpush1.msra.mxu0 0.0
        %1902 = vmatprep.subr.mxu0 0.0
        %1903 = vmatpush1.msra.mxu0 0.0
        %1904 = vmatprep.subr.mxu0 0.0
        %1905 = vmatpush1.msra.mxu0 0.0
        %1906 = vmatprep.mubr.f32.mxu0 0.0
        %1907 = vmatmul.mubr.f32.gmra.mrb[0].mxu0 %v1837
        %v1908 = vpop.f32.mrb[0].mxu0
        %v1909 = vadd.f32 %v1829, %v1908
        %v1910 = vpop.f32.mrb[0].mxu0
        %v1911 = vadd.f32 %v1829, %v1910
        %1912 = vmatprep.mubr.f32.mxu0 0.0
        %1913 = vmatmul.mubr.f32.gmra.mrb[0].mxu0 %v1840
        %v1914 = vpop.f32.mrb[0].mxu0
        %v1915 = vadd.f32 %v1834, %v1914
        %v1916 = vpop.f32.mrb[0].mxu0
        %v1917 = vadd.f32 %v1834, %v1916
        %1918 = vdwg.mxu0
        %1919 = vmatprep.subr.mxu0 %v1811
        %1920 = vmatpush1.msra.mxu0 %v1810
        %1921 = vmatprep.subr.mxu0 %v1817
        %1922 = vmatpush1.msra.mxu0 %v1816
        %1923 = vmatprep.subr.mxu0 0.0
        %1924 = vmatpush1.msra.mxu0 0.0
        %1925 = vmatprep.subr.mxu0 0.0
        %1926 = vmatpush1.msra.mxu0 0.0
        %1927 = vmatprep.subr.mxu0 0.0
        %1928 = vmatpush1.msra.mxu0 0.0
        %1929 = vmatprep.subr.mxu0 0.0
        %1930 = vmatpush1.msra.mxu0 0.0
        %1931 = vmatprep.subr.mxu0 0.0
        %1932 = vmatpush1.msra.mxu0 0.0
        %1933 = vmatprep.subr.mxu0 0.0
        %1934 = vmatpush1.msra.mxu0 0.0
        %1935 = vmatprep.subr.mxu0 0.0
        %1936 = vmatpush1.msra.mxu0 0.0
        %1937 = vmatprep.subr.mxu0 0.0
        %1938 = vmatpush1.msra.mxu0 0.0
        %1939 = vmatprep.subr.mxu0 0.0
        %1940 = vmatpush1.msra.mxu0 0.0
        %1941 = vmatprep.subr.mxu0 0.0
        %1942 = vmatpush1.msra.mxu0 0.0
        %1943 = vmatprep.subr.mxu0 0.0
        %1944 = vmatpush1.msra.mxu0 0.0
        %1945 = vmatprep.subr.mxu0 0.0
        %1946 = vmatpush1.msra.mxu0 0.0
        %1947 = vmatprep.subr.mxu0 0.0
        %1948 = vmatpush1.msra.mxu0 0.0
        %1949 = vmatprep.subr.mxu0 0.0
        %1950 = vmatpush1.msra.mxu0 0.0
        %1951 = vmatprep.subr.mxu0 0.0
        %1952 = vmatpush1.msra.mxu0 0.0
        %1953 = vmatprep.subr.mxu0 0.0
        %1954 = vmatpush1.msra.mxu0 0.0
        %1955 = vmatprep.subr.mxu0 0.0
        %1956 = vmatpush1.msra.mxu0 0.0
        %1957 = vmatprep.subr.mxu0 0.0
        %1958 = vmatpush1.msra.mxu0 0.0
        %1959 = vmatprep.subr.mxu0 0.0
        %1960 = vmatpush1.msra.mxu0 0.0
        %1961 = vmatprep.subr.mxu0 0.0
        %1962 = vmatpush1.msra.mxu0 0.0
        %1963 = vmatprep.subr.mxu0 0.0
        %1964 = vmatpush1.msra.mxu0 0.0
        %1965 = vmatprep.subr.mxu0 0.0
        %1966 = vmatpush1.msra.mxu0 0.0
        %1967 = vmatprep.subr.mxu0 0.0
        %1968 = vmatpush1.msra.mxu0 0.0
        %1969 = vmatprep.subr.mxu0 0.0
        %1970 = vmatpush1.msra.mxu0 0.0
        %1971 = vmatprep.subr.mxu0 0.0
        %1972 = vmatpush1.msra.mxu0 0.0
        %1973 = vmatprep.subr.mxu0 0.0
        %1974 = vmatpush1.msra.mxu0 0.0
        %1975 = vmatprep.subr.mxu0 0.0
        %1976 = vmatpush1.msra.mxu0 0.0
        %1977 = vmatprep.subr.mxu0 0.0
        %1978 = vmatpush1.msra.mxu0 0.0
        %1979 = vmatprep.subr.mxu0 0.0
        %1980 = vmatpush1.msra.mxu0 0.0
        %1981 = vmatprep.subr.mxu0 0.0
        %1982 = vmatpush1.msra.mxu0 0.0
        %1983 = vmatprep.mubr.f32.mxu0 0.0
        %1984 = vmatmul.mubr.f32.gmra.mrb[0].mxu0 %v1837
        %v1985 = vpop.f32.mrb[0].mxu0
        %v1986 = vadd.f32 %v1829, %v1985
        %v1987 = vpop.f32.mrb[0].mxu0
        %v1988 = vadd.f32 %v1829, %v1987
        %1989 = vmatprep.mubr.f32.mxu0 0.0
        %1990 = vmatmul.mubr.f32.gmra.mrb[0].mxu0 %v1840
        %v1991 = vpop.f32.mrb[0].mxu0
        %v1992 = vadd.f32 %v1834, %v1991
        %v1993 = vpop.f32.mrb[0].mxu0
        %v1994 = vadd.f32 %v1834, %v1993
        %1995 = vdwg.mxu0
        %1996 = vmatprep.subr.mxu0 %v1813
        %1997 = vmatpush1.msra.mxu0 %v1812
        %1998 = vmatprep.subr.mxu0 %v1819
        %1999 = vmatpush1.msra.mxu0 %v1818
        %2000 = vmatprep.subr.mxu0 0.0
        %2001 = vmatpush1.msra.mxu0 0.0
        %2002 = vmatprep.subr.mxu0 0.0
        %2003 = vmatpush1.msra.mxu0 0.0
        %2004 = vmatprep.subr.mxu0 0.0
        %2005 = vmatpush1.msra.mxu0 0.0
        %2006 = vmatprep.subr.mxu0 0.0
        %2007 = vmatpush1.msra.mxu0 0.0
        %2008 = vmatprep.subr.mxu0 0.0
        %2009 = vmatpush1.msra.mxu0 0.0
        %2010 = vmatprep.subr.mxu0 0.0
        %2011 = vmatpush1.msra.mxu0 0.0
        %2012 = vmatprep.subr.mxu0 0.0
        %2013 = vmatpush1.msra.mxu0 0.0
        %2014 = vmatprep.subr.mxu0 0.0
        %2015 = vmatpush1.msra.mxu0 0.0
        %2016 = vmatprep.subr.mxu0 0.0
        %2017 = vmatpush1.msra.mxu0 0.0
        %2018 = vmatprep.subr.mxu0 0.0
        %2019 = vmatpush1.msra.mxu0 0.0
        %2020 = vmatprep.subr.mxu0 0.0
        %2021 = vmatpush1.msra.mxu0 0.0
        %2022 = vmatprep.subr.mxu0 0.0
        %2023 = vmatpush1.msra.mxu0 0.0
        %2024 = vmatprep.subr.mxu0 0.0
        %2025 = vmatpush1.msra.mxu0 0.0
        %2026 = vmatprep.subr.mxu0 0.0
        %2027 = vmatpush1.msra.mxu0 0.0
        %2028 = vmatprep.subr.mxu0 0.0
        %2029 = vmatpush1.msra.mxu0 0.0
        %2030 = vmatprep.subr.mxu0 0.0
        %2031 = vmatpush1.msra.mxu0 0.0
        %2032 = vmatprep.subr.mxu0 0.0
        %2033 = vmatpush1.msra.mxu0 0.0
        %2034 = vmatprep.subr.mxu0 0.0
        %2035 = vmatpush1.msra.mxu0 0.0
        %2036 = vmatprep.subr.mxu0 0.0
        %2037 = vmatpush1.msra.mxu0 0.0
        %2038 = vmatprep.subr.mxu0 0.0
        %2039 = vmatpush1.msra.mxu0 0.0
        %2040 = vmatprep.subr.mxu0 0.0
        %2041 = vmatpush1.msra.mxu0 0.0
        %2042 = vmatprep.subr.mxu0 0.0
        %2043 = vmatpush1.msra.mxu0 0.0
        %2044 = vmatprep.subr.mxu0 0.0
        %2045 = vmatpush1.msra.mxu0 0.0
        %2046 = vmatprep.subr.mxu0 0.0
        %2047 = vmatpush1.msra.mxu0 0.0
        %2048 = vmatprep.subr.mxu0 0.0
        %2049 = vmatpush1.msra.mxu0 0.0
        %2050 = vmatprep.subr.mxu0 0.0
        %2051 = vmatpush1.msra.mxu0 0.0
        %2052 = vmatprep.subr.mxu0 0.0
        %2053 = vmatpush1.msra.mxu0 0.0
        %2054 = vmatprep.subr.mxu0 0.0
        %2055 = vmatpush1.msra.mxu0 0.0
        %2056 = vmatprep.subr.mxu0 0.0
        %2057 = vmatpush1.msra.mxu0 0.0
        %2058 = vmatprep.subr.mxu0 0.0
        %2059 = vmatpush1.msra.mxu0 0.0
        %2060 = vmatprep.mubr.f32.mxu0 0.0
        %2061 = vmatmul.mubr.f32.gmra.mrb[0].mxu0 %v1837
        %v2062 = vpop.f32.mrb[0].mxu0
        %v2063 = vadd.f32 %v1829, %v2062
        %v2064 = vpop.f32.mrb[0].mxu0
        %v2065 = vadd.f32 %v1829, %v2064
        %2066 = vmatprep.mubr.f32.mxu0 0.0
        %2067 = vmatmul.mubr.f32.gmra.mrb[0].mxu0 %v1840
        %v2068 = vpop.f32.mrb[0].mxu0
        %v2069 = vadd.f32 %v1834, %v2068
        %v2070 = vpop.f32.mrb[0].mxu0
        %v2071 = vadd.f32 %v1834, %v2070
        %2072 = vdwg.mxu0
        %v2073 = vsel %vm363, %v1909, 0.0
        %v2074 = vsel %vm364, %v1911, 0.0
        %v2075 = vsel %vm365, %v1986, 0.0
        %v2076 = vsel %vm366, %v1988, 0.0
        %v2077 = vsel %vm367, %v2063, 0.0
        %v2078 = vsel %vm368, %v2065, 0.0
        %v2079 = vsel %vm363, %v1915, 0.0
        %v2080 = vsel %vm364, %v1917, 0.0
        %v2081 = vsel %vm365, %v1992, 0.0
        %v2082 = vsel %vm366, %v1994, 0.0
        %v2083 = vsel %vm367, %v2069, 0.0
        %v2084 = vsel %vm368, %v2071, 0.0
        %v2085 = vadd.f32 %v1357, %v2074
        %v2086 = vadd.f32 %v1358, %v2075
        %v2087 = vadd.f32 %v1359, %v2076
        %v2088 = vadd.f32 %v1360, %v2077
        %v2089 = vadd.f32 %v1361, %v2080
        %v2090 = vadd.f32 %v1362, %v2081
        %v2091 = vadd.f32 %v1363, %v2082
        %v2092 = vadd.f32 %v1364, %v2083
        %2093 = vrot.lane.b32.xlu0 %v2073, 4
        %v2094 = vpop.permute.xlu0 %2093
        %2095 = vrot.lane.b32.xlu0 %v2079, 4
        %v2096 = vpop.permute.xlu0 %2095
        %2097 = vrot.lane.b32.xlu0 %v2074, 4
        %v2098 = vpop.permute.xlu0 %2097
        %2099 = vrot.lane.b32.xlu0 %v2080, 4
        %v2100 = vpop.permute.xlu0 %2099
        %2101 = vrot.lane.b32.xlu0 %v2075, 4
        %v2102 = vpop.permute.xlu0 %2101
        %2103 = vrot.lane.b32.xlu0 %v2081, 4
        %v2104 = vpop.permute.xlu0 %2103
        %2105 = vrot.lane.b32.xlu0 %v2076, 4
        %v2106 = vpop.permute.xlu0 %2105
        %2107 = vrot.lane.b32.xlu0 %v2082, 4
        %v2108 = vpop.permute.xlu0 %2107
        %2109 = vrot.lane.b32.xlu0 %v2077, 4
        %v2110 = vpop.permute.xlu0 %2109
        %2111 = vrot.lane.b32.xlu0 %v2083, 4
        %v2112 = vpop.permute.xlu0 %2111
        %2113 = vrot.lane.b32.xlu0 %v2078, 4
        %v2114 = vpop.permute.xlu0 %2113
        %2115 = vrot.lane.b32.xlu0 %v2084, 4
        %v2116 = vpop.permute.xlu0 %2115
        %vm2117 = vcmp.lt.s32.totalorder %v325, 4
        %v2118 = vsel %vm2117, %v2110, %v2114
        %v2119 = vsel %vm2117, %v2112, %v2116
        %v2120 = vsel %vm2117, %v2106, %v2110
        %v2121 = vsel %vm2117, %v2108, %v2112
        %v2122 = vsel %vm2117, %v2102, %v2106
        %v2123 = vsel %vm2117, %v2104, %v2108
        %v2124 = vsel %vm2117, %v2098, %v2102
        %v2125 = vsel %vm2117, %v2100, %v2104
        %v2126 = vsel %vm2117, %v2094, %v2098
        %v2127 = vsel %vm2117, %v2096, %v2100
        %v2128 = vsel %vm2117, %v2114, %v2094
        %v2129 = vsel %vm2117, %v2116, %v2096
        %2130 = vrot.lane.b32.xlu0 %v2073, 124
        %v2131 = vpop.permute.xlu0 %2130
        %2132 = vrot.lane.b32.xlu0 %v2079, 124
        %v2133 = vpop.permute.xlu0 %2132
        %2134 = vrot.lane.b32.xlu0 %v2074, 124
        %v2135 = vpop.permute.xlu0 %2134
        %2136 = vrot.lane.b32.xlu0 %v2080, 124
        %v2137 = vpop.permute.xlu0 %2136
        %2138 = vrot.lane.b32.xlu0 %v2075, 124
        %v2139 = vpop.permute.xlu0 %2138
        %2140 = vrot.lane.b32.xlu0 %v2081, 124
        %v2141 = vpop.permute.xlu0 %2140
        %2142 = vrot.lane.b32.xlu0 %v2076, 124
        %v2143 = vpop.permute.xlu0 %2142
        %2144 = vrot.lane.b32.xlu0 %v2082, 124
        %v2145 = vpop.permute.xlu0 %2144
        %2146 = vrot.lane.b32.xlu0 %v2077, 124
        %v2147 = vpop.permute.xlu0 %2146
        %2148 = vrot.lane.b32.xlu0 %v2083, 124
        %v2149 = vpop.permute.xlu0 %2148
        %2150 = vrot.lane.b32.xlu0 %v2078, 124
        %v2151 = vpop.permute.xlu0 %2150
        %2152 = vrot.lane.b32.xlu0 %v2084, 124
        %v2153 = vpop.permute.xlu0 %2152
        %vm2154 = vcmp.lt.s32.totalorder %v325, 124
        %v2155 = vsel %vm2154, %v2147, %v2151
        %v2156 = vsel %vm2154, %v2149, %v2153
        %v2157 = vsel %vm2154, %v2143, %v2147
        %v2158 = vsel %vm2154, %v2145, %v2149
        %v2159 = vsel %vm2154, %v2139, %v2143
        %v2160 = vsel %vm2154, %v2141, %v2145
        %v2161 = vsel %vm2154, %v2135, %v2139
        %v2162 = vsel %vm2154, %v2137, %v2141
        %v2163 = vsel %vm2154, %v2131, %v2135
        %v2164 = vsel %vm2154, %v2133, %v2137
        %v2165 = vsel %vm2154, %v2151, %v2131
        %v2166 = vsel %vm2154, %v2153, %v2133
        %s2167 = scalar_lea.vmem [#allocation4], 64
        %v2168 = vld [vmem:[%s2167] sm:$0xff]
        %v2169 = vld [vmem:[%s2167 + $0x8] sm:$0xff]
        %v2170 = vld [vmem:[%s2167 + $0x10] sm:$0xff]
        %v2171 = vld [vmem:[%s2167 + $0x18] sm:$0xff]
        %s2172 = scalar_lea.vmem %s4, 64
        %v2173 = vld [vmem:[%s2172] sm:$0xff]
        %v2174 = vld [vmem:[%s2172 + $0x8] sm:$0xff]
        %v2175 = vld [vmem:[%s2172 + $0x10] sm:$0xff]
        %v2176 = vld [vmem:[%s2172 + $0x18] sm:$0xff]
        %2178 = vset.pattern.permute.xlu0 0
        %2179 = vperm.xlu0 %2178, %v2173
        %v2180 = vpop.permute.xlu0 %2179
        %2183 = vset.pattern.permute.xlu0 0
        %2184 = vperm.xlu0 %2183, %v2174
        %v2185 = vpop.permute.xlu0 %2184
        %2188 = vset.pattern.permute.xlu0 0
        %2189 = vperm.xlu0 %2188, %v2175
        %v2190 = vpop.permute.xlu0 %2189
        %2193 = vset.pattern.permute.xlu0 0
        %2194 = vperm.xlu0 %2193, %v2176
        %v2195 = vpop.permute.xlu0 %2194
        %v2198 = vsel %vm741, %v2168, 0
        %v2201 = vsel %vm741, %v2169, 0
        %v2204 = vsel %vm741, %v2170, 0
        %v2207 = vsel %vm741, %v2171, 0
        %2209 = vmatprep.subr.mxu0 %v2126
        %2210 = vmatpush1.msra.mxu0 %v2128
        %2211 = vmatprep.subr.mxu0 %v2127
        %2212 = vmatpush1.msra.mxu0 %v2129
        %2213 = vmatprep.subr.mxu0 %v2074
        %2214 = vmatpush1.msra.mxu0 %v2073
        %2215 = vmatprep.subr.mxu0 %v2080
        %2216 = vmatpush1.msra.mxu0 %v2079
        %2217 = vmatprep.subr.mxu0 %v2161
        %2218 = vmatpush1.msra.mxu0 %v2163
        %2219 = vmatprep.subr.mxu0 %v2162
        %2220 = vmatpush1.msra.mxu0 %v2164
        %2221 = vmatprep.subr.mxu0 0.0
        %2222 = vmatpush1.msra.mxu0 0.0
        %2223 = vmatprep.subr.mxu0 0.0
        %2224 = vmatpush1.msra.mxu0 0.0
        %2225 = vmatprep.subr.mxu0 0.0
        %2226 = vmatpush1.msra.mxu0 0.0
        %2227 = vmatprep.subr.mxu0 0.0
        %2228 = vmatpush1.msra.mxu0 0.0
        %2229 = vmatprep.subr.mxu0 0.0
        %2230 = vmatpush1.msra.mxu0 0.0
        %2231 = vmatprep.subr.mxu0 0.0
        %2232 = vmatpush1.msra.mxu0 0.0
        %2233 = vmatprep.subr.mxu0 0.0
        %2234 = vmatpush1.msra.mxu0 0.0
        %2235 = vmatprep.subr.mxu0 0.0
        %2236 = vmatpush1.msra.mxu0 0.0
        %2237 = vmatprep.subr.mxu0 0.0
        %2238 = vmatpush1.msra.mxu0 0.0
        %2239 = vmatprep.subr.mxu0 0.0
        %2240 = vmatpush1.msra.mxu0 0.0
        %2241 = vmatprep.subr.mxu0 0.0
        %2242 = vmatpush1.msra.mxu0 0.0
        %2243 = vmatprep.subr.mxu0 0.0
        %2244 = vmatpush1.msra.mxu0 0.0
        %2245 = vmatprep.subr.mxu0 0.0
        %2246 = vmatpush1.msra.mxu0 0.0
        %2247 = vmatprep.subr.mxu0 0.0
        %2248 = vmatpush1.msra.mxu0 0.0
        %2249 = vmatprep.subr.mxu0 0.0
        %2250 = vmatpush1.msra.mxu0 0.0
        %2251 = vmatprep.subr.mxu0 0.0
        %2252 = vmatpush1.msra.mxu0 0.0
        %2253 = vmatprep.subr.mxu0 0.0
        %2254 = vmatpush1.msra.mxu0 0.0
        %2255 = vmatprep.subr.mxu0 0.0
        %2256 = vmatpush1.msra.mxu0 0.0
        %2257 = vmatprep.subr.mxu0 0.0
        %2258 = vmatpush1.msra.mxu0 0.0
        %2259 = vmatprep.subr.mxu0 0.0
        %2260 = vmatpush1.msra.mxu0 0.0
        %2261 = vmatprep.subr.mxu0 0.0
        %2262 = vmatpush1.msra.mxu0 0.0
        %2263 = vmatprep.subr.mxu0 0.0
        %2264 = vmatpush1.msra.mxu0 0.0
        %2265 = vmatprep.subr.mxu0 0.0
        %2266 = vmatpush1.msra.mxu0 0.0
        %2267 = vmatprep.subr.mxu0 0.0
        %2268 = vmatpush1.msra.mxu0 0.0
        %2269 = vmatprep.subr.mxu0 0.0
        %2270 = vmatpush1.msra.mxu0 0.0
        %2271 = vmatprep.subr.mxu0 0.0
        %2272 = vmatpush1.msra.mxu0 0.0
        %2273 = vmatprep.mubr.f32.mxu0 0.0
        %2274 = vmatmul.mubr.f32.gmra.mrb[0].mxu0 %v2198
        %v2275 = vpop.f32.mrb[0].mxu0
        %v2276 = vadd.f32 %v2180, %v2275
        %v2277 = vpop.f32.mrb[0].mxu0
        %v2278 = vadd.f32 %v2180, %v2277
        %2279 = vmatprep.mubr.f32.mxu0 0.0
        %2280 = vmatmul.mubr.f32.gmra.mrb[0].mxu0 %v2201
        %v2281 = vpop.f32.mrb[0].mxu0
        %v2282 = vadd.f32 %v2185, %v2281
        %v2283 = vpop.f32.mrb[0].mxu0
        %v2284 = vadd.f32 %v2185, %v2283
        %2285 = vmatprep.mubr.f32.mxu0 0.0
        %2286 = vmatmul.mubr.f32.gmra.mrb[0].mxu0 %v2204
        %v2287 = vpop.f32.mrb[0].mxu0
        %v2288 = vadd.f32 %v2190, %v2287
        %v2289 = vpop.f32.mrb[0].mxu0
        %v2290 = vadd.f32 %v2190, %v2289
        %2291 = vmatprep.mubr.f32.mxu0 0.0
        %2292 = vmatmul.mubr.f32.gmra.mrb[0].mxu0 %v2207
        %v2293 = vpop.f32.mrb[0].mxu0
        %v2294 = vadd.f32 %v2195, %v2293
        %v2295 = vpop.f32.mrb[0].mxu0
        %v2296 = vadd.f32 %v2195, %v2295
        %2297 = vdwg.mxu0
        %2298 = vmatprep.subr.mxu0 %v2122
        %2299 = vmatpush1.msra.mxu0 %v2124
        %2300 = vmatprep.subr.mxu0 %v2123
        %2301 = vmatpush1.msra.mxu0 %v2125
        %2302 = vmatprep.subr.mxu0 %v2076
        %2303 = vmatpush1.msra.mxu0 %v2075
        %2304 = vmatprep.subr.mxu0 %v2082
        %2305 = vmatpush1.msra.mxu0 %v2081
        %2306 = vmatprep.subr.mxu0 %v2157
        %2307 = vmatpush1.msra.mxu0 %v2159
        %2308 = vmatprep.subr.mxu0 %v2158
        %2309 = vmatpush1.msra.mxu0 %v2160
        %2310 = vmatprep.subr.mxu0 0.0
        %2311 = vmatpush1.msra.mxu0 0.0
        %2312 = vmatprep.subr.mxu0 0.0
        %2313 = vmatpush1.msra.mxu0 0.0
        %2314 = vmatprep.subr.mxu0 0.0
        %2315 = vmatpush1.msra.mxu0 0.0
        %2316 = vmatprep.subr.mxu0 0.0
        %2317 = vmatpush1.msra.mxu0 0.0
        %2318 = vmatprep.subr.mxu0 0.0
        %2319 = vmatpush1.msra.mxu0 0.0
        %2320 = vmatprep.subr.mxu0 0.0
        %2321 = vmatpush1.msra.mxu0 0.0
        %2322 = vmatprep.subr.mxu0 0.0
        %2323 = vmatpush1.msra.mxu0 0.0
        %2324 = vmatprep.subr.mxu0 0.0
        %2325 = vmatpush1.msra.mxu0 0.0
        %2326 = vmatprep.subr.mxu0 0.0
        %2327 = vmatpush1.msra.mxu0 0.0
        %2328 = vmatprep.subr.mxu0 0.0
        %2329 = vmatpush1.msra.mxu0 0.0
        %2330 = vmatprep.subr.mxu0 0.0
        %2331 = vmatpush1.msra.mxu0 0.0
        %2332 = vmatprep.subr.mxu0 0.0
        %2333 = vmatpush1.msra.mxu0 0.0
        %2334 = vmatprep.subr.mxu0 0.0
        %2335 = vmatpush1.msra.mxu0 0.0
        %2336 = vmatprep.subr.mxu0 0.0
        %2337 = vmatpush1.msra.mxu0 0.0
        %2338 = vmatprep.subr.mxu0 0.0
        %2339 = vmatpush1.msra.mxu0 0.0
        %2340 = vmatprep.subr.mxu0 0.0
        %2341 = vmatpush1.msra.mxu0 0.0
        %2342 = vmatprep.subr.mxu0 0.0
        %2343 = vmatpush1.msra.mxu0 0.0
        %2344 = vmatprep.subr.mxu0 0.0
        %2345 = vmatpush1.msra.mxu0 0.0
        %2346 = vmatprep.subr.mxu0 0.0
        %2347 = vmatpush1.msra.mxu0 0.0
        %2348 = vmatprep.subr.mxu0 0.0
        %2349 = vmatpush1.msra.mxu0 0.0
        %2350 = vmatprep.subr.mxu0 0.0
        %2351 = vmatpush1.msra.mxu0 0.0
        %2352 = vmatprep.subr.mxu0 0.0
        %2353 = vmatpush1.msra.mxu0 0.0
        %2354 = vmatprep.subr.mxu0 0.0
        %2355 = vmatpush1.msra.mxu0 0.0
        %2356 = vmatprep.subr.mxu0 0.0
        %2357 = vmatpush1.msra.mxu0 0.0
        %2358 = vmatprep.subr.mxu0 0.0
        %2359 = vmatpush1.msra.mxu0 0.0
        %2360 = vmatprep.subr.mxu0 0.0
        %2361 = vmatpush1.msra.mxu0 0.0
        %2362 = vmatprep.mubr.f32.mxu0 0.0
        %2363 = vmatmul.mubr.f32.gmra.mrb[0].mxu0 %v2198
        %v2364 = vpop.f32.mrb[0].mxu0
        %v2365 = vadd.f32 %v2180, %v2364
        %v2366 = vpop.f32.mrb[0].mxu0
        %v2367 = vadd.f32 %v2180, %v2366
        %2368 = vmatprep.mubr.f32.mxu0 0.0
        %2369 = vmatmul.mubr.f32.gmra.mrb[0].mxu0 %v2201
        %v2370 = vpop.f32.mrb[0].mxu0
        %v2371 = vadd.f32 %v2185, %v2370
        %v2372 = vpop.f32.mrb[0].mxu0
        %v2373 = vadd.f32 %v2185, %v2372
        %2374 = vmatprep.mubr.f32.mxu0 0.0
        %2375 = vmatmul.mubr.f32.gmra.mrb[0].mxu0 %v2204
        %v2376 = vpop.f32.mrb[0].mxu0
        %v2377 = vadd.f32 %v2190, %v2376
        %v2378 = vpop.f32.mrb[0].mxu0
        %v2379 = vadd.f32 %v2190, %v2378
        %2380 = vmatprep.mubr.f32.mxu0 0.0
        %2381 = vmatmul.mubr.f32.gmra.mrb[0].mxu0 %v2207
        %v2382 = vpop.f32.mrb[0].mxu0
        %v2383 = vadd.f32 %v2195, %v2382
        %v2384 = vpop.f32.mrb[0].mxu0
        %v2385 = vadd.f32 %v2195, %v2384
        %2386 = vdwg.mxu0
        %2387 = vmatprep.subr.mxu0 %v2118
        %2388 = vmatpush1.msra.mxu0 %v2120
        %2389 = vmatprep.subr.mxu0 %v2119
        %2390 = vmatpush1.msra.mxu0 %v2121
        %2391 = vmatprep.subr.mxu0 %v2078
        %2392 = vmatpush1.msra.mxu0 %v2077
        %2393 = vmatprep.subr.mxu0 %v2084
        %2394 = vmatpush1.msra.mxu0 %v2083
        %2395 = vmatprep.subr.mxu0 %v2165
        %2396 = vmatpush1.msra.mxu0 %v2155
        %2397 = vmatprep.subr.mxu0 %v2166
        %2398 = vmatpush1.msra.mxu0 %v2156
        %2399 = vmatprep.subr.mxu0 0.0
        %2400 = vmatpush1.msra.mxu0 0.0
        %2401 = vmatprep.subr.mxu0 0.0
        %2402 = vmatpush1.msra.mxu0 0.0
        %2403 = vmatprep.subr.mxu0 0.0
        %2404 = vmatpush1.msra.mxu0 0.0
        %2405 = vmatprep.subr.mxu0 0.0
        %2406 = vmatpush1.msra.mxu0 0.0
        %2407 = vmatprep.subr.mxu0 0.0
        %2408 = vmatpush1.msra.mxu0 0.0
        %2409 = vmatprep.subr.mxu0 0.0
        %2410 = vmatpush1.msra.mxu0 0.0
        %2411 = vmatprep.subr.mxu0 0.0
        %2412 = vmatpush1.msra.mxu0 0.0
        %2413 = vmatprep.subr.mxu0 0.0
        %2414 = vmatpush1.msra.mxu0 0.0
        %2415 = vmatprep.subr.mxu0 0.0
        %2416 = vmatpush1.msra.mxu0 0.0
        %2417 = vmatprep.subr.mxu0 0.0
        %2418 = vmatpush1.msra.mxu0 0.0
        %2419 = vmatprep.subr.mxu0 0.0
        %2420 = vmatpush1.msra.mxu0 0.0
        %2421 = vmatprep.subr.mxu0 0.0
        %2422 = vmatpush1.msra.mxu0 0.0
        %2423 = vmatprep.subr.mxu0 0.0
        %2424 = vmatpush1.msra.mxu0 0.0
        %2425 = vmatprep.subr.mxu0 0.0
        %2426 = vmatpush1.msra.mxu0 0.0
        %2427 = vmatprep.subr.mxu0 0.0
        %2428 = vmatpush1.msra.mxu0 0.0
        %2429 = vmatprep.subr.mxu0 0.0
        %2430 = vmatpush1.msra.mxu0 0.0
        %2431 = vmatprep.subr.mxu0 0.0
        %2432 = vmatpush1.msra.mxu0 0.0
        %2433 = vmatprep.subr.mxu0 0.0
        %2434 = vmatpush1.msra.mxu0 0.0
        %2435 = vmatprep.subr.mxu0 0.0
        %2436 = vmatpush1.msra.mxu0 0.0
        %2437 = vmatprep.subr.mxu0 0.0
        %2438 = vmatpush1.msra.mxu0 0.0
        %2439 = vmatprep.subr.mxu0 0.0
        %2440 = vmatpush1.msra.mxu0 0.0
        %2441 = vmatprep.subr.mxu0 0.0
        %2442 = vmatpush1.msra.mxu0 0.0
        %2443 = vmatprep.subr.mxu0 0.0
        %2444 = vmatpush1.msra.mxu0 0.0
        %2445 = vmatprep.subr.mxu0 0.0
        %2446 = vmatpush1.msra.mxu0 0.0
        %2447 = vmatprep.subr.mxu0 0.0
        %2448 = vmatpush1.msra.mxu0 0.0
        %2449 = vmatprep.subr.mxu0 0.0
        %2450 = vmatpush1.msra.mxu0 0.0
        %2451 = vmatprep.mubr.f32.mxu0 0.0
        %2452 = vmatmul.mubr.f32.gmra.mrb[0].mxu0 %v2198
        %v2453 = vpop.f32.mrb[0].mxu0
        %v2454 = vadd.f32 %v2180, %v2453
        %v2455 = vpop.f32.mrb[0].mxu0
        %v2456 = vadd.f32 %v2180, %v2455
        %2457 = vmatprep.mubr.f32.mxu0 0.0
        %2458 = vmatmul.mubr.f32.gmra.mrb[0].mxu0 %v2201
        %v2459 = vpop.f32.mrb[0].mxu0
        %v2460 = vadd.f32 %v2185, %v2459
        %v2461 = vpop.f32.mrb[0].mxu0
        %v2462 = vadd.f32 %v2185, %v2461
        %2463 = vmatprep.mubr.f32.mxu0 0.0
        %2464 = vmatmul.mubr.f32.gmra.mrb[0].mxu0 %v2204
        %v2465 = vpop.f32.mrb[0].mxu0
        %v2466 = vadd.f32 %v2190, %v2465
        %v2467 = vpop.f32.mrb[0].mxu0
        %v2468 = vadd.f32 %v2190, %v2467
        %2469 = vmatprep.mubr.f32.mxu0 0.0
        %2470 = vmatmul.mubr.f32.gmra.mrb[0].mxu0 %v2207
        %v2471 = vpop.f32.mrb[0].mxu0
        %v2472 = vadd.f32 %v2195, %v2471
        %v2473 = vpop.f32.mrb[0].mxu0
        %v2474 = vadd.f32 %v2195, %v2473
        %2475 = vdwg.mxu0
        %v2476 = vtanh.pop %v2276
        %v2477 = vtanh.pop %v2278
        %v2478 = vtanh.pop %v2365
        %v2479 = vtanh.pop %v2367
        %v2480 = vtanh.pop %v2454
        %v2481 = vtanh.pop %v2456
        %v2482 = vtanh.pop %v2282
        %v2483 = vtanh.pop %v2284
        %v2484 = vtanh.pop %v2371
        %v2485 = vtanh.pop %v2373
        %v2486 = vtanh.pop %v2460
        %v2487 = vtanh.pop %v2462
        %v2488 = vmul.f32 %v2288, 0.5
        %v2489 = vmul.f32 %v2290, 0.5
        %v2490 = vmul.f32 %v2377, 0.5
        %v2491 = vmul.f32 %v2379, 0.5
        %v2492 = vmul.f32 %v2466, 0.5
        %v2493 = vmul.f32 %v2468, 0.5
        %v2494 = vmul.f32 %v2294, 0.5
        %v2495 = vmul.f32 %v2296, 0.5
        %v2496 = vmul.f32 %v2383, 0.5
        %v2497 = vmul.f32 %v2385, 0.5
        %v2498 = vmul.f32 %v2472, 0.5
        %v2499 = vmul.f32 %v2474, 0.5
        %v2500 = vtanh.pop %v2488
        %v2501 = vtanh.pop %v2489
        %v2502 = vtanh.pop %v2490
        %v2503 = vtanh.pop %v2491
        %v2504 = vtanh.pop %v2492
        %v2505 = vtanh.pop %v2493
        %v2506 = vtanh.pop %v2494
        %v2507 = vtanh.pop %v2495
        %v2508 = vtanh.pop %v2496
        %v2509 = vtanh.pop %v2497
        %v2510 = vtanh.pop %v2498
        %v2511 = vtanh.pop %v2499
        %v2512 = vadd.f32 %v2500, 1.0
        %v2513 = vadd.f32 %v2501, 1.0
        %v2514 = vadd.f32 %v2502, 1.0
        %v2515 = vadd.f32 %v2503, 1.0
        %v2516 = vadd.f32 %v2504, 1.0
        %v2517 = vadd.f32 %v2505, 1.0
        %v2518 = vadd.f32 %v2506, 1.0
        %v2519 = vadd.f32 %v2507, 1.0
        %v2520 = vadd.f32 %v2508, 1.0
        %v2521 = vadd.f32 %v2509, 1.0
        %v2522 = vadd.f32 %v2510, 1.0
        %v2523 = vadd.f32 %v2511, 1.0
        %v2524 = vmul.f32 %v2512, 0.5
        %v2525 = vmul.f32 %v2513, 0.5
        %v2526 = vmul.f32 %v2514, 0.5
        %v2527 = vmul.f32 %v2515, 0.5
        %v2528 = vmul.f32 %v2516, 0.5
        %v2529 = vmul.f32 %v2517, 0.5
        %v2530 = vmul.f32 %v2518, 0.5
        %v2531 = vmul.f32 %v2519, 0.5
        %v2532 = vmul.f32 %v2520, 0.5
        %v2533 = vmul.f32 %v2521, 0.5
        %v2534 = vmul.f32 %v2522, 0.5
        %v2535 = vmul.f32 %v2523, 0.5
        %v2536 = vmul.f32 %v2476, %v2524
        %v2537 = vmul.f32 %v2477, %v2525
        %v2538 = vmul.f32 %v2478, %v2526
        %v2539 = vmul.f32 %v2479, %v2527
        %v2540 = vmul.f32 %v2480, %v2528
        %v2541 = vmul.f32 %v2481, %v2529
        %v2542 = vmul.f32 %v2482, %v2530
        %v2543 = vmul.f32 %v2483, %v2531
        %v2544 = vmul.f32 %v2484, %v2532
        %v2545 = vmul.f32 %v2485, %v2533
        %v2546 = vmul.f32 %v2486, %v2534
        %v2547 = vmul.f32 %v2487, %v2535
        %s2548 = scalar_lea.vmem %s5, 32
        %v2549 = vld [vmem:[%s2548] sm:$0xff]
        %v2550 = vld [vmem:[%s2548 + $0x8] sm:$0xff]
        %s2551 = scalar_lea.vmem %s6, 32
        %v2552 = vld [vmem:[%s2551] sm:$0xff]
        %v2553 = vld [vmem:[%s2551 + $0x8] sm:$0xff]
        %2555 = vset.pattern.permute.xlu0 0
        %2556 = vperm.xlu0 %2555, %v2552
        %v2557 = vpop.permute.xlu0 %2556
        %2560 = vset.pattern.permute.xlu0 0
        %2561 = vperm.xlu0 %2560, %v2553
        %v2562 = vpop.permute.xlu0 %2561
        %v2565 = vsel %vm1107, %v2549, 0
        %v2568 = vsel %vm1107, %v2550, 0
        %2570 = vmatprep.subr.mxu0 %v2537
        %2571 = vmatpush1.msra.mxu0 %v2536
        %2572 = vmatprep.subr.mxu0 %v2543
        %2573 = vmatpush1.msra.mxu0 %v2542
        %2574 = vmatprep.subr.mxu0 0.0
        %2575 = vmatpush1.msra.mxu0 0.0
        %2576 = vmatprep.subr.mxu0 0.0
        %2577 = vmatpush1.msra.mxu0 0.0
        %2578 = vmatprep.subr.mxu0 0.0
        %2579 = vmatpush1.msra.mxu0 0.0
        %2580 = vmatprep.subr.mxu0 0.0
        %2581 = vmatpush1.msra.mxu0 0.0
        %2582 = vmatprep.subr.mxu0 0.0
        %2583 = vmatpush1.msra.mxu0 0.0
        %2584 = vmatprep.subr.mxu0 0.0
        %2585 = vmatpush1.msra.mxu0 0.0
        %2586 = vmatprep.subr.mxu0 0.0
        %2587 = vmatpush1.msra.mxu0 0.0
        %2588 = vmatprep.subr.mxu0 0.0
        %2589 = vmatpush1.msra.mxu0 0.0
        %2590 = vmatprep.subr.mxu0 0.0
        %2591 = vmatpush1.msra.mxu0 0.0
        %2592 = vmatprep.subr.mxu0 0.0
        %2593 = vmatpush1.msra.mxu0 0.0
        %2594 = vmatprep.subr.mxu0 0.0
        %2595 = vmatpush1.msra.mxu0 0.0
        %2596 = vmatprep.subr.mxu0 0.0
        %2597 = vmatpush1.msra.mxu0 0.0
        %2598 = vmatprep.subr.mxu0 0.0
        %2599 = vmatpush1.msra.mxu0 0.0
        %2600 = vmatprep.subr.mxu0 0.0
        %2601 = vmatpush1.msra.mxu0 0.0
        %2602 = vmatprep.subr.mxu0 0.0
        %2603 = vmatpush1.msra.mxu0 0.0
        %2604 = vmatprep.subr.mxu0 0.0
        %2605 = vmatpush1.msra.mxu0 0.0
        %2606 = vmatprep.subr.mxu0 0.0
        %2607 = vmatpush1.msra.mxu0 0.0
        %2608 = vmatprep.subr.mxu0 0.0
        %2609 = vmatpush1.msra.mxu0 0.0
        %2610 = vmatprep.subr.mxu0 0.0
        %2611 = vmatpush1.msra.mxu0 0.0
        %2612 = vmatprep.subr.mxu0 0.0
        %2613 = vmatpush1.msra.mxu0 0.0
        %2614 = vmatprep.subr.mxu0 0.0
        %2615 = vmatpush1.msra.mxu0 0.0
        %2616 = vmatprep.subr.mxu0 0.0
        %2617 = vmatpush1.msra.mxu0 0.0
        %2618 = vmatprep.subr.mxu0 0.0
        %2619 = vmatpush1.msra.mxu0 0.0
        %2620 = vmatprep.subr.mxu0 0.0
        %2621 = vmatpush1.msra.mxu0 0.0
        %2622 = vmatprep.subr.mxu0 0.0
        %2623 = vmatpush1.msra.mxu0 0.0
        %2624 = vmatprep.subr.mxu0 0.0
        %2625 = vmatpush1.msra.mxu0 0.0
        %2626 = vmatprep.subr.mxu0 0.0
        %2627 = vmatpush1.msra.mxu0 0.0
        %2628 = vmatprep.subr.mxu0 0.0
        %2629 = vmatpush1.msra.mxu0 0.0
        %2630 = vmatprep.subr.mxu0 0.0
        %2631 = vmatpush1.msra.mxu0 0.0
        %2632 = vmatprep.subr.mxu0 0.0
        %2633 = vmatpush1.msra.mxu0 0.0
        %2634 = vmatprep.mubr.f32.mxu0 0.0
        %2635 = vmatmul.mubr.f32.gmra.mrb[0].mxu0 %v2565
        %v2636 = vpop.f32.mrb[0].mxu0
        %v2637 = vpop.f32.mrb[0].mxu0
        %v2638 = vadd.f32 %v2557, %v2637
        %2639 = vmatprep.mubr.f32.mxu0 0.0
        %2640 = vmatmul.mubr.f32.gmra.mrb[0].mxu0 %v2568
        %v2641 = vpop.f32.mrb[0].mxu0
        %v2642 = vpop.f32.mrb[0].mxu0
        %v2643 = vadd.f32 %v2562, %v2642
        %2644 = vdwg.mxu0
        %2645 = vmatprep.subr.mxu0 %v2539
        %2646 = vmatpush1.msra.mxu0 %v2538
        %2647 = vmatprep.subr.mxu0 %v2545
        %2648 = vmatpush1.msra.mxu0 %v2544
        %2649 = vmatprep.subr.mxu0 0.0
        %2650 = vmatpush1.msra.mxu0 0.0
        %2651 = vmatprep.subr.mxu0 0.0
        %2652 = vmatpush1.msra.mxu0 0.0
        %2653 = vmatprep.subr.mxu0 0.0
        %2654 = vmatpush1.msra.mxu0 0.0
        %2655 = vmatprep.subr.mxu0 0.0
        %2656 = vmatpush1.msra.mxu0 0.0
        %2657 = vmatprep.subr.mxu0 0.0
        %2658 = vmatpush1.msra.mxu0 0.0
        %2659 = vmatprep.subr.mxu0 0.0
        %2660 = vmatpush1.msra.mxu0 0.0
        %2661 = vmatprep.subr.mxu0 0.0
        %2662 = vmatpush1.msra.mxu0 0.0
        %2663 = vmatprep.subr.mxu0 0.0
        %2664 = vmatpush1.msra.mxu0 0.0
        %2665 = vmatprep.subr.mxu0 0.0
        %2666 = vmatpush1.msra.mxu0 0.0
        %2667 = vmatprep.subr.mxu0 0.0
        %2668 = vmatpush1.msra.mxu0 0.0
        %2669 = vmatprep.subr.mxu0 0.0
        %2670 = vmatpush1.msra.mxu0 0.0
        %2671 = vmatprep.subr.mxu0 0.0
        %2672 = vmatpush1.msra.mxu0 0.0
        %2673 = vmatprep.subr.mxu0 0.0
        %2674 = vmatpush1.msra.mxu0 0.0
        %2675 = vmatprep.subr.mxu0 0.0
        %2676 = vmatpush1.msra.mxu0 0.0
        %2677 = vmatprep.subr.mxu0 0.0
        %2678 = vmatpush1.msra.mxu0 0.0
        %2679 = vmatprep.subr.mxu0 0.0
        %2680 = vmatpush1.msra.mxu0 0.0
        %2681 = vmatprep.subr.mxu0 0.0
        %2682 = vmatpush1.msra.mxu0 0.0
        %2683 = vmatprep.subr.mxu0 0.0
        %2684 = vmatpush1.msra.mxu0 0.0
        %2685 = vmatprep.subr.mxu0 0.0
        %2686 = vmatpush1.msra.mxu0 0.0
        %2687 = vmatprep.subr.mxu0 0.0
        %2688 = vmatpush1.msra.mxu0 0.0
        %2689 = vmatprep.subr.mxu0 0.0
        %2690 = vmatpush1.msra.mxu0 0.0
        %2691 = vmatprep.subr.mxu0 0.0
        %2692 = vmatpush1.msra.mxu0 0.0
        %2693 = vmatprep.subr.mxu0 0.0
        %2694 = vmatpush1.msra.mxu0 0.0
        %2695 = vmatprep.subr.mxu0 0.0
        %2696 = vmatpush1.msra.mxu0 0.0
        %2697 = vmatprep.subr.mxu0 0.0
        %2698 = vmatpush1.msra.mxu0 0.0
        %2699 = vmatprep.subr.mxu0 0.0
        %2700 = vmatpush1.msra.mxu0 0.0
        %2701 = vmatprep.subr.mxu0 0.0
        %2702 = vmatpush1.msra.mxu0 0.0
        %2703 = vmatprep.subr.mxu0 0.0
        %2704 = vmatpush1.msra.mxu0 0.0
        %2705 = vmatprep.subr.mxu0 0.0
        %2706 = vmatpush1.msra.mxu0 0.0
        %2707 = vmatprep.subr.mxu0 0.0
        %2708 = vmatpush1.msra.mxu0 0.0
        %2709 = vmatprep.mubr.f32.mxu0 0.0
        %2710 = vmatmul.mubr.f32.gmra.mrb[0].mxu0 %v2565
        %v2711 = vpop.f32.mrb[0].mxu0
        %v2712 = vadd.f32 %v2557, %v2711
        %v2713 = vpop.f32.mrb[0].mxu0
        %v2714 = vadd.f32 %v2557, %v2713
        %2715 = vmatprep.mubr.f32.mxu0 0.0
        %2716 = vmatmul.mubr.f32.gmra.mrb[0].mxu0 %v2568
        %v2717 = vpop.f32.mrb[0].mxu0
        %v2718 = vadd.f32 %v2562, %v2717
        %v2719 = vpop.f32.mrb[0].mxu0
        %v2720 = vadd.f32 %v2562, %v2719
        %2721 = vdwg.mxu0
        %2722 = vmatprep.subr.mxu0 %v2541
        %2723 = vmatpush1.msra.mxu0 %v2540
        %2724 = vmatprep.subr.mxu0 %v2547
        %2725 = vmatpush1.msra.mxu0 %v2546
        %2726 = vmatprep.subr.mxu0 0.0
        %2727 = vmatpush1.msra.mxu0 0.0
        %2728 = vmatprep.subr.mxu0 0.0
        %2729 = vmatpush1.msra.mxu0 0.0
        %2730 = vmatprep.subr.mxu0 0.0
        %2731 = vmatpush1.msra.mxu0 0.0
        %2732 = vmatprep.subr.mxu0 0.0
        %2733 = vmatpush1.msra.mxu0 0.0
        %2734 = vmatprep.subr.mxu0 0.0
        %2735 = vmatpush1.msra.mxu0 0.0
        %2736 = vmatprep.subr.mxu0 0.0
        %2737 = vmatpush1.msra.mxu0 0.0
        %2738 = vmatprep.subr.mxu0 0.0
        %2739 = vmatpush1.msra.mxu0 0.0
        %2740 = vmatprep.subr.mxu0 0.0
        %2741 = vmatpush1.msra.mxu0 0.0
        %2742 = vmatprep.subr.mxu0 0.0
        %2743 = vmatpush1.msra.mxu0 0.0
        %2744 = vmatprep.subr.mxu0 0.0
        %2745 = vmatpush1.msra.mxu0 0.0
        %2746 = vmatprep.subr.mxu0 0.0
        %2747 = vmatpush1.msra.mxu0 0.0
        %2748 = vmatprep.subr.mxu0 0.0
        %2749 = vmatpush1.msra.mxu0 0.0
        %2750 = vmatprep.subr.mxu0 0.0
        %2751 = vmatpush1.msra.mxu0 0.0
        %2752 = vmatprep.subr.mxu0 0.0
        %2753 = vmatpush1.msra.mxu0 0.0
        %2754 = vmatprep.subr.mxu0 0.0
        %2755 = vmatpush1.msra.mxu0 0.0
        %2756 = vmatprep.subr.mxu0 0.0
        %2757 = vmatpush1.msra.mxu0 0.0
        %2758 = vmatprep.subr.mxu0 0.0
        %2759 = vmatpush1.msra.mxu0 0.0
        %2760 = vmatprep.subr.mxu0 0.0
        %2761 = vmatpush1.msra.mxu0 0.0
        %2762 = vmatprep.subr.mxu0 0.0
        %2763 = vmatpush1.msra.mxu0 0.0
        %2764 = vmatprep.subr.mxu0 0.0
        %2765 = vmatpush1.msra.mxu0 0.0
        %2766 = vmatprep.subr.mxu0 0.0
        %2767 = vmatpush1.msra.mxu0 0.0
        %2768 = vmatprep.subr.mxu0 0.0
        %2769 = vmatpush1.msra.mxu0 0.0
        %2770 = vmatprep.subr.mxu0 0.0
        %2771 = vmatpush1.msra.mxu0 0.0
        %2772 = vmatprep.subr.mxu0 0.0
        %2773 = vmatpush1.msra.mxu0 0.0
        %2774 = vmatprep.subr.mxu0 0.0
        %2775 = vmatpush1.msra.mxu0 0.0
        %2776 = vmatprep.subr.mxu0 0.0
        %2777 = vmatpush1.msra.mxu0 0.0
        %2778 = vmatprep.subr.mxu0 0.0
        %2779 = vmatpush1.msra.mxu0 0.0
        %2780 = vmatprep.subr.mxu0 0.0
        %2781 = vmatpush1.msra.mxu0 0.0
        %2782 = vmatprep.subr.mxu0 0.0
        %2783 = vmatpush1.msra.mxu0 0.0
        %2784 = vmatprep.subr.mxu0 0.0
        %2785 = vmatpush1.msra.mxu0 0.0
        %2786 = vmatprep.mubr.f32.mxu0 0.0
        %2787 = vmatmul.mubr.f32.gmra.mrb[0].mxu0 %v2565
        %v2788 = vpop.f32.mrb[0].mxu0
        %v2789 = vadd.f32 %v2557, %v2788
        %v2790 = vpop.f32.mrb[0].mxu0
        %2791 = vmatprep.mubr.f32.mxu0 0.0
        %2792 = vmatmul.mubr.f32.gmra.mrb[0].mxu0 %v2568
        %v2793 = vpop.f32.mrb[0].mxu0
        %v2794 = vadd.f32 %v2562, %v2793
        %v2795 = vpop.f32.mrb[0].mxu0
        %2796 = vdwg.mxu0
        %v2797 = vsel %vm364, %v2638, 0.0
        %v2798 = vsel %vm365, %v2712, 0.0
        %v2799 = vsel %vm366, %v2714, 0.0
        %v2800 = vsel %vm367, %v2789, 0.0
        %v2801 = vsel %vm364, %v2643, 0.0
        %v2802 = vsel %vm365, %v2718, 0.0
        %v2803 = vsel %vm366, %v2720, 0.0
        %v2804 = vsel %vm367, %v2794, 0.0
        %v2805 = vadd.f32 %v2085, %v2797
        %v2806 = vadd.f32 %v2086, %v2798
        %v2807 = vadd.f32 %v2087, %v2799
        %v2808 = vadd.f32 %v2088, %v2800
        %v2809 = vadd.f32 %v2089, %v2801
        %v2810 = vadd.f32 %v2090, %v2802
        %v2811 = vadd.f32 %v2091, %v2803
        %v2812 = vadd.f32 %v2092, %v2804
        %2813 = vst [vmem:[%s259] sm:$0xff] %v2805
        %2814 = vst [vmem:[%s259 + $0x8] sm:$0xff] %v2806
        %2815 = vst [vmem:[%s259 + $0x10] sm:$0xff] %v2807
        %2816 = vst [vmem:[%s259 + $0x18] sm:$0xff] %v2808
        %2817 = vst [vmem:[%s259 + $0x20] sm:$0xff] %v2809
        %2818 = vst [vmem:[%s259 + $0x28] sm:$0xff] %v2810
        %2819 = vst [vmem:[%s259 + $0x30] sm:$0xff] %v2811
        %2820 = vst [vmem:[%s259 + $0x38] sm:$0xff] %v2812
        %s2821 = sand.u32 %s170, 1
        %s2822 = scalar_lea.sflag [#allocation6], %s2821
        %s2823 = sand.u32 %s170, 1
        %s2824 = smul.addr %s2823, 64
        %s2825 = scalar_lea.vmem [#allocation7], %s2824
        // Predicated region
        $region83: #{tpu_custom_call.1} parent=43 // pred_check
          %p2826 = pneg %p180
        $region84: #{tpu_custom_call.1} parent=43 // pred_check_branch
          %2828 = sbr.rel (%p2826) target = $region86
        $region85: #{tpu_custom_call.1} parent=43 // pred_region
          %s2829 = smul.u32 4, %s27
          %s2831 = ssub.s32 1024, 1024
          %2832 = vsyncadd %s2822, %s2831
          %s2833 = smul.addr %s26, 16
          %s2834 = sadd.s32 %s2829, %s2833
          %s2835 = smul.addr %s2834, 128
          %s2836 = scalar_lea.hbm %s7, %s2835
          %s2837 = sshll.u32 %s2825, 4
          %s2838 = int_to_ptr.vmem [resolvable:$true] %s2837
          %2843 = dma.vmem_to_hbm [thread:$0]  %s2838, 1024, %s2836, %s2822, 512, 1024, 32
        $region86: #{tpu_custom_call.1} parent=43 // pred_fallthru
          _
      $region44: #{tpu_custom_call.1} parent=5 // pred_fallthru
        _
      %p2844 = scmp.le.s32.totalorder 2, %s17
      // Predicated region
      $region87: #{tpu_custom_call.1} parent=5 // pred_check
        %p2845 = pneg %p2844
      $region88: #{tpu_custom_call.1} parent=5 // pred_check_branch
        %2847 = sbr.rel (%p2845) target = $region90
      $region89: #{tpu_custom_call.1} parent=5 // pred_region
        %s2848 = ssub.s32 %s17, 2
        // Predicated region
        $region91: #{tpu_custom_call.1} parent=89 // pred_check
          %p2849 = pneg %p186
        $region92: #{tpu_custom_call.1} parent=89 // pred_check_branch
          %2851 = sbr.rel (%p2849) target = $region94
        $region93: #{tpu_custom_call.1} parent=89 // pred_region
          %s2852 = sand.u32 %s171, 1
          %s2853 = scalar_lea.sflag [#allocation6], %s2852
          %s2854 = sand.u32 %s171, 1
          %s2855 = smul.addr %s2854, 64
          %s2856 = scalar_lea.vmem [#allocation7], %s2855
          %2857 = dma.done %s2853, 1024
        $region94: #{tpu_custom_call.1} parent=89 // pred_fallthru
          _
      $region90: #{tpu_custom_call.1} parent=5 // pred_fallthru
        _
    $region6: #{tpu_custom_call.1} parent=1 // loop_footer
      %s21 = sadd.s32 1, %s17
    $region7: #{tpu_custom_call.1} parent=1 // loop_footer_branch
      %16 = sbr.rel target = $region3
    $region8: #{tpu_custom_call.1} parent=1 // loop_exit
      _
    %2858 = vsyncpa [#allocation5], 1
    %s2859 = scalar_lea.sflag [#allocation5], 1
    %2860 = vsyncpa %s2859, 1
    %2861 = vsyncpa [#allocation6], 1
    %s2862 = scalar_lea.sflag [#allocation6], 1
    %2863 = vsyncpa %s2862, 1
  %2864 = vsyncmov [#allocation3]
  %s2865 = vpop.sfrf %2864
  %p2866 = scmp.eq.s32.totalorder %s2865, 0
  %p2867 = pneg %p2866
  %2869 = shalt.err (%p2867)

// kernel: tpu_custom_call.1
$region0: #{tpu_custom_call.1}
  #allocation0 [shape = 'u32[]', space=smem, size = 0x4, offset = 0x4, fixed_abs, tag = 'smem constant byte address 0x4 - core index']
  #allocation1 [shape = 'u32[144,128]{1,0:T(1,128)}', space=vmem, size = 0x12000, scoped, tag = 'internal scratch']
  #allocation2 [shape = 'f32[8,768]{1,0:T(8,128)}', space=vmem, size = 0x6000, scoped, tag = 'scratch operand']
  #allocation3 [shape = 's32[1]{0}', space=sflag, size = 0x4, scoped, tag = 'scratch operand']
  #allocation8 [shape = 's32[]', space=sflag, size = 0x4, offset = 0, fixed_abs, tag = 'sflag constant byte address 0x0 - dummy sync flag']
  %s0 = inlined_call_operand.vmem [shape: f32[2,8,1280], index: 0, kind: input, shape index: {}]
  %s1 = inlined_call_operand.vmem [shape: f32[16,8], index: 1, kind: input, shape index: {}]
  %s2 = inlined_call_operand.vmem [shape: f32[16,1], index: 2, kind: input, shape index: {}]
  %s3 = inlined_call_operand.hbm [shape: f32[3,32,48], index: 3, kind: input, shape index: {}]
  %s4 = inlined_call_operand.vmem [shape: f32[3,32,1], index: 4, kind: input, shape index: {}]
  %s5 = inlined_call_operand.vmem [shape: f32[3,16,16], index: 5, kind: input, shape index: {}]
  %s6 = inlined_call_operand.vmem [shape: f32[3,16,1], index: 6, kind: input, shape index: {}]
  %s7 = inlined_call_operand.hbm [shape: f32[2,16,1024], index: 7, kind: output, shape index: {}]
  %s8 = sld [smem:[#allocation0]]
  $region95: #{tpu_custom_call.1} parent=0
    _
  %s10 = ssub.s32 1, %s8
  %s11 = scalar_select 0, %s10, %s8
  $region1: #{tpu_custom_call.1} parent=0
    #allocation4 [shape = 'u8[49152]{0}', space=vmem, size = 0xc000, scoped, tag = 'input window, operand 3, single buffered']
    #allocation5 [shape = 's32[2]{0}', space=sflag, size = 0x8, scoped, tag = 'scoped memory for tpu_custom_call.1']
    #allocation6 [shape = 's32[2]{0}', space=sflag, size = 0x8, scoped, tag = 'scoped memory for tpu_custom_call.1']
    #allocation7 [shape = 'u8[65536]{0}', space=vmem, size = 0x10000, scoped, tag = 'output window, operand 0']
    %12 = vsyncpa [#allocation5], 0
    %13 = vsyncpa [#allocation6], 0
    %s14 = scalar_lea.sflag [#allocation6], 1
    %15 = vsyncpa %s14, 0
    loop: start=0, step=1, limit=6
    $region2: #{tpu_custom_call.1} parent=1 // loop_pre_header
      _
    $region3: #{tpu_custom_call.1} parent=1 // loop_header
      %s17 = sphi 0, %s21
      %p18 = scmp.ge.s32.totalorder %s17, 6
      %s24 = sphi 0, %s36
      %s25 = sphi 0, %s32
      %s26 = sphi 0, %s24
      %s27 = sphi 0, %s25
      %s28 = sphi 0, %s26
      %s29 = sphi 0, %s27
      %s37 = sphi 0, %s37
      %s39 = sphi 0, %s37
      %s40 = sphi 0, %s39
      %s54 = sphi 0, %s40
      %s58 = sphi 0, %s58
      %s60 = sphi 0, %s58
      %s61 = sphi 0, %s60
      %s75 = sphi 0, %s61
      %s79 = sphi 0, %s79
      %s81 = sphi 0, %s79
      %s82 = sphi 0, %s81
      %s96 = sphi 0, %s82
      %s100 = sphi 0, %s100
      %s102 = sphi 0, %s100
      %s103 = sphi 0, %s102
      %s117 = sphi 0, %s103
      %s121 = sphi 0, %s121
      %s123 = sphi 0, %s121
      %s124 = sphi 0, %s123
      %s138 = sphi 0, %s124
      %s142 = sphi 0, %s142
      %s144 = sphi 0, %s142
      %s145 = sphi 0, %s144
      %s159 = sphi 0, %s145
      %s167 = sphi 0, %s169
      %s170 = sphi 0, %s167
      %s171 = sphi 0, %s170
      %s187 = sphi 0, %s171
    $region4: #{tpu_custom_call.1} parent=1 // loop_header_branch
      %20 = sbr.rel (%p18) target = $region8
    $region5: #{tpu_custom_call.1} parent=1 // loop_body
      %s22 = ssub.s32 %s17, 1
      %s23 = ssub.s32 %s17, 2
      %s30 = sadd.s32 1, %s25
      %p31 = scmp.ge.s32.totalorder %s30, 2
      %s32 = scalar_select %p31, 0, %s30
      %s33 = sadd.s32 1, %s24
      %s34 = scalar_select %p31, %s33, %s24
      %p35 = scmp.ge.s32.totalorder %s34, 2
      %s36 = scalar_select %p35, 0, %s34
      %s38 = sadd.s32 %s37, 1
      %p41 = scmp.eq.s32.totalorder %s17, 3
      %p42 = scmp.ne.s32.totalorder %s37, %s39
      %p43 = scmp.eq.s32.totalorder %s17, 0
      %p44 = por %p42, %p43
      %p45 = scmp.ne.s32.totalorder %s37, %s39
      %p46 = scmp.eq.s32.totalorder %s22, 3
      %p47 = por %p45, %p46
      %p48 = scmp.ne.s32.totalorder %s39, %s40
      %p49 = scmp.eq.s32.totalorder %s22, 0
      %p50 = por %p48, %p49
      %p51 = scmp.ne.s32.totalorder %s39, %s40
      %p52 = scmp.eq.s32.totalorder %s23, 3
      %p53 = por %p51, %p52
      %p55 = scmp.ne.s32.totalorder %s40, %s54
      %p56 = scmp.eq.s32.totalorder %s23, 0
      %p57 = por %p55, %p56
      %s59 = sadd.s32 %s58, 1
      %p62 = scmp.eq.s32.totalorder %s17, 3
      %p63 = scmp.ne.s32.totalorder %s58, %s60
      %p64 = scmp.eq.s32.totalorder %s17, 0
      %p65 = por %p63, %p64
      %p66 = scmp.ne.s32.totalorder %s58, %s60
      %p67 = scmp.eq.s32.totalorder %s22, 3
      %p68 = por %p66, %p67
      %p69 = scmp.ne.s32.totalorder %s60, %s61
      %p70 = scmp.eq.s32.totalorder %s22, 0
      %p71 = por %p69, %p70
      %p72 = scmp.ne.s32.totalorder %s60, %s61
      %p73 = scmp.eq.s32.totalorder %s23, 3
      %p74 = por %p72, %p73
      %p76 = scmp.ne.s32.totalorder %s61, %s75
      %p77 = scmp.eq.s32.totalorder %s23, 0
      %p78 = por %p76, %p77
      %s80 = sadd.s32 %s79, 1
      %p83 = scmp.eq.s32.totalorder %s17, 3
      %p84 = scmp.ne.s32.totalorder %s79, %s81
      %p85 = scmp.eq.s32.totalorder %s17, 0
      %p86 = por %p84, %p85
      %p87 = scmp.ne.s32.totalorder %s79, %s81
      %p88 = scmp.eq.s32.totalorder %s22, 3
      %p89 = por %p87, %p88
      %p90 = scmp.ne.s32.totalorder %s81, %s82
      %p91 = scmp.eq.s32.totalorder %s22, 0
      %p92 = por %p90, %p91
      %p93 = scmp.ne.s32.totalorder %s81, %s82
      %p94 = scmp.eq.s32.totalorder %s23, 3
      %p95 = por %p93, %p94
      %p97 = scmp.ne.s32.totalorder %s82, %s96
      %p98 = scmp.eq.s32.totalorder %s23, 0
      %p99 = por %p97, %p98
      %s101 = sadd.s32 %s100, 1
      %p104 = scmp.eq.s32.totalorder %s17, 3
      %p105 = scmp.ne.s32.totalorder %s100, %s102
      %p106 = scmp.eq.s32.totalorder %s17, 0
      %p107 = por %p105, %p106
      %p108 = scmp.ne.s32.totalorder %s100, %s102
      %p109 = scmp.eq.s32.totalorder %s22, 3
      %p110 = por %p108, %p109
      %p111 = scmp.ne.s32.totalorder %s102, %s103
      %p112 = scmp.eq.s32.totalorder %s22, 0
      %p113 = por %p111, %p112
      %p114 = scmp.ne.s32.totalorder %s102, %s103
      %p115 = scmp.eq.s32.totalorder %s23, 3
      %p116 = por %p114, %p115
      %p118 = scmp.ne.s32.totalorder %s103, %s117
      %p119 = scmp.eq.s32.totalorder %s23, 0
      %p120 = por %p118, %p119
      %s122 = sadd.s32 %s121, 1
      %p125 = scmp.eq.s32.totalorder %s17, 3
      %p126 = scmp.ne.s32.totalorder %s121, %s123
      %p127 = scmp.eq.s32.totalorder %s17, 0
      %p128 = por %p126, %p127
      %p129 = scmp.ne.s32.totalorder %s121, %s123
      %p130 = scmp.eq.s32.totalorder %s22, 3
      %p131 = por %p129, %p130
      %p132 = scmp.ne.s32.totalorder %s123, %s124
      %p133 = scmp.eq.s32.totalorder %s22, 0
      %p134 = por %p132, %p133
      %p135 = scmp.ne.s32.totalorder %s123, %s124
      %p136 = scmp.eq.s32.totalorder %s23, 3
      %p137 = por %p135, %p136
      %p139 = scmp.ne.s32.totalorder %s124, %s138
      %p140 = scmp.eq.s32.totalorder %s23, 0
      %p141 = por %p139, %p140
      %s143 = sadd.s32 %s142, 1
      %p146 = scmp.eq.s32.totalorder %s17, 3
      %p147 = scmp.ne.s32.totalorder %s142, %s144
      %p148 = scmp.eq.s32.totalorder %s17, 0
      %p149 = por %p147, %p148
      %p150 = scmp.ne.s32.totalorder %s142, %s144
      %p151 = scmp.eq.s32.totalorder %s22, 3
      %p152 = por %p150, %p151
      %p153 = scmp.ne.s32.totalorder %s144, %s145
      %p154 = scmp.eq.s32.totalorder %s22, 0
      %p155 = por %p153, %p154
      %p156 = scmp.ne.s32.totalorder %s144, %s145
      %p157 = scmp.eq.s32.totalorder %s23, 3
      %p158 = por %p156, %p157
      %p160 = scmp.ne.s32.totalorder %s145, %s159
      %p161 = scmp.eq.s32.totalorder %s23, 0
      %p162 = por %p160, %p161
      %s163 = ssub.s32 %s24, %s36
      %s164 = ssub.s32 %s25, %s32
      %s165 = sor.u32 %s163, %s164
      %p166 = scmp.eq.s32.totalorder %s165, 0
      %s168 = sadd.s32 %s167, 1
      %s169 = scalar_select %p166, %s167, %s168
      %p172 = pneg %p166
      %p173 = scmp.eq.s32.totalorder %s17, 3
      %p174 = por %p172, %p173
      %p175 = scmp.ne.s32.totalorder %s167, %s170
      %p176 = scmp.eq.s32.totalorder %s17, 0
      %p177 = por %p175, %p176
      %p178 = scmp.ne.s32.totalorder %s167, %s170
      %p179 = scmp.eq.s32.totalorder %s22, 3
      %p180 = por %p178, %p179
      %p181 = scmp.ne.s32.totalorder %s170, %s171
      %p182 = scmp.eq.s32.totalorder %s22, 0
      %p183 = por %p181, %p182
      %p184 = scmp.ne.s32.totalorder %s170, %s171
      %p185 = scmp.eq.s32.totalorder %s23, 3
      %p186 = por %p184, %p185
      %p188 = scmp.ne.s32.totalorder %s171, %s187
      %p189 = scmp.eq.s32.totalorder %s23, 0
      %p190 = por %p188, %p189
      %p191 = scmp.le.s32.totalorder 1, %s17
      %p192 = scmp.lt.s32.totalorder %s17, 5
      %p193 = pnand %p191, %p192
      %p194 = pneg %p193
      // Predicated region
      $region9: #{tpu_custom_call.1} parent=5 // pred_check
        _
      $region10: #{tpu_custom_call.1} parent=5 // pred_check_branch
        %196 = sbr.rel (%p193) target = $region12
      $region11: #{tpu_custom_call.1} parent=5 // pred_region
        %s197 = ssub.s32 %s17, 1
        // Predicated region
        $region13: #{tpu_custom_call.1} parent=11 // pred_check
          %p198 = pneg %p50
        $region14: #{tpu_custom_call.1} parent=11 // pred_check_branch
          %200 = sbr.rel (%p198) target = $region16
        $region15: #{tpu_custom_call.1} parent=11 // pred_region
          _
        $region16: #{tpu_custom_call.1} parent=11 // pred_fallthru
          _
        // Predicated region
        $region17: #{tpu_custom_call.1} parent=11 // pred_check
          %p201 = pneg %p71
        $region18: #{tpu_custom_call.1} parent=11 // pred_check_branch
          %203 = sbr.rel (%p201) target = $region20
        $region19: #{tpu_custom_call.1} parent=11 // pred_region
          _
        $region20: #{tpu_custom_call.1} parent=11 // pred_fallthru
          _
        // Predicated region
        $region21: #{tpu_custom_call.1} parent=11 // pred_check
          %p204 = pneg %p92
        $region22: #{tpu_custom_call.1} parent=11 // pred_check_branch
          %206 = sbr.rel (%p204) target = $region24
        $region23: #{tpu_custom_call.1} parent=11 // pred_region
          %s208 = ssub.s32 1536, 1536
          %209 = vsyncadd [#allocation5], %s208
          %s210 = sshll.u32 [#allocation4], 4
          %s211 = int_to_ptr.vmem [resolvable:$true] %s210
          %216 = dma.hbm_to_vmem [thread:$0]  %s3, 1536, %s211, [#allocation5], 128, 128, 8
        $region24: #{tpu_custom_call.1} parent=11 // pred_fallthru
          _
        // Predicated region
        $region25: #{tpu_custom_call.1} parent=11 // pred_check
          %p217 = pneg %p113
        $region26: #{tpu_custom_call.1} parent=11 // pred_check_branch
          %219 = sbr.rel (%p217) target = $region28
        $region27: #{tpu_custom_call.1} parent=11 // pred_region
          _
        $region28: #{tpu_custom_call.1} parent=11 // pred_fallthru
          _
        // Predicated region
        $region29: #{tpu_custom_call.1} parent=11 // pred_check
          %p220 = pneg %p134
        $region30: #{tpu_custom_call.1} parent=11 // pred_check_branch
          %222 = sbr.rel (%p220) target = $region32
        $region31: #{tpu_custom_call.1} parent=11 // pred_region
          _
        $region32: #{tpu_custom_call.1} parent=11 // pred_fallthru
          _
        // Predicated region
        $region33: #{tpu_custom_call.1} parent=11 // pred_check
          %p223 = pneg %p155
        $region34: #{tpu_custom_call.1} parent=11 // pred_check_branch
          %225 = sbr.rel (%p223) target = $region36
        $region35: #{tpu_custom_call.1} parent=11 // pred_region
          _
        $region36: #{tpu_custom_call.1} parent=11 // pred_fallthru
          _
      $region12: #{tpu_custom_call.1} parent=5 // pred_fallthru
        _
      %p226 = scmp.lt.s32.totalorder %s17, 4
      // Predicated region
      $region37: #{tpu_custom_call.1} parent=5 // pred_check
        %p227 = pneg %p226
      $region38: #{tpu_custom_call.1} parent=5 // pred_check_branch
        %229 = sbr.rel (%p227) target = $region40
      $region39: #{tpu_custom_call.1} parent=5 // pred_region
        _
      $region40: #{tpu_custom_call.1} parent=5 // pred_fallthru
        _
      %p230 = scmp.le.s32.totalorder 1, %s17
      %p231 = scmp.lt.s32.totalorder %s17, 5
      %p232 = pnand %p230, %p231
      %p233 = pneg %p232
      // Predicated region
      $region41: #{tpu_custom_call.1} parent=5 // pred_check
        _
      $region42: #{tpu_custom_call.1} parent=5 // pred_check_branch
        %235 = sbr.rel (%p232) target = $region44
      $region43: #{tpu_custom_call.1} parent=5 // pred_region
        %s236 = ssub.s32 %s17, 1
        // Predicated region
        $region45: #{tpu_custom_call.1} parent=43 // pred_check
          %p237 = pneg %p92
        $region46: #{tpu_custom_call.1} parent=43 // pred_check_branch
          %239 = sbr.rel (%p237) target = $region48
        $region47: #{tpu_custom_call.1} parent=43 // pred_region
          %240 = dma.done [#allocation5], 1536
        $region48: #{tpu_custom_call.1} parent=43 // pred_fallthru
          _
        %p241 = pneg %p50
        %p242 = pneg %p47
        %p243 = pneg %p71
        %p244 = pneg %p68
        %p245 = pneg %p92
        %p246 = pneg %p89
        %p247 = pneg %p113
        %p248 = pneg %p110
        %p249 = pneg %p134
        %p250 = pneg %p131
        %p251 = pneg %p155
        %p252 = pneg %p152
        %p253 = pneg %p183
        %p254 = pneg %p180
        %s255 = sand.u32 %s170, 1
        %s256 = scalar_lea.sflag [#allocation6], %s255
        %s257 = sand.u32 %s170, 1
        %s258 = smul.addr %s257, 64
        %s259 = scalar_lea.vmem [#allocation7], %s258
        %s260 = smul.u32 4, %s27
        %s261 = smul.u32 %s27, 512
        %s262 = sshra.s32 %s261, 7
        %s263 = sand.u32 %s261, 127
        %s264 = smul.u32 %s26, 10
        %s265 = sadd.s32 %s262, %s264
        %s266 = smul.addr %s265, 8
        %s267 = scalar_lea.vmem %s0, %s266
        %p269 = scmp.lt.u32.totalorder 48, 8
        %p270 = pneg %p269
        // Predicated region
        $region49: #{tpu_custom_call.1} parent=43 // pred_check
          _
        $region50: #{tpu_custom_call.1} parent=43 // pred_check_branch
          %272 = sbr.rel (%p269) target = $region52
        $region51: #{tpu_custom_call.1} parent=43 // pred_region
          %s287 = sand.u32 48, 7
          %p288 = scmp.eq.s32.totalorder %s287, 0
          // Predicated region
          $region64: #{tpu_custom_call.1} parent=51 // pred_check
            %p289 = pneg %p288
          $region65: #{tpu_custom_call.1} parent=51 // pred_check_branch
            %291 = sbr.rel (%p289) target = $region67
          $region66: #{tpu_custom_call.1} parent=51 // pred_region
            loop: start=0, step=1, limit=1
            $region68: #{tpu_custom_call.1} parent=66 // loop_pre_header
              _
            $region69: #{tpu_custom_call.1} parent=66 // loop_header
              %s293 = sphi 0, %s297
              %p294 = scmp.ge.s32.totalorder %s293, 1
              %s298 = sphi %s267, %s267
              %s299 = sphi [#allocation2], [#allocation2]
            $region70: #{tpu_custom_call.1} parent=66 // loop_header_branch
              %296 = sbr.rel (%p294) target = $region74
            $region71: #{tpu_custom_call.1} parent=66 // loop_body
              %v300 = vld [vmem:[%s298] sm:$0xff]
              %301 = vst [vmem:[%s299] sm:$0xff] %v300
              %v302 = vld [vmem:[%s298 + $0x8] sm:$0xff]
              %303 = vst [vmem:[%s299 + $0x8] sm:$0xff] %v302
              %v304 = vld [vmem:[%s298 + $0x10] sm:$0xff]
              %305 = vst [vmem:[%s299 + $0x10] sm:$0xff] %v304
              %v306 = vld [vmem:[%s298 + $0x18] sm:$0xff]
              %307 = vst [vmem:[%s299 + $0x18] sm:$0xff] %v306
              %v308 = vld [vmem:[%s298 + $0x20] sm:$0xff]
              %309 = vst [vmem:[%s299 + $0x20] sm:$0xff] %v308
              %v310 = vld [vmem:[%s298 + $0x28] sm:$0xff]
              %311 = vst [vmem:[%s299 + $0x28] sm:$0xff] %v310
            $region72: #{tpu_custom_call.1} parent=66 // loop_footer
              %s297 = sadd.s32 1, %s293
            $region73: #{tpu_custom_call.1} parent=66 // loop_footer_branch
              %292 = sbr.rel target = $region69
            $region74: #{tpu_custom_call.1} parent=66 // loop_exit
              _
          $region67: #{tpu_custom_call.1} parent=51 // pred_fallthru
            _
          %p312 = pneg %p288
          // Predicated region
          $region75: #{tpu_custom_call.1} parent=51 // pred_check
            _
          $region76: #{tpu_custom_call.1} parent=51 // pred_check_branch
            %314 = sbr.rel (%p288) target = $region78
          $region77: #{tpu_custom_call.1} parent=51 // pred_region
            %s315 = sand.u32 48, 7
          $region78: #{tpu_custom_call.1} parent=51 // pred_fallthru
            _
        $region52: #{tpu_custom_call.1} parent=43 // pred_fallthru
          _
        // Predicated region
        $region53: #{tpu_custom_call.1} parent=43 // pred_check
          %p273 = pneg %p269
        $region54: #{tpu_custom_call.1} parent=43 // pred_check_branch
          %275 = sbr.rel (%p273) target = $region56
        $region55: #{tpu_custom_call.1} parent=43 // pred_region
          %s276 = sshllo.u32 0, 48
          loop: start=0, step=1, limit=1
          $region57: #{tpu_custom_call.1} parent=55 // loop_pre_header
            _
          $region58: #{tpu_custom_call.1} parent=55 // loop_header
            %s278 = sphi 0, %s282
            %p279 = scmp.ge.s32.totalorder %s278, 1
            %s283 = sphi %s267, %s267
            %s284 = sphi [#allocation2], [#allocation2]
          $region59: #{tpu_custom_call.1} parent=55 // loop_header_branch
            %281 = sbr.rel (%p279) target = $region63
          $region60: #{tpu_custom_call.1} parent=55 // loop_body
            %v285 = vld [vmem:[%s283] sm:%s276]
            %286 = vst [vmem:[%s284] sm:%s276] %v285
          $region61: #{tpu_custom_call.1} parent=55 // loop_footer
            %s282 = sadd.s32 1, %s278
          $region62: #{tpu_custom_call.1} parent=55 // loop_footer_branch
            %277 = sbr.rel target = $region58
          $region63: #{tpu_custom_call.1} parent=55 // loop_exit
            _
        $region56: #{tpu_custom_call.1} parent=43 // pred_fallthru
          _
        // Predicated region
        $region79: #{tpu_custom_call.1} parent=43 // pred_check
          _
        $region80: #{tpu_custom_call.1} parent=43 // pred_check_branch
          %318 = sbr.rel (0) target = $region82
        $region81: #{tpu_custom_call.1} parent=43 // pred_region
          %319 = vsyncadd [#allocation3], 768
        $region82: #{tpu_custom_call.1} parent=43 // pred_fallthru
          _
        %s320 = smul.u32 8, 1
        %s321 = smul.u32 %s320, 6
        %s322 = sshll.u32 %s321, 4
        %323 = dma.done [#allocation3], %s322
        %v324 = vlaneseq
        %v325 = vand.u32 %v324, 127
        %v326 = vadd.s32 %v325, 128
        %v327 = vadd.s32 %v325, 256
        %v328 = vadd.s32 %v325, 384
        %v329 = vadd.s32 %v325, 512
        %v330 = vadd.s32 %v325, 640
        %s331 = ssub.s32 %s261, 128
        %v332 = vstv %s331
        %v333 = vadd.s32 %v325, %v332
        %v334 = vadd.s32 %v326, %v332
        %v335 = vadd.s32 %v327, %v332
        %v336 = vadd.s32 %v328, %v332
        %v337 = vadd.s32 %v329, %v332
        %v338 = vadd.s32 %v330, %v332
        %vm339 = vcmp.ge.s32.totalorder %v333, 0
        %vm340 = vcmp.ge.s32.totalorder %v334, 0
        %vm341 = vcmp.ge.s32.totalorder %v335, 0
        %vm342 = vcmp.ge.s32.totalorder %v336, 0
        %vm343 = vcmp.ge.s32.totalorder %v337, 0
        %vm344 = vcmp.ge.s32.totalorder %v338, 0
        %vm345 = vcmp.lt.s32.totalorder %v333, 640
        %vm346 = vcmp.lt.s32.totalorder %v334, 640
        %vm347 = vcmp.lt.s32.totalorder %v335, 640
        %vm348 = vcmp.lt.s32.totalorder %v336, 640
        %vm349 = vcmp.lt.s32.totalorder %v337, 640
        %vm350 = vcmp.lt.s32.totalorder %v338, 640
        %vm351 = vmand %vm339, %vm345
        %vm352 = vmand %vm340, %vm346
        %vm353 = vmand %vm341, %vm347
        %vm354 = vmand %vm342, %vm348
        %vm355 = vmand %vm343, %vm349
        %vm356 = vmand %vm344, %vm350
        %v357 = vsel %vm351, 1, 0
        %v358 = vsel %vm352, 1, 0
        %v359 = vsel %vm353, 1, 0
        %v360 = vsel %vm354, 1, 0
        %v361 = vsel %vm355, 1, 0
        %v362 = vsel %vm356, 1, 0
        %vm363 = vcmp.eq.s32.totalorder %v357, 1
        %vm364 = vcmp.eq.s32.totalorder %v358, 1
        %vm365 = vcmp.eq.s32.totalorder %v359, 1
        %vm366 = vcmp.eq.s32.totalorder %v360, 1
        %vm367 = vcmp.eq.s32.totalorder %v361, 1
        %vm368 = vcmp.eq.s32.totalorder %v362, 1
        %v369 = vld [vmem:[#allocation2] sm:$0xff]
        %v370 = vld [vmem:[#allocation2 + $0x8] sm:$0xff]
        %v371 = vld [vmem:[#allocation2 + $0x10] sm:$0xff]
        %v372 = vld [vmem:[#allocation2 + $0x18] sm:$0xff]
        %v373 = vld [vmem:[#allocation2 + $0x20] sm:$0xff]
        %v374 = vld [vmem:[#allocation2 + $0x28] sm:$0xff]
        %v375 = vld [vmem:[%s1] sm:$0xff]
        %v376 = vld [vmem:[%s1 + $0x8] sm:$0xff]
        %v377 = vld [vmem:[%s2] sm:$0xff]
        %v378 = vld [vmem:[%s2 + $0x8] sm:$0xff]
        %380 = vset.pattern.permute.xlu0 0
        %381 = vperm.xlu0 %380, %v377
        %v382 = vpop.permute.xlu0 %381
        %385 = vset.pattern.permute.xlu0 0
        %386 = vperm.xlu0 %385, %v378
        %v387 = vpop.permute.xlu0 %386
        %vm389 = vcmask 64512
        %v391 = vsel %vm389, %v375, 0
        %v394 = vsel %vm389, %v376, 0
        %396 = vmatprep.subr.mxu0 %v370
        %397 = vmatpush1.msra.mxu0 %v369
        %398 = vmatprep.subr.mxu0 0.0
        %399 = vmatpush1.msra.mxu0 0.0
        %400 = vmatprep.subr.mxu0 0.0
        %401 = vmatpush1.msra.mxu0 0.0
        %402 = vmatprep.subr.mxu0 0.0
        %403 = vmatpush1.msra.mxu0 0.0
        %404 = vmatprep.subr.mxu0 0.0
        %405 = vmatpush1.msra.mxu0 0.0
        %406 = vmatprep.subr.mxu0 0.0
        %407 = vmatpush1.msra.mxu0 0.0
        %408 = vmatprep.subr.mxu0 0.0
        %409 = vmatpush1.msra.mxu0 0.0
        %410 = vmatprep.subr.mxu0 0.0
        %411 = vmatpush1.msra.mxu0 0.0
        %412 = vmatprep.subr.mxu0 0.0
        %413 = vmatpush1.msra.mxu0 0.0
        %414 = vmatprep.subr.mxu0 0.0
        %415 = vmatpush1.msra.mxu0 0.0
        %416 = vmatprep.subr.mxu0 0.0
        %417 = vmatpush1.msra.mxu0 0.0
        %418 = vmatprep.subr.mxu0 0.0
        %419 = vmatpush1.msra.mxu0 0.0
        %420 = vmatprep.subr.mxu0 0.0
        %421 = vmatpush1.msra.mxu0 0.0
        %422 = vmatprep.subr.mxu0 0.0
        %423 = vmatpush1.msra.mxu0 0.0
        %424 = vmatprep.subr.mxu0 0.0
        %425 = vmatpush1.msra.mxu0 0.0
        %426 = vmatprep.subr.mxu0 0.0
        %427 = vmatpush1.msra.mxu0 0.0
        %428 = vmatprep.subr.mxu0 0.0
        %429 = vmatpush1.msra.mxu0 0.0
        %430 = vmatprep.subr.mxu0 0.0
        %431 = vmatpush1.msra.mxu0 0.0
        %432 = vmatprep.subr.mxu0 0.0
        %433 = vmatpush1.msra.mxu0 0.0
        %434 = vmatprep.subr.mxu0 0.0
        %435 = vmatpush1.msra.mxu0 0.0
        %436 = vmatprep.subr.mxu0 0.0
        %437 = vmatpush1.msra.mxu0 0.0
        %438 = vmatprep.subr.mxu0 0.0
        %439 = vmatpush1.msra.mxu0 0.0
        %440 = vmatprep.subr.mxu0 0.0
        %441 = vmatpush1.msra.mxu0 0.0
        %442 = vmatprep.subr.mxu0 0.0
        %443 = vmatpush1.msra.mxu0 0.0
        %444 = vmatprep.subr.mxu0 0.0
        %445 = vmatpush1.msra.mxu0 0.0
        %446 = vmatprep.subr.mxu0 0.0
        %447 = vmatpush1.msra.mxu0 0.0
        %448 = vmatprep.subr.mxu0 0.0
        %449 = vmatpush1.msra.mxu0 0.0
        %450 = vmatprep.subr.mxu0 0.0
        %451 = vmatpush1.msra.mxu0 0.0
        %452 = vmatprep.subr.mxu0 0.0
        %453 = vmatpush1.msra.mxu0 0.0
        %454 = vmatprep.subr.mxu0 0.0
        %455 = vmatpush1.msra.mxu0 0.0
        %456 = vmatprep.subr.mxu0 0.0
        %457 = vmatpush1.msra.mxu0 0.0
        %458 = vmatprep.subr.mxu0 0.0
        %459 = vmatpush1.msra.mxu0 0.0
        %460 = vmatprep.mubr.f32.mxu0 0.0
        %461 = vmatmul.mubr.f32.gmra.mrb[0].mxu0 %v391
        %v462 = vpop.f32.mrb[0].mxu0
        %v463 = vadd.f32 %v382, %v462
        %v464 = vpop.f32.mrb[0].mxu0
        %v465 = vadd.f32 %v382, %v464
        %466 = vmatprep.mubr.f32.mxu0 0.0
        %467 = vmatmul.mubr.f32.gmra.mrb[0].mxu0 %v394
        %v468 = vpop.f32.mrb[0].mxu0
        %v469 = vadd.f32 %v387, %v468
        %v470 = vpop.f32.mrb[0].mxu0
        %v471 = vadd.f32 %v387, %v470
        %472 = vdwg.mxu0
        %473 = vmatprep.subr.mxu0 %v372
        %474 = vmatpush1.msra.mxu0 %v371
        %475 = vmatprep.subr.mxu0 0.0
        %476 = vmatpush1.msra.mxu0 0.0
        %477 = vmatprep.subr.mxu0 0.0
        %478 = vmatpush1.msra.mxu0 0.0
        %479 = vmatprep.subr.mxu0 0.0
        %480 = vmatpush1.msra.mxu0 0.0
        %481 = vmatprep.subr.mxu0 0.0
        %482 = vmatpush1.msra.mxu0 0.0
        %483 = vmatprep.subr.mxu0 0.0
        %484 = vmatpush1.msra.mxu0 0.0
        %485 = vmatprep.subr.mxu0 0.0
        %486 = vmatpush1.msra.mxu0 0.0
        %487 = vmatprep.subr.mxu0 0.0
        %488 = vmatpush1.msra.mxu0 0.0
        %489 = vmatprep.subr.mxu0 0.0
        %490 = vmatpush1.msra.mxu0 0.0
        %491 = vmatprep.subr.mxu0 0.0
        %492 = vmatpush1.msra.mxu0 0.0
        %493 = vmatprep.subr.mxu0 0.0
        %494 = vmatpush1.msra.mxu0 0.0
        %495 = vmatprep.subr.mxu0 0.0
        %496 = vmatpush1.msra.mxu0 0.0
        %497 = vmatprep.subr.mxu0 0.0
        %498 = vmatpush1.msra.mxu0 0.0
        %499 = vmatprep.subr.mxu0 0.0
        %500 = vmatpush1.msra.mxu0 0.0
        %501 = vmatprep.subr.mxu0 0.0
        %502 = vmatpush1.msra.mxu0 0.0
        %503 = vmatprep.subr.mxu0 0.0
        %504 = vmatpush1.msra.mxu0 0.0
        %505 = vmatprep.subr.mxu0 0.0
        %506 = vmatpush1.msra.mxu0 0.0
        %507 = vmatprep.subr.mxu0 0.0
        %508 = vmatpush1.msra.mxu0 0.0
        %509 = vmatprep.subr.mxu0 0.0
        %510 = vmatpush1.msra.mxu0 0.0
        %511 = vmatprep.subr.mxu0 0.0
        %512 = vmatpush1.msra.mxu0 0.0
        %513 = vmatprep.subr.mxu0 0.0
        %514 = vmatpush1.msra.mxu0 0.0
        %515 = vmatprep.subr.mxu0 0.0
        %516 = vmatpush1.msra.mxu0 0.0
        %517 = vmatprep.subr.mxu0 0.0
        %518 = vmatpush1.msra.mxu0 0.0
        %519 = vmatprep.subr.mxu0 0.0
        %520 = vmatpush1.msra.mxu0 0.0
        %521 = vmatprep.subr.mxu0 0.0
        %522 = vmatpush1.msra.mxu0 0.0
        %523 = vmatprep.subr.mxu0 0.0
        %524 = vmatpush1.msra.mxu0 0.0
        %525 = vmatprep.subr.mxu0 0.0
        %526 = vmatpush1.msra.mxu0 0.0
        %527 = vmatprep.subr.mxu0 0.0
        %528 = vmatpush1.msra.mxu0 0.0
        %529 = vmatprep.subr.mxu0 0.0
        %530 = vmatpush1.msra.mxu0 0.0
        %531 = vmatprep.subr.mxu0 0.0
        %532 = vmatpush1.msra.mxu0 0.0
        %533 = vmatprep.subr.mxu0 0.0
        %534 = vmatpush1.msra.mxu0 0.0
        %535 = vmatprep.subr.mxu0 0.0
        %536 = vmatpush1.msra.mxu0 0.0
        %537 = vmatprep.mubr.f32.mxu0 0.0
        %538 = vmatmul.mubr.f32.gmra.mrb[0].mxu0 %v391
        %v539 = vpop.f32.mrb[0].mxu0
        %v540 = vadd.f32 %v382, %v539
        %v541 = vpop.f32.mrb[0].mxu0
        %v542 = vadd.f32 %v382, %v541
        %543 = vmatprep.mubr.f32.mxu0 0.0
        %544 = vmatmul.mubr.f32.gmra.mrb[0].mxu0 %v394
        %v545 = vpop.f32.mrb[0].mxu0
        %v546 = vadd.f32 %v387, %v545
        %v547 = vpop.f32.mrb[0].mxu0
        %v548 = vadd.f32 %v387, %v547
        %549 = vdwg.mxu0
        %550 = vmatprep.subr.mxu0 %v374
        %551 = vmatpush1.msra.mxu0 %v373
        %552 = vmatprep.subr.mxu0 0.0
        %553 = vmatpush1.msra.mxu0 0.0
        %554 = vmatprep.subr.mxu0 0.0
        %555 = vmatpush1.msra.mxu0 0.0
        %556 = vmatprep.subr.mxu0 0.0
        %557 = vmatpush1.msra.mxu0 0.0
        %558 = vmatprep.subr.mxu0 0.0
        %559 = vmatpush1.msra.mxu0 0.0
        %560 = vmatprep.subr.mxu0 0.0
        %561 = vmatpush1.msra.mxu0 0.0
        %562 = vmatprep.subr.mxu0 0.0
        %563 = vmatpush1.msra.mxu0 0.0
        %564 = vmatprep.subr.mxu0 0.0
        %565 = vmatpush1.msra.mxu0 0.0
        %566 = vmatprep.subr.mxu0 0.0
        %567 = vmatpush1.msra.mxu0 0.0
        %568 = vmatprep.subr.mxu0 0.0
        %569 = vmatpush1.msra.mxu0 0.0
        %570 = vmatprep.subr.mxu0 0.0
        %571 = vmatpush1.msra.mxu0 0.0
        %572 = vmatprep.subr.mxu0 0.0
        %573 = vmatpush1.msra.mxu0 0.0
        %574 = vmatprep.subr.mxu0 0.0
        %575 = vmatpush1.msra.mxu0 0.0
        %576 = vmatprep.subr.mxu0 0.0
        %577 = vmatpush1.msra.mxu0 0.0
        %578 = vmatprep.subr.mxu0 0.0
        %579 = vmatpush1.msra.mxu0 0.0
        %580 = vmatprep.subr.mxu0 0.0
        %581 = vmatpush1.msra.mxu0 0.0
        %582 = vmatprep.subr.mxu0 0.0
        %583 = vmatpush1.msra.mxu0 0.0
        %584 = vmatprep.subr.mxu0 0.0
        %585 = vmatpush1.msra.mxu0 0.0
        %586 = vmatprep.subr.mxu0 0.0
        %587 = vmatpush1.msra.mxu0 0.0
        %588 = vmatprep.subr.mxu0 0.0
        %589 = vmatpush1.msra.mxu0 0.0
        %590 = vmatprep.subr.mxu0 0.0
        %591 = vmatpush1.msra.mxu0 0.0
        %592 = vmatprep.subr.mxu0 0.0
        %593 = vmatpush1.msra.mxu0 0.0
        %594 = vmatprep.subr.mxu0 0.0
        %595 = vmatpush1.msra.mxu0 0.0
        %596 = vmatprep.subr.mxu0 0.0
        %597 = vmatpush1.msra.mxu0 0.0
        %598 = vmatprep.subr.mxu0 0.0
        %599 = vmatpush1.msra.mxu0 0.0
        %600 = vmatprep.subr.mxu0 0.0
        %601 = vmatpush1.msra.mxu0 0.0
        %602 = vmatprep.subr.mxu0 0.0
        %603 = vmatpush1.msra.mxu0 0.0
        %604 = vmatprep.subr.mxu0 0.0
        %605 = vmatpush1.msra.mxu0 0.0
        %606 = vmatprep.subr.mxu0 0.0
        %607 = vmatpush1.msra.mxu0 0.0
        %608 = vmatprep.subr.mxu0 0.0
        %609 = vmatpush1.msra.mxu0 0.0
        %610 = vmatprep.subr.mxu0 0.0
        %611 = vmatpush1.msra.mxu0 0.0
        %612 = vmatprep.subr.mxu0 0.0
        %613 = vmatpush1.msra.mxu0 0.0
        %614 = vmatprep.mubr.f32.mxu0 0.0
        %615 = vmatmul.mubr.f32.gmra.mrb[0].mxu0 %v391
        %v616 = vpop.f32.mrb[0].mxu0
        %v617 = vadd.f32 %v382, %v616
        %v618 = vpop.f32.mrb[0].mxu0
        %v619 = vadd.f32 %v382, %v618
        %620 = vmatprep.mubr.f32.mxu0 0.0
        %621 = vmatmul.mubr.f32.gmra.mrb[0].mxu0 %v394
        %v622 = vpop.f32.mrb[0].mxu0
        %v623 = vadd.f32 %v387, %v622
        %v624 = vpop.f32.mrb[0].mxu0
        %v625 = vadd.f32 %v387, %v624
        %626 = vdwg.mxu0
        %v627 = vsel %vm363, %v463, 0.0
        %v628 = vsel %vm364, %v465, 0.0
        %v629 = vsel %vm365, %v540, 0.0
        %v630 = vsel %vm366, %v542, 0.0
        %v631 = vsel %vm367, %v617, 0.0
        %v632 = vsel %vm368, %v619, 0.0
        %v633 = vsel %vm363, %v469, 0.0
        %v634 = vsel %vm364, %v471, 0.0
        %v635 = vsel %vm365, %v546, 0.0
        %v636 = vsel %vm366, %v548, 0.0
        %v637 = vsel %vm367, %v623, 0.0
        %v638 = vsel %vm368, %v625, 0.0
        %639 = vrot.lane.b32.xlu0 %v627, 1
        %v640 = vpop.permute.xlu0 %639
        %641 = vrot.lane.b32.xlu0 %v633, 1
        %v642 = vpop.permute.xlu0 %641
        %643 = vrot.lane.b32.xlu0 %v628, 1
        %v644 = vpop.permute.xlu0 %643
        %645 = vrot.lane.b32.xlu0 %v634, 1
        %v646 = vpop.permute.xlu0 %645
        %647 = vrot.lane.b32.xlu0 %v629, 1
        %v648 = vpop.permute.xlu0 %647
        %649 = vrot.lane.b32.xlu0 %v635, 1
        %v650 = vpop.permute.xlu0 %649
        %651 = vrot.lane.b32.xlu0 %v630, 1
        %v652 = vpop.permute.xlu0 %651
        %653 = vrot.lane.b32.xlu0 %v636, 1
        %v654 = vpop.permute.xlu0 %653
        %655 = vrot.lane.b32.xlu0 %v631, 1
        %v656 = vpop.permute.xlu0 %655
        %657 = vrot.lane.b32.xlu0 %v637, 1
        %v658 = vpop.permute.xlu0 %657
        %659 = vrot.lane.b32.xlu0 %v632, 1
        %v660 = vpop.permute.xlu0 %659
        %661 = vrot.lane.b32.xlu0 %v638, 1
        %v662 = vpop.permute.xlu0 %661
        %vm663 = vcmp.lt.s32.totalorder %v325, 1
        %v664 = vsel %vm663, %v656, %v660
        %v665 = vsel %vm663, %v658, %v662
        %v666 = vsel %vm663, %v652, %v656
        %v667 = vsel %vm663, %v654, %v658
        %v668 = vsel %vm663, %v648, %v652
        %v669 = vsel %vm663, %v650, %v654
        %v670 = vsel %vm663, %v644, %v648
        %v671 = vsel %vm663, %v646, %v650
        %v672 = vsel %vm663, %v640, %v644
        %v673 = vsel %vm663, %v642, %v646
        %v674 = vsel %vm663, %v660, %v640
        %v675 = vsel %vm663, %v662, %v642
        %676 = vrot.lane.b32.xlu0 %v627, 127
        %v677 = vpop.permute.xlu0 %676
        %678 = vrot.lane.b32.xlu0 %v633, 127
        %v679 = vpop.permute.xlu0 %678
        %680 = vrot.lane.b32.xlu0 %v628, 127
        %v681 = vpop.permute.xlu0 %680
        %682 = vrot.lane.b32.xlu0 %v634, 127
        %v683 = vpop.permute.xlu0 %682
        %684 = vrot.lane.b32.xlu0 %v629, 127
        %v685 = vpop.permute.xlu0 %684
        %686 = vrot.lane.b32.xlu0 %v635, 127
        %v687 = vpop.permute.xlu0 %686
        %688 = vrot.lane.b32.xlu0 %v630, 127
        %v689 = vpop.permute.xlu0 %688
        %690 = vrot.lane.b32.xlu0 %v636, 127
        %v691 = vpop.permute.xlu0 %690
        %692 = vrot.lane.b32.xlu0 %v631, 127
        %v693 = vpop.permute.xlu0 %692
        %694 = vrot.lane.b32.xlu0 %v637, 127
        %v695 = vpop.permute.xlu0 %694
        %696 = vrot.lane.b32.xlu0 %v632, 127
        %v697 = vpop.permute.xlu0 %696
        %698 = vrot.lane.b32.xlu0 %v638, 127
        %v699 = vpop.permute.xlu0 %698
        %vm700 = vcmp.lt.s32.totalorder %v325, 127
        %v701 = vsel %vm700, %v693, %v697
        %v702 = vsel %vm700, %v695, %v699
        %v703 = vsel %vm700, %v689, %v693
        %v704 = vsel %vm700, %v691, %v695
        %v705 = vsel %vm700, %v685, %v689
        %v706 = vsel %vm700, %v687, %v691
        %v707 = vsel %vm700, %v681, %v685
        %v708 = vsel %vm700, %v683, %v687
        %v709 = vsel %vm700, %v677, %v681
        %v710 = vsel %vm700, %v679, %v683
        %v711 = vsel %vm700, %v697, %v677
        %v712 = vsel %vm700, %v699, %v679
        %v713 = vld [vmem:[#allocation4] sm:$0xff]
        %v714 = vld [vmem:[#allocation4 + $0x8] sm:$0xff]
        %v715 = vld [vmem:[#allocation4 + $0x10] sm:$0xff]
        %v716 = vld [vmem:[#allocation4 + $0x18] sm:$0xff]
        %v717 = vld [vmem:[%s4] sm:$0xff]
        %v718 = vld [vmem:[%s4 + $0x8] sm:$0xff]
        %v719 = vld [vmem:[%s4 + $0x10] sm:$0xff]
        %v720 = vld [vmem:[%s4 + $0x18] sm:$0xff]
        %722 = vset.pattern.permute.xlu0 0
        %723 = vperm.xlu0 %722, %v717
        %v724 = vpop.permute.xlu0 %723
        %727 = vset.pattern.permute.xlu0 0
        %728 = vperm.xlu0 %727, %v718
        %v729 = vpop.permute.xlu0 %728
        %732 = vset.pattern.permute.xlu0 0
        %733 = vperm.xlu0 %732, %v719
        %v734 = vpop.permute.xlu0 %733
        %737 = vset.pattern.permute.xlu0 0
        %738 = vperm.xlu0 %737, %v720
        %v739 = vpop.permute.xlu0 %738
        %vm741 = vcmask 392192
        %v743 = vsel %vm741, %v713, 0
        %v746 = vsel %vm741, %v714, 0
        %v749 = vsel %vm741, %v715, 0
        %v752 = vsel %vm741, %v716, 0
        %754 = vmatprep.subr.mxu0 %v672
        %755 = vmatpush1.msra.mxu0 %v674
        %756 = vmatprep.subr.mxu0 %v673
        %757 = vmatpush1.msra.mxu0 %v675
        %758 = vmatprep.subr.mxu0 %v628
        %759 = vmatpush1.msra.mxu0 %v627
        %760 = vmatprep.subr.mxu0 %v634
        %761 = vmatpush1.msra.mxu0 %v633
        %762 = vmatprep.subr.mxu0 %v707
        %763 = vmatpush1.msra.mxu0 %v709
        %764 = vmatprep.subr.mxu0 %v708
        %765 = vmatpush1.msra.mxu0 %v710
        %766 = vmatprep.subr.mxu0 0.0
        %767 = vmatpush1.msra.mxu0 0.0
        %768 = vmatprep.subr.mxu0 0.0
        %769 = vmatpush1.msra.mxu0 0.0
        %770 = vmatprep.subr.mxu0 0.0
        %771 = vmatpush1.msra.mxu0 0.0
        %772 = vmatprep.subr.mxu0 0.0
        %773 = vmatpush1.msra.mxu0 0.0
        %774 = vmatprep.subr.mxu0 0.0
        %775 = vmatpush1.msra.mxu0 0.0
        %776 = vmatprep.subr.mxu0 0.0
        %777 = vmatpush1.msra.mxu0 0.0
        %778 = vmatprep.subr.mxu0 0.0
        %779 = vmatpush1.msra.mxu0 0.0
        %780 = vmatprep.subr.mxu0 0.0
        %781 = vmatpush1.msra.mxu0 0.0
        %782 = vmatprep.subr.mxu0 0.0
        %783 = vmatpush1.msra.mxu0 0.0
        %784 = vmatprep.subr.mxu0 0.0
        %785 = vmatpush1.msra.mxu0 0.0
        %786 = vmatprep.subr.mxu0 0.0
        %787 = vmatpush1.msra.mxu0 0.0
        %788 = vmatprep.subr.mxu0 0.0
        %789 = vmatpush1.msra.mxu0 0.0
        %790 = vmatprep.subr.mxu0 0.0
        %791 = vmatpush1.msra.mxu0 0.0
        %792 = vmatprep.subr.mxu0 0.0
        %793 = vmatpush1.msra.mxu0 0.0
        %794 = vmatprep.subr.mxu0 0.0
        %795 = vmatpush1.msra.mxu0 0.0
        %796 = vmatprep.subr.mxu0 0.0
        %797 = vmatpush1.msra.mxu0 0.0
        %798 = vmatprep.subr.mxu0 0.0
        %799 = vmatpush1.msra.mxu0 0.0
        %800 = vmatprep.subr.mxu0 0.0
        %801 = vmatpush1.msra.mxu0 0.0
        %802 = vmatprep.subr.mxu0 0.0
        %803 = vmatpush1.msra.mxu0 0.0
        %804 = vmatprep.subr.mxu0 0.0
        %805 = vmatpush1.msra.mxu0 0.0
        %806 = vmatprep.subr.mxu0 0.0
        %807 = vmatpush1.msra.mxu0 0.0
        %808 = vmatprep.subr.mxu0 0.0
        %809 = vmatpush1.msra.mxu0 0.0
        %810 = vmatprep.subr.mxu0 0.0
        %811 = vmatpush1.msra.mxu0 0.0
        %812 = vmatprep.subr.mxu0 0.0
        %813 = vmatpush1.msra.mxu0 0.0
        %814 = vmatprep.subr.mxu0 0.0
        %815 = vmatpush1.msra.mxu0 0.0
        %816 = vmatprep.subr.mxu0 0.0
        %817 = vmatpush1.msra.mxu0 0.0
        %818 = vmatprep.mubr.f32.mxu0 0.0
        %819 = vmatmul.mubr.f32.gmra.mrb[0].mxu0 %v743
        %v820 = vpop.f32.mrb[0].mxu0
        %v821 = vadd.f32 %v724, %v820
        %v822 = vpop.f32.mrb[0].mxu0
        %v823 = vadd.f32 %v724, %v822
        %824 = vmatprep.mubr.f32.mxu0 0.0
        %825 = vmatmul.mubr.f32.gmra.mrb[0].mxu0 %v746
        %v826 = vpop.f32.mrb[0].mxu0
        %v827 = vadd.f32 %v729, %v826
        %v828 = vpop.f32.mrb[0].mxu0
        %v829 = vadd.f32 %v729, %v828
        %830 = vmatprep.mubr.f32.mxu0 0.0
        %831 = vmatmul.mubr.f32.gmra.mrb[0].mxu0 %v749
        %v832 = vpop.f32.mrb[0].mxu0
        %v833 = vadd.f32 %v734, %v832
        %v834 = vpop.f32.mrb[0].mxu0
        %v835 = vadd.f32 %v734, %v834
        %836 = vmatprep.mubr.f32.mxu0 0.0
        %837 = vmatmul.mubr.f32.gmra.mrb[0].mxu0 %v752
        %v838 = vpop.f32.mrb[0].mxu0
        %v839 = vadd.f32 %v739, %v838
        %v840 = vpop.f32.mrb[0].mxu0
        %v841 = vadd.f32 %v739, %v840
        %842 = vdwg.mxu0
        %843 = vmatprep.subr.mxu0 %v668
        %844 = vmatpush1.msra.mxu0 %v670
        %845 = vmatprep.subr.mxu0 %v669
        %846 = vmatpush1.msra.mxu0 %v671
        %847 = vmatprep.subr.mxu0 %v630
        %848 = vmatpush1.msra.mxu0 %v629
        %849 = vmatprep.subr.mxu0 %v636
        %850 = vmatpush1.msra.mxu0 %v635
        %851 = vmatprep.subr.mxu0 %v703
        %852 = vmatpush1.msra.mxu0 %v705
        %853 = vmatprep.subr.mxu0 %v704
        %854 = vmatpush1.msra.mxu0 %v706
        %855 = vmatprep.subr.mxu0 0.0
        %856 = vmatpush1.msra.mxu0 0.0
        %857 = vmatprep.subr.mxu0 0.0
        %858 = vmatpush1.msra.mxu0 0.0
        %859 = vmatprep.subr.mxu0 0.0
        %860 = vmatpush1.msra.mxu0 0.0
        %861 = vmatprep.subr.mxu0 0.0
        %862 = vmatpush1.msra.mxu0 0.0
        %863 = vmatprep.subr.mxu0 0.0
        %864 = vmatpush1.msra.mxu0 0.0
        %865 = vmatprep.subr.mxu0 0.0
        %866 = vmatpush1.msra.mxu0 0.0
        %867 = vmatprep.subr.mxu0 0.0
        %868 = vmatpush1.msra.mxu0 0.0
        %869 = vmatprep.subr.mxu0 0.0
        %870 = vmatpush1.msra.mxu0 0.0
        %871 = vmatprep.subr.mxu0 0.0
        %872 = vmatpush1.msra.mxu0 0.0
        %873 = vmatprep.subr.mxu0 0.0
        %874 = vmatpush1.msra.mxu0 0.0
        %875 = vmatprep.subr.mxu0 0.0
        %876 = vmatpush1.msra.mxu0 0.0
        %877 = vmatprep.subr.mxu0 0.0
        %878 = vmatpush1.msra.mxu0 0.0
        %879 = vmatprep.subr.mxu0 0.0
        %880 = vmatpush1.msra.mxu0 0.0
        %881 = vmatprep.subr.mxu0 0.0
        %882 = vmatpush1.msra.mxu0 0.0
        %883 = vmatprep.subr.mxu0 0.0
        %884 = vmatpush1.msra.mxu0 0.0
        %885 = vmatprep.subr.mxu0 0.0
        %886 = vmatpush1.msra.mxu0 0.0
        %887 = vmatprep.subr.mxu0 0.0
        %888 = vmatpush1.msra.mxu0 0.0
        %889 = vmatprep.subr.mxu0 0.0
        %890 = vmatpush1.msra.mxu0 0.0
        %891 = vmatprep.subr.mxu0 0.0
        %892 = vmatpush1.msra.mxu0 0.0
        %893 = vmatprep.subr.mxu0 0.0
        %894 = vmatpush1.msra.mxu0 0.0
        %895 = vmatprep.subr.mxu0 0.0
        %896 = vmatpush1.msra.mxu0 0.0
        %897 = vmatprep.subr.mxu0 0.0
        %898 = vmatpush1.msra.mxu0 0.0
        %899 = vmatprep.subr.mxu0 0.0
        %900 = vmatpush1.msra.mxu0 0.0
        %901 = vmatprep.subr.mxu0 0.0
        %902 = vmatpush1.msra.mxu0 0.0
        %903 = vmatprep.subr.mxu0 0.0
        %904 = vmatpush1.msra.mxu0 0.0
        %905 = vmatprep.subr.mxu0 0.0
        %906 = vmatpush1.msra.mxu0 0.0
        %907 = vmatprep.mubr.f32.mxu0 0.0
        %908 = vmatmul.mubr.f32.gmra.mrb[0].mxu0 %v743
        %v909 = vpop.f32.mrb[0].mxu0
        %v910 = vadd.f32 %v724, %v909
        %v911 = vpop.f32.mrb[0].mxu0
        %v912 = vadd.f32 %v724, %v911
        %913 = vmatprep.mubr.f32.mxu0 0.0
        %914 = vmatmul.mubr.f32.gmra.mrb[0].mxu0 %v746
        %v915 = vpop.f32.mrb[0].mxu0
        %v916 = vadd.f32 %v729, %v915
        %v917 = vpop.f32.mrb[0].mxu0
        %v918 = vadd.f32 %v729, %v917
        %919 = vmatprep.mubr.f32.mxu0 0.0
        %920 = vmatmul.mubr.f32.gmra.mrb[0].mxu0 %v749
        %v921 = vpop.f32.mrb[0].mxu0
        %v922 = vadd.f32 %v734, %v921
        %v923 = vpop.f32.mrb[0].mxu0
        %v924 = vadd.f32 %v734, %v923
        %925 = vmatprep.mubr.f32.mxu0 0.0
        %926 = vmatmul.mubr.f32.gmra.mrb[0].mxu0 %v752
        %v927 = vpop.f32.mrb[0].mxu0
        %v928 = vadd.f32 %v739, %v927
        %v929 = vpop.f32.mrb[0].mxu0
        %v930 = vadd.f32 %v739, %v929
        %931 = vdwg.mxu0
        %932 = vmatprep.subr.mxu0 %v664
        %933 = vmatpush1.msra.mxu0 %v666
        %934 = vmatprep.subr.mxu0 %v665
        %935 = vmatpush1.msra.mxu0 %v667
        %936 = vmatprep.subr.mxu0 %v632
        %937 = vmatpush1.msra.mxu0 %v631
        %938 = vmatprep.subr.mxu0 %v638
        %939 = vmatpush1.msra.mxu0 %v637
        %940 = vmatprep.subr.mxu0 %v711
        %941 = vmatpush1.msra.mxu0 %v701
        %942 = vmatprep.subr.mxu0 %v712
        %943 = vmatpush1.msra.mxu0 %v702
        %944 = vmatprep.subr.mxu0 0.0
        %945 = vmatpush1.msra.mxu0 0.0
        %946 = vmatprep.subr.mxu0 0.0
        %947 = vmatpush1.msra.mxu0 0.0
        %948 = vmatprep.subr.mxu0 0.0
        %949 = vmatpush1.msra.mxu0 0.0
        %950 = vmatprep.subr.mxu0 0.0
        %951 = vmatpush1.msra.mxu0 0.0
        %952 = vmatprep.subr.mxu0 0.0
        %953 = vmatpush1.msra.mxu0 0.0
        %954 = vmatprep.subr.mxu0 0.0
        %955 = vmatpush1.msra.mxu0 0.0
        %956 = vmatprep.subr.mxu0 0.0
        %957 = vmatpush1.msra.mxu0 0.0
        %958 = vmatprep.subr.mxu0 0.0
        %959 = vmatpush1.msra.mxu0 0.0
        %960 = vmatprep.subr.mxu0 0.0
        %961 = vmatpush1.msra.mxu0 0.0
        %962 = vmatprep.subr.mxu0 0.0
        %963 = vmatpush1.msra.mxu0 0.0
        %964 = vmatprep.subr.mxu0 0.0
        %965 = vmatpush1.msra.mxu0 0.0
        %966 = vmatprep.subr.mxu0 0.0
        %967 = vmatpush1.msra.mxu0 0.0
        %968 = vmatprep.subr.mxu0 0.0
        %969 = vmatpush1.msra.mxu0 0.0
        %970 = vmatprep.subr.mxu0 0.0
        %971 = vmatpush1.msra.mxu0 0.0
        %972 = vmatprep.subr.mxu0 0.0
        %973 = vmatpush1.msra.mxu0 0.0
        %974 = vmatprep.subr.mxu0 0.0
        %975 = vmatpush1.msra.mxu0 0.0
        %976 = vmatprep.subr.mxu0 0.0
        %977 = vmatpush1.msra.mxu0 0.0
        %978 = vmatprep.subr.mxu0 0.0
        %979 = vmatpush1.msra.mxu0 0.0
        %980 = vmatprep.subr.mxu0 0.0
        %981 = vmatpush1.msra.mxu0 0.0
        %982 = vmatprep.subr.mxu0 0.0
        %983 = vmatpush1.msra.mxu0 0.0
        %984 = vmatprep.subr.mxu0 0.0
        %985 = vmatpush1.msra.mxu0 0.0
        %986 = vmatprep.subr.mxu0 0.0
        %987 = vmatpush1.msra.mxu0 0.0
        %988 = vmatprep.subr.mxu0 0.0
        %989 = vmatpush1.msra.mxu0 0.0
        %990 = vmatprep.subr.mxu0 0.0
        %991 = vmatpush1.msra.mxu0 0.0
        %992 = vmatprep.subr.mxu0 0.0
        %993 = vmatpush1.msra.mxu0 0.0
        %994 = vmatprep.subr.mxu0 0.0
        %995 = vmatpush1.msra.mxu0 0.0
        %996 = vmatprep.mubr.f32.mxu0 0.0
        %997 = vmatmul.mubr.f32.gmra.mrb[0].mxu0 %v743
        %v998 = vpop.f32.mrb[0].mxu0
        %v999 = vadd.f32 %v724, %v998
        %v1000 = vpop.f32.mrb[0].mxu0
        %v1001 = vadd.f32 %v724, %v1000
        %1002 = vmatprep.mubr.f32.mxu0 0.0
        %1003 = vmatmul.mubr.f32.gmra.mrb[0].mxu0 %v746
        %v1004 = vpop.f32.mrb[0].mxu0
        %v1005 = vadd.f32 %v729, %v1004
        %v1006 = vpop.f32.mrb[0].mxu0
        %v1007 = vadd.f32 %v729, %v1006
        %1008 = vmatprep.mubr.f32.mxu0 0.0
        %1009 = vmatmul.mubr.f32.gmra.mrb[0].mxu0 %v749
        %v1010 = vpop.f32.mrb[0].mxu0
        %v1011 = vadd.f32 %v734, %v1010
        %v1012 = vpop.f32.mrb[0].mxu0
        %v1013 = vadd.f32 %v734, %v1012
        %1014 = vmatprep.mubr.f32.mxu0 0.0
        %1015 = vmatmul.mubr.f32.gmra.mrb[0].mxu0 %v752
        %v1016 = vpop.f32.mrb[0].mxu0
        %v1017 = vadd.f32 %v739, %v1016
        %v1018 = vpop.f32.mrb[0].mxu0
        %v1019 = vadd.f32 %v739, %v1018
        %1020 = vdwg.mxu0
        %v1021 = vtanh.pop %v821
        %v1022 = vtanh.pop %v823
        %v1023 = vtanh.pop %v910
        %v1024 = vtanh.pop %v912
        %v1025 = vtanh.pop %v999
        %v1026 = vtanh.pop %v1001
        %v1027 = vtanh.pop %v827
        %v1028 = vtanh.pop %v829
        %v1029 = vtanh.pop %v916
        %v1030 = vtanh.pop %v918
        %v1031 = vtanh.pop %v1005
        %v1032 = vtanh.pop %v1007
        %v1033 = vmul.f32 %v833, 0.5
        %v1034 = vmul.f32 %v835, 0.5
        %v1035 = vmul.f32 %v922, 0.5
        %v1036 = vmul.f32 %v924, 0.5
        %v1037 = vmul.f32 %v1011, 0.5
        %v1038 = vmul.f32 %v1013, 0.5
        %v1039 = vmul.f32 %v839, 0.5
        %v1040 = vmul.f32 %v841, 0.5
        %v1041 = vmul.f32 %v928, 0.5
        %v1042 = vmul.f32 %v930, 0.5
        %v1043 = vmul.f32 %v1017, 0.5
        %v1044 = vmul.f32 %v1019, 0.5
        %v1045 = vtanh.pop %v1033
        %v1046 = vtanh.pop %v1034
        %v1047 = vtanh.pop %v1035
        %v1048 = vtanh.pop %v1036
        %v1049 = vtanh.pop %v1037
        %v1050 = vtanh.pop %v1038
        %v1051 = vtanh.pop %v1039
        %v1052 = vtanh.pop %v1040
        %v1053 = vtanh.pop %v1041
        %v1054 = vtanh.pop %v1042
        %v1055 = vtanh.pop %v1043
        %v1056 = vtanh.pop %v1044
        %v1057 = vadd.f32 %v1045, 1.0
        %v1058 = vadd.f32 %v1046, 1.0
        %v1059 = vadd.f32 %v1047, 1.0
        %v1060 = vadd.f32 %v1048, 1.0
        %v1061 = vadd.f32 %v1049, 1.0
        %v1062 = vadd.f32 %v1050, 1.0
        %v1063 = vadd.f32 %v1051, 1.0
        %v1064 = vadd.f32 %v1052, 1.0
        %v1065 = vadd.f32 %v1053, 1.0
        %v1066 = vadd.f32 %v1054, 1.0
        %v1067 = vadd.f32 %v1055, 1.0
        %v1068 = vadd.f32 %v1056, 1.0
        %v1069 = vmul.f32 %v1057, 0.5
        %v1070 = vmul.f32 %v1058, 0.5
        %v1071 = vmul.f32 %v1059, 0.5
        %v1072 = vmul.f32 %v1060, 0.5
        %v1073 = vmul.f32 %v1061, 0.5
        %v1074 = vmul.f32 %v1062, 0.5
        %v1075 = vmul.f32 %v1063, 0.5
        %v1076 = vmul.f32 %v1064, 0.5
        %v1077 = vmul.f32 %v1065, 0.5
        %v1078 = vmul.f32 %v1066, 0.5
        %v1079 = vmul.f32 %v1067, 0.5
        %v1080 = vmul.f32 %v1068, 0.5
        %v1081 = vmul.f32 %v1021, %v1069
        %v1082 = vmul.f32 %v1022, %v1070
        %v1083 = vmul.f32 %v1023, %v1071
        %v1084 = vmul.f32 %v1024, %v1072
        %v1085 = vmul.f32 %v1025, %v1073
        %v1086 = vmul.f32 %v1026, %v1074
        %v1087 = vmul.f32 %v1027, %v1075
        %v1088 = vmul.f32 %v1028, %v1076
        %v1089 = vmul.f32 %v1029, %v1077
        %v1090 = vmul.f32 %v1030, %v1078
        %v1091 = vmul.f32 %v1031, %v1079
        %v1092 = vmul.f32 %v1032, %v1080
        %v1093 = vld [vmem:[%s5] sm:$0xff]
        %v1094 = vld [vmem:[%s5 + $0x8] sm:$0xff]
        %v1095 = vld [vmem:[%s6] sm:$0xff]
        %v1096 = vld [vmem:[%s6 + $0x8] sm:$0xff]
        %1098 = vset.pattern.permute.xlu0 0
        %1099 = vperm.xlu0 %1098, %v1095
        %v1100 = vpop.permute.xlu0 %1099
        %1103 = vset.pattern.permute.xlu0 0
        %1104 = vperm.xlu0 %1103, %v1096
        %v1105 = vpop.permute.xlu0 %1104
        %vm1107 = vcmask 130048
        %v1109 = vsel %vm1107, %v1093, 0
        %v1112 = vsel %vm1107, %v1094, 0
        %1114 = vmatprep.subr.mxu0 %v1082
        %1115 = vmatpush1.msra.mxu0 %v1081
        %1116 = vmatprep.subr.mxu0 %v1088
        %1117 = vmatpush1.msra.mxu0 %v1087
        %1118 = vmatprep.subr.mxu0 0.0
        %1119 = vmatpush1.msra.mxu0 0.0
        %1120 = vmatprep.subr.mxu0 0.0
        %1121 = vmatpush1.msra.mxu0 0.0
        %1122 = vmatprep.subr.mxu0 0.0
        %1123 = vmatpush1.msra.mxu0 0.0
        %1124 = vmatprep.subr.mxu0 0.0
        %1125 = vmatpush1.msra.mxu0 0.0
        %1126 = vmatprep.subr.mxu0 0.0
        %1127 = vmatpush1.msra.mxu0 0.0
        %1128 = vmatprep.subr.mxu0 0.0
        %1129 = vmatpush1.msra.mxu0 0.0
        %1130 = vmatprep.subr.mxu0 0.0
        %1131 = vmatpush1.msra.mxu0 0.0
        %1132 = vmatprep.subr.mxu0 0.0
        %1133 = vmatpush1.msra.mxu0 0.0
        %1134 = vmatprep.subr.mxu0 0.0
        %1135 = vmatpush1.msra.mxu0 0.0
        %1136 = vmatprep.subr.mxu0 0.0
        %1137 = vmatpush1.msra.mxu0 0.0
        %1138 = vmatprep.subr.mxu0 0.0
        %1139 = vmatpush1.msra.mxu0 0.0
        %1140 = vmatprep.subr.mxu0 0.0
        %1141 = vmatpush1.msra.mxu0 0.0
        %1142 = vmatprep.subr.mxu0 0.0
        %1143 = vmatpush1.msra.mxu0 0.0
        %1144 = vmatprep.subr.mxu0 0.0
        %1145 = vmatpush1.msra.mxu0 0.0
        %1146 = vmatprep.subr.mxu0 0.0
        %1147 = vmatpush1.msra.mxu0 0.0
        %1148 = vmatprep.subr.mxu0 0.0
        %1149 = vmatpush1.msra.mxu0 0.0
        %1150 = vmatprep.subr.mxu0 0.0
        %1151 = vmatpush1.msra.mxu0 0.0
        %1152 = vmatprep.subr.mxu0 0.0
        %1153 = vmatpush1.msra.mxu0 0.0
        %1154 = vmatprep.subr.mxu0 0.0
        %1155 = vmatpush1.msra.mxu0 0.0
        %1156 = vmatprep.subr.mxu0 0.0
        %1157 = vmatpush1.msra.mxu0 0.0
        %1158 = vmatprep.subr.mxu0 0.0
        %1159 = vmatpush1.msra.mxu0 0.0
        %1160 = vmatprep.subr.mxu0 0.0
        %1161 = vmatpush1.msra.mxu0 0.0
        %1162 = vmatprep.subr.mxu0 0.0
        %1163 = vmatpush1.msra.mxu0 0.0
        %1164 = vmatprep.subr.mxu0 0.0
        %1165 = vmatpush1.msra.mxu0 0.0
        %1166 = vmatprep.subr.mxu0 0.0
        %1167 = vmatpush1.msra.mxu0 0.0
        %1168 = vmatprep.subr.mxu0 0.0
        %1169 = vmatpush1.msra.mxu0 0.0
        %1170 = vmatprep.subr.mxu0 0.0
        %1171 = vmatpush1.msra.mxu0 0.0
        %1172 = vmatprep.subr.mxu0 0.0
        %1173 = vmatpush1.msra.mxu0 0.0
        %1174 = vmatprep.subr.mxu0 0.0
        %1175 = vmatpush1.msra.mxu0 0.0
        %1176 = vmatprep.subr.mxu0 0.0
        %1177 = vmatpush1.msra.mxu0 0.0
        %1178 = vmatprep.mubr.f32.mxu0 0.0
        %1179 = vmatmul.mubr.f32.gmra.mrb[0].mxu0 %v1109
        %v1180 = vpop.f32.mrb[0].mxu0
        %v1181 = vadd.f32 %v1100, %v1180
        %v1182 = vpop.f32.mrb[0].mxu0
        %v1183 = vadd.f32 %v1100, %v1182
        %1184 = vmatprep.mubr.f32.mxu0 0.0
        %1185 = vmatmul.mubr.f32.gmra.mrb[0].mxu0 %v1112
        %v1186 = vpop.f32.mrb[0].mxu0
        %v1187 = vadd.f32 %v1105, %v1186
        %v1188 = vpop.f32.mrb[0].mxu0
        %v1189 = vadd.f32 %v1105, %v1188
        %1190 = vdwg.mxu0
        %1191 = vmatprep.subr.mxu0 %v1084
        %1192 = vmatpush1.msra.mxu0 %v1083
        %1193 = vmatprep.subr.mxu0 %v1090
        %1194 = vmatpush1.msra.mxu0 %v1089
        %1195 = vmatprep.subr.mxu0 0.0
        %1196 = vmatpush1.msra.mxu0 0.0
        %1197 = vmatprep.subr.mxu0 0.0
        %1198 = vmatpush1.msra.mxu0 0.0
        %1199 = vmatprep.subr.mxu0 0.0
        %1200 = vmatpush1.msra.mxu0 0.0
        %1201 = vmatprep.subr.mxu0 0.0
        %1202 = vmatpush1.msra.mxu0 0.0
        %1203 = vmatprep.subr.mxu0 0.0
        %1204 = vmatpush1.msra.mxu0 0.0
        %1205 = vmatprep.subr.mxu0 0.0
        %1206 = vmatpush1.msra.mxu0 0.0
        %1207 = vmatprep.subr.mxu0 0.0
        %1208 = vmatpush1.msra.mxu0 0.0
        %1209 = vmatprep.subr.mxu0 0.0
        %1210 = vmatpush1.msra.mxu0 0.0
        %1211 = vmatprep.subr.mxu0 0.0
        %1212 = vmatpush1.msra.mxu0 0.0
        %1213 = vmatprep.subr.mxu0 0.0
        %1214 = vmatpush1.msra.mxu0 0.0
        %1215 = vmatprep.subr.mxu0 0.0
        %1216 = vmatpush1.msra.mxu0 0.0
        %1217 = vmatprep.subr.mxu0 0.0
        %1218 = vmatpush1.msra.mxu0 0.0
        %1219 = vmatprep.subr.mxu0 0.0
        %1220 = vmatpush1.msra.mxu0 0.0
        %1221 = vmatprep.subr.mxu0 0.0
        %1222 = vmatpush1.msra.mxu0 0.0
        %1223 = vmatprep.subr.mxu0 0.0
        %1224 = vmatpush1.msra.mxu0 0.0
        %1225 = vmatprep.subr.mxu0 0.0
        %1226 = vmatpush1.msra.mxu0 0.0
        %1227 = vmatprep.subr.mxu0 0.0
        %1228 = vmatpush1.msra.mxu0 0.0
        %1229 = vmatprep.subr.mxu0 0.0
        %1230 = vmatpush1.msra.mxu0 0.0
        %1231 = vmatprep.subr.mxu0 0.0
        %1232 = vmatpush1.msra.mxu0 0.0
        %1233 = vmatprep.subr.mxu0 0.0
        %1234 = vmatpush1.msra.mxu0 0.0
        %1235 = vmatprep.subr.mxu0 0.0
        %1236 = vmatpush1.msra.mxu0 0.0
        %1237 = vmatprep.subr.mxu0 0.0
        %1238 = vmatpush1.msra.mxu0 0.0
        %1239 = vmatprep.subr.mxu0 0.0
        %1240 = vmatpush1.msra.mxu0 0.0
        %1241 = vmatprep.subr.mxu0 0.0
        %1242 = vmatpush1.msra.mxu0 0.0
        %1243 = vmatprep.subr.mxu0 0.0
        %1244 = vmatpush1.msra.mxu0 0.0
        %1245 = vmatprep.subr.mxu0 0.0
        %1246 = vmatpush1.msra.mxu0 0.0
        %1247 = vmatprep.subr.mxu0 0.0
        %1248 = vmatpush1.msra.mxu0 0.0
        %1249 = vmatprep.subr.mxu0 0.0
        %1250 = vmatpush1.msra.mxu0 0.0
        %1251 = vmatprep.subr.mxu0 0.0
        %1252 = vmatpush1.msra.mxu0 0.0
        %1253 = vmatprep.subr.mxu0 0.0
        %1254 = vmatpush1.msra.mxu0 0.0
        %1255 = vmatprep.mubr.f32.mxu0 0.0
        %1256 = vmatmul.mubr.f32.gmra.mrb[0].mxu0 %v1109
        %v1257 = vpop.f32.mrb[0].mxu0
        %v1258 = vadd.f32 %v1100, %v1257
        %v1259 = vpop.f32.mrb[0].mxu0
        %v1260 = vadd.f32 %v1100, %v1259
        %1261 = vmatprep.mubr.f32.mxu0 0.0
        %1262 = vmatmul.mubr.f32.gmra.mrb[0].mxu0 %v1112
        %v1263 = vpop.f32.mrb[0].mxu0
        %v1264 = vadd.f32 %v1105, %v1263
        %v1265 = vpop.f32.mrb[0].mxu0
        %v1266 = vadd.f32 %v1105, %v1265
        %1267 = vdwg.mxu0
        %1268 = vmatprep.subr.mxu0 %v1086
        %1269 = vmatpush1.msra.mxu0 %v1085
        %1270 = vmatprep.subr.mxu0 %v1092
        %1271 = vmatpush1.msra.mxu0 %v1091
        %1272 = vmatprep.subr.mxu0 0.0
        %1273 = vmatpush1.msra.mxu0 0.0
        %1274 = vmatprep.subr.mxu0 0.0
        %1275 = vmatpush1.msra.mxu0 0.0
        %1276 = vmatprep.subr.mxu0 0.0
        %1277 = vmatpush1.msra.mxu0 0.0
        %1278 = vmatprep.subr.mxu0 0.0
        %1279 = vmatpush1.msra.mxu0 0.0
        %1280 = vmatprep.subr.mxu0 0.0
        %1281 = vmatpush1.msra.mxu0 0.0
        %1282 = vmatprep.subr.mxu0 0.0
        %1283 = vmatpush1.msra.mxu0 0.0
        %1284 = vmatprep.subr.mxu0 0.0
        %1285 = vmatpush1.msra.mxu0 0.0
        %1286 = vmatprep.subr.mxu0 0.0
        %1287 = vmatpush1.msra.mxu0 0.0
        %1288 = vmatprep.subr.mxu0 0.0
        %1289 = vmatpush1.msra.mxu0 0.0
        %1290 = vmatprep.subr.mxu0 0.0
        %1291 = vmatpush1.msra.mxu0 0.0
        %1292 = vmatprep.subr.mxu0 0.0
        %1293 = vmatpush1.msra.mxu0 0.0
        %1294 = vmatprep.subr.mxu0 0.0
        %1295 = vmatpush1.msra.mxu0 0.0
        %1296 = vmatprep.subr.mxu0 0.0
        %1297 = vmatpush1.msra.mxu0 0.0
        %1298 = vmatprep.subr.mxu0 0.0
        %1299 = vmatpush1.msra.mxu0 0.0
        %1300 = vmatprep.subr.mxu0 0.0
        %1301 = vmatpush1.msra.mxu0 0.0
        %1302 = vmatprep.subr.mxu0 0.0
        %1303 = vmatpush1.msra.mxu0 0.0
        %1304 = vmatprep.subr.mxu0 0.0
        %1305 = vmatpush1.msra.mxu0 0.0
        %1306 = vmatprep.subr.mxu0 0.0
        %1307 = vmatpush1.msra.mxu0 0.0
        %1308 = vmatprep.subr.mxu0 0.0
        %1309 = vmatpush1.msra.mxu0 0.0
        %1310 = vmatprep.subr.mxu0 0.0
        %1311 = vmatpush1.msra.mxu0 0.0
        %1312 = vmatprep.subr.mxu0 0.0
        %1313 = vmatpush1.msra.mxu0 0.0
        %1314 = vmatprep.subr.mxu0 0.0
        %1315 = vmatpush1.msra.mxu0 0.0
        %1316 = vmatprep.subr.mxu0 0.0
        %1317 = vmatpush1.msra.mxu0 0.0
        %1318 = vmatprep.subr.mxu0 0.0
        %1319 = vmatpush1.msra.mxu0 0.0
        %1320 = vmatprep.subr.mxu0 0.0
        %1321 = vmatpush1.msra.mxu0 0.0
        %1322 = vmatprep.subr.mxu0 0.0
        %1323 = vmatpush1.msra.mxu0 0.0
        %1324 = vmatprep.subr.mxu0 0.0
        %1325 = vmatpush1.msra.mxu0 0.0
        %1326 = vmatprep.subr.mxu0 0.0
        %1327 = vmatpush1.msra.mxu0 0.0
        %1328 = vmatprep.subr.mxu0 0.0
        %1329 = vmatpush1.msra.mxu0 0.0
        %1330 = vmatprep.subr.mxu0 0.0
        %1331 = vmatpush1.msra.mxu0 0.0
        %1332 = vmatprep.mubr.f32.mxu0 0.0
        %1333 = vmatmul.mubr.f32.gmra.mrb[0].mxu0 %v1109
        %v1334 = vpop.f32.mrb[0].mxu0
        %v1335 = vadd.f32 %v1100, %v1334
        %v1336 = vpop.f32.mrb[0].mxu0
        %v1337 = vadd.f32 %v1100, %v1336
        %1338 = vmatprep.mubr.f32.mxu0 0.0
        %1339 = vmatmul.mubr.f32.gmra.mrb[0].mxu0 %v1112
        %v1340 = vpop.f32.mrb[0].mxu0
        %v1341 = vadd.f32 %v1105, %v1340
        %v1342 = vpop.f32.mrb[0].mxu0
        %v1343 = vadd.f32 %v1105, %v1342
        %1344 = vdwg.mxu0
        %v1345 = vsel %vm363, %v1181, 0.0
        %v1346 = vsel %vm364, %v1183, 0.0
        %v1347 = vsel %vm365, %v1258, 0.0
        %v1348 = vsel %vm366, %v1260, 0.0
        %v1349 = vsel %vm367, %v1335, 0.0
        %v1350 = vsel %vm368, %v1337, 0.0
        %v1351 = vsel %vm363, %v1187, 0.0
        %v1352 = vsel %vm364, %v1189, 0.0
        %v1353 = vsel %vm365, %v1264, 0.0
        %v1354 = vsel %vm366, %v1266, 0.0
        %v1355 = vsel %vm367, %v1341, 0.0
        %v1356 = vsel %vm368, %v1343, 0.0
        %v1357 = vadd.f32 %v628, %v1346
        %v1358 = vadd.f32 %v629, %v1347
        %v1359 = vadd.f32 %v630, %v1348
        %v1360 = vadd.f32 %v631, %v1349
        %v1361 = vadd.f32 %v634, %v1352
        %v1362 = vadd.f32 %v635, %v1353
        %v1363 = vadd.f32 %v636, %v1354
        %v1364 = vadd.f32 %v637, %v1355
        %1365 = vrot.lane.b32.xlu0 %v1345, 2
        %v1366 = vpop.permute.xlu0 %1365
        %1367 = vrot.lane.b32.xlu0 %v1351, 2
        %v1368 = vpop.permute.xlu0 %1367
        %1369 = vrot.lane.b32.xlu0 %v1346, 2
        %v1370 = vpop.permute.xlu0 %1369
        %1371 = vrot.lane.b32.xlu0 %v1352, 2
        %v1372 = vpop.permute.xlu0 %1371
        %1373 = vrot.lane.b32.xlu0 %v1347, 2
        %v1374 = vpop.permute.xlu0 %1373
        %1375 = vrot.lane.b32.xlu0 %v1353, 2
        %v1376 = vpop.permute.xlu0 %1375
        %1377 = vrot.lane.b32.xlu0 %v1348, 2
        %v1378 = vpop.permute.xlu0 %1377
        %1379 = vrot.lane.b32.xlu0 %v1354, 2
        %v1380 = vpop.permute.xlu0 %1379
        %1381 = vrot.lane.b32.xlu0 %v1349, 2
        %v1382 = vpop.permute.xlu0 %1381
        %1383 = vrot.lane.b32.xlu0 %v1355, 2
        %v1384 = vpop.permute.xlu0 %1383
        %1385 = vrot.lane.b32.xlu0 %v1350, 2
        %v1386 = vpop.permute.xlu0 %1385
        %1387 = vrot.lane.b32.xlu0 %v1356, 2
        %v1388 = vpop.permute.xlu0 %1387
        %vm1389 = vcmp.lt.s32.totalorder %v325, 2
        %v1390 = vsel %vm1389, %v1382, %v1386
        %v1391 = vsel %vm1389, %v1384, %v1388
        %v1392 = vsel %vm1389, %v1378, %v1382
        %v1393 = vsel %vm1389, %v1380, %v1384
        %v1394 = vsel %vm1389, %v1374, %v1378
        %v1395 = vsel %vm1389, %v1376, %v1380
        %v1396 = vsel %vm1389, %v1370, %v1374
        %v1397 = vsel %vm1389, %v1372, %v1376
        %v1398 = vsel %vm1389, %v1366, %v1370
        %v1399 = vsel %vm1389, %v1368, %v1372
        %v1400 = vsel %vm1389, %v1386, %v1366
        %v1401 = vsel %vm1389, %v1388, %v1368
        %1402 = vrot.lane.b32.xlu0 %v1345, 126
        %v1403 = vpop.permute.xlu0 %1402
        %1404 = vrot.lane.b32.xlu0 %v1351, 126
        %v1405 = vpop.permute.xlu0 %1404
        %1406 = vrot.lane.b32.xlu0 %v1346, 126
        %v1407 = vpop.permute.xlu0 %1406
        %1408 = vrot.lane.b32.xlu0 %v1352, 126
        %v1409 = vpop.permute.xlu0 %1408
        %1410 = vrot.lane.b32.xlu0 %v1347, 126
        %v1411 = vpop.permute.xlu0 %1410
        %1412 = vrot.lane.b32.xlu0 %v1353, 126
        %v1413 = vpop.permute.xlu0 %1412
        %1414 = vrot.lane.b32.xlu0 %v1348, 126
        %v1415 = vpop.permute.xlu0 %1414
        %1416 = vrot.lane.b32.xlu0 %v1354, 126
        %v1417 = vpop.permute.xlu0 %1416
        %1418 = vrot.lane.b32.xlu0 %v1349, 126
        %v1419 = vpop.permute.xlu0 %1418
        %1420 = vrot.lane.b32.xlu0 %v1355, 126
        %v1421 = vpop.permute.xlu0 %1420
        %1422 = vrot.lane.b32.xlu0 %v1350, 126
        %v1423 = vpop.permute.xlu0 %1422
        %1424 = vrot.lane.b32.xlu0 %v1356, 126
        %v1425 = vpop.permute.xlu0 %1424
        %vm1426 = vcmp.lt.s32.totalorder %v325, 126
        %v1427 = vsel %vm1426, %v1419, %v1423
        %v1428 = vsel %vm1426, %v1421, %v1425
        %v1429 = vsel %vm1426, %v1415, %v1419
        %v1430 = vsel %vm1426, %v1417, %v1421
        %v1431 = vsel %vm1426, %v1411, %v1415
        %v1432 = vsel %vm1426, %v1413, %v1417
        %v1433 = vsel %vm1426, %v1407, %v1411
        %v1434 = vsel %vm1426, %v1409, %v1413
        %v1435 = vsel %vm1426, %v1403, %v1407
        %v1436 = vsel %vm1426, %v1405, %v1409
        %v1437 = vsel %vm1426, %v1423, %v1403
        %v1438 = vsel %vm1426, %v1425, %v1405
        %s1439 = scalar_lea.vmem [#allocation4], 32
        %v1440 = vld [vmem:[%s1439] sm:$0xff]
        %v1441 = vld [vmem:[%s1439 + $0x8] sm:$0xff]
        %v1442 = vld [vmem:[%s1439 + $0x10] sm:$0xff]
        %v1443 = vld [vmem:[%s1439 + $0x18] sm:$0xff]
        %s1444 = scalar_lea.vmem %s4, 32
        %v1445 = vld [vmem:[%s1444] sm:$0xff]
        %v1446 = vld [vmem:[%s1444 + $0x8] sm:$0xff]
        %v1447 = vld [vmem:[%s1444 + $0x10] sm:$0xff]
        %v1448 = vld [vmem:[%s1444 + $0x18] sm:$0xff]
        %1450 = vset.pattern.permute.xlu0 0
        %1451 = vperm.xlu0 %1450, %v1445
        %v1452 = vpop.permute.xlu0 %1451
        %1455 = vset.pattern.permute.xlu0 0
        %1456 = vperm.xlu0 %1455, %v1446
        %v1457 = vpop.permute.xlu0 %1456
        %1460 = vset.pattern.permute.xlu0 0
        %1461 = vperm.xlu0 %1460, %v1447
        %v1462 = vpop.permute.xlu0 %1461
        %1465 = vset.pattern.permute.xlu0 0
        %1466 = vperm.xlu0 %1465, %v1448
        %v1467 = vpop.permute.xlu0 %1466
        %v1470 = vsel %vm741, %v1440, 0
        %v1473 = vsel %vm741, %v1441, 0
        %v1476 = vsel %vm741, %v1442, 0
        %v1479 = vsel %vm741, %v1443, 0
        %1481 = vmatprep.subr.mxu0 %v1398
        %1482 = vmatpush1.msra.mxu0 %v1400
        %1483 = vmatprep.subr.mxu0 %v1399
        %1484 = vmatpush1.msra.mxu0 %v1401
        %1485 = vmatprep.subr.mxu0 %v1346
        %1486 = vmatpush1.msra.mxu0 %v1345
        %1487 = vmatprep.subr.mxu0 %v1352
        %1488 = vmatpush1.msra.mxu0 %v1351
        %1489 = vmatprep.subr.mxu0 %v1433
        %1490 = vmatpush1.msra.mxu0 %v1435
        %1491 = vmatprep.subr.mxu0 %v1434
        %1492 = vmatpush1.msra.mxu0 %v1436
        %1493 = vmatprep.subr.mxu0 0.0
        %1494 = vmatpush1.msra.mxu0 0.0
        %1495 = vmatprep.subr.mxu0 0.0
        %1496 = vmatpush1.msra.mxu0 0.0
        %1497 = vmatprep.subr.mxu0 0.0
        %1498 = vmatpush1.msra.mxu0 0.0
        %1499 = vmatprep.subr.mxu0 0.0
        %1500 = vmatpush1.msra.mxu0 0.0
        %1501 = vmatprep.subr.mxu0 0.0
        %1502 = vmatpush1.msra.mxu0 0.0
        %1503 = vmatprep.subr.mxu0 0.0
        %1504 = vmatpush1.msra.mxu0 0.0
        %1505 = vmatprep.subr.mxu0 0.0
        %1506 = vmatpush1.msra.mxu0 0.0
        %1507 = vmatprep.subr.mxu0 0.0
        %1508 = vmatpush1.msra.mxu0 0.0
        %1509 = vmatprep.subr.mxu0 0.0
        %1510 = vmatpush1.msra.mxu0 0.0
        %1511 = vmatprep.subr.mxu0 0.0
        %1512 = vmatpush1.msra.mxu0 0.0
        %1513 = vmatprep.subr.mxu0 0.0
        %1514 = vmatpush1.msra.mxu0 0.0
        %1515 = vmatprep.subr.mxu0 0.0
        %1516 = vmatpush1.msra.mxu0 0.0
        %1517 = vmatprep.subr.mxu0 0.0
        %1518 = vmatpush1.msra.mxu0 0.0
        %1519 = vmatprep.subr.mxu0 0.0
        %1520 = vmatpush1.msra.mxu0 0.0
        %1521 = vmatprep.subr.mxu0 0.0
        %1522 = vmatpush1.msra.mxu0 0.0
        %1523 = vmatprep.subr.mxu0 0.0
        %1524 = vmatpush1.msra.mxu0 0.0
        %1525 = vmatprep.subr.mxu0 0.0
        %1526 = vmatpush1.msra.mxu0 0.0
        %1527 = vmatprep.subr.mxu0 0.0
        %1528 = vmatpush1.msra.mxu0 0.0
        %1529 = vmatprep.subr.mxu0 0.0
        %1530 = vmatpush1.msra.mxu0 0.0
        %1531 = vmatprep.subr.mxu0 0.0
        %1532 = vmatpush1.msra.mxu0 0.0
        %1533 = vmatprep.subr.mxu0 0.0
        %1534 = vmatpush1.msra.mxu0 0.0
        %1535 = vmatprep.subr.mxu0 0.0
        %1536 = vmatpush1.msra.mxu0 0.0
        %1537 = vmatprep.subr.mxu0 0.0
        %1538 = vmatpush1.msra.mxu0 0.0
        %1539 = vmatprep.subr.mxu0 0.0
        %1540 = vmatpush1.msra.mxu0 0.0
        %1541 = vmatprep.subr.mxu0 0.0
        %1542 = vmatpush1.msra.mxu0 0.0
        %1543 = vmatprep.subr.mxu0 0.0
        %1544 = vmatpush1.msra.mxu0 0.0
        %1545 = vmatprep.mubr.f32.mxu0 0.0
        %1546 = vmatmul.mubr.f32.gmra.mrb[0].mxu0 %v1470
        %v1547 = vpop.f32.mrb[0].mxu0
        %v1548 = vadd.f32 %v1452, %v1547
        %v1549 = vpop.f32.mrb[0].mxu0
        %v1550 = vadd.f32 %v1452, %v1549
        %1551 = vmatprep.mubr.f32.mxu0 0.0
        %1552 = vmatmul.mubr.f32.gmra.mrb[0].mxu0 %v1473
        %v1553 = vpop.f32.mrb[0].mxu0
        %v1554 = vadd.f32 %v1457, %v1553
        %v1555 = vpop.f32.mrb[0].mxu0
        %v1556 = vadd.f32 %v1457, %v1555
        %1557 = vmatprep.mubr.f32.mxu0 0.0
        %1558 = vmatmul.mubr.f32.gmra.mrb[0].mxu0 %v1476
        %v1559 = vpop.f32.mrb[0].mxu0
        %v1560 = vadd.f32 %v1462, %v1559
        %v1561 = vpop.f32.mrb[0].mxu0
        %v1562 = vadd.f32 %v1462, %v1561
        %1563 = vmatprep.mubr.f32.mxu0 0.0
        %1564 = vmatmul.mubr.f32.gmra.mrb[0].mxu0 %v1479
        %v1565 = vpop.f32.mrb[0].mxu0
        %v1566 = vadd.f32 %v1467, %v1565
        %v1567 = vpop.f32.mrb[0].mxu0
        %v1568 = vadd.f32 %v1467, %v1567
        %1569 = vdwg.mxu0
        %1570 = vmatprep.subr.mxu0 %v1394
        %1571 = vmatpush1.msra.mxu0 %v1396
        %1572 = vmatprep.subr.mxu0 %v1395
        %1573 = vmatpush1.msra.mxu0 %v1397
        %1574 = vmatprep.subr.mxu0 %v1348
        %1575 = vmatpush1.msra.mxu0 %v1347
        %1576 = vmatprep.subr.mxu0 %v1354
        %1577 = vmatpush1.msra.mxu0 %v1353
        %1578 = vmatprep.subr.mxu0 %v1429
        %1579 = vmatpush1.msra.mxu0 %v1431
        %1580 = vmatprep.subr.mxu0 %v1430
        %1581 = vmatpush1.msra.mxu0 %v1432
        %1582 = vmatprep.subr.mxu0 0.0
        %1583 = vmatpush1.msra.mxu0 0.0
        %1584 = vmatprep.subr.mxu0 0.0
        %1585 = vmatpush1.msra.mxu0 0.0
        %1586 = vmatprep.subr.mxu0 0.0
        %1587 = vmatpush1.msra.mxu0 0.0
        %1588 = vmatprep.subr.mxu0 0.0
        %1589 = vmatpush1.msra.mxu0 0.0
        %1590 = vmatprep.subr.mxu0 0.0
        %1591 = vmatpush1.msra.mxu0 0.0
        %1592 = vmatprep.subr.mxu0 0.0
        %1593 = vmatpush1.msra.mxu0 0.0
        %1594 = vmatprep.subr.mxu0 0.0
        %1595 = vmatpush1.msra.mxu0 0.0
        %1596 = vmatprep.subr.mxu0 0.0
        %1597 = vmatpush1.msra.mxu0 0.0
        %1598 = vmatprep.subr.mxu0 0.0
        %1599 = vmatpush1.msra.mxu0 0.0
        %1600 = vmatprep.subr.mxu0 0.0
        %1601 = vmatpush1.msra.mxu0 0.0
        %1602 = vmatprep.subr.mxu0 0.0
        %1603 = vmatpush1.msra.mxu0 0.0
        %1604 = vmatprep.subr.mxu0 0.0
        %1605 = vmatpush1.msra.mxu0 0.0
        %1606 = vmatprep.subr.mxu0 0.0
        %1607 = vmatpush1.msra.mxu0 0.0
        %1608 = vmatprep.subr.mxu0 0.0
        %1609 = vmatpush1.msra.mxu0 0.0
        %1610 = vmatprep.subr.mxu0 0.0
        %1611 = vmatpush1.msra.mxu0 0.0
        %1612 = vmatprep.subr.mxu0 0.0
        %1613 = vmatpush1.msra.mxu0 0.0
        %1614 = vmatprep.subr.mxu0 0.0
        %1615 = vmatpush1.msra.mxu0 0.0
        %1616 = vmatprep.subr.mxu0 0.0
        %1617 = vmatpush1.msra.mxu0 0.0
        %1618 = vmatprep.subr.mxu0 0.0
        %1619 = vmatpush1.msra.mxu0 0.0
        %1620 = vmatprep.subr.mxu0 0.0
        %1621 = vmatpush1.msra.mxu0 0.0
        %1622 = vmatprep.subr.mxu0 0.0
        %1623 = vmatpush1.msra.mxu0 0.0
        %1624 = vmatprep.subr.mxu0 0.0
        %1625 = vmatpush1.msra.mxu0 0.0
        %1626 = vmatprep.subr.mxu0 0.0
        %1627 = vmatpush1.msra.mxu0 0.0
        %1628 = vmatprep.subr.mxu0 0.0
        %1629 = vmatpush1.msra.mxu0 0.0
        %1630 = vmatprep.subr.mxu0 0.0
        %1631 = vmatpush1.msra.mxu0 0.0
        %1632 = vmatprep.subr.mxu0 0.0
        %1633 = vmatpush1.msra.mxu0 0.0
        %1634 = vmatprep.mubr.f32.mxu0 0.0
        %1635 = vmatmul.mubr.f32.gmra.mrb[0].mxu0 %v1470
        %v1636 = vpop.f32.mrb[0].mxu0
        %v1637 = vadd.f32 %v1452, %v1636
        %v1638 = vpop.f32.mrb[0].mxu0
        %v1639 = vadd.f32 %v1452, %v1638
        %1640 = vmatprep.mubr.f32.mxu0 0.0
        %1641 = vmatmul.mubr.f32.gmra.mrb[0].mxu0 %v1473
        %v1642 = vpop.f32.mrb[0].mxu0
        %v1643 = vadd.f32 %v1457, %v1642
        %v1644 = vpop.f32.mrb[0].mxu0
        %v1645 = vadd.f32 %v1457, %v1644
        %1646 = vmatprep.mubr.f32.mxu0 0.0
        %1647 = vmatmul.mubr.f32.gmra.mrb[0].mxu0 %v1476
        %v1648 = vpop.f32.mrb[0].mxu0
        %v1649 = vadd.f32 %v1462, %v1648
        %v1650 = vpop.f32.mrb[0].mxu0
        %v1651 = vadd.f32 %v1462, %v1650
        %1652 = vmatprep.mubr.f32.mxu0 0.0
        %1653 = vmatmul.mubr.f32.gmra.mrb[0].mxu0 %v1479
        %v1654 = vpop.f32.mrb[0].mxu0
        %v1655 = vadd.f32 %v1467, %v1654
        %v1656 = vpop.f32.mrb[0].mxu0
        %v1657 = vadd.f32 %v1467, %v1656
        %1658 = vdwg.mxu0
        %1659 = vmatprep.subr.mxu0 %v1390
        %1660 = vmatpush1.msra.mxu0 %v1392
        %1661 = vmatprep.subr.mxu0 %v1391
        %1662 = vmatpush1.msra.mxu0 %v1393
        %1663 = vmatprep.subr.mxu0 %v1350
        %1664 = vmatpush1.msra.mxu0 %v1349
        %1665 = vmatprep.subr.mxu0 %v1356
        %1666 = vmatpush1.msra.mxu0 %v1355
        %1667 = vmatprep.subr.mxu0 %v1437
        %1668 = vmatpush1.msra.mxu0 %v1427
        %1669 = vmatprep.subr.mxu0 %v1438
        %1670 = vmatpush1.msra.mxu0 %v1428
        %1671 = vmatprep.subr.mxu0 0.0
        %1672 = vmatpush1.msra.mxu0 0.0
        %1673 = vmatprep.subr.mxu0 0.0
        %1674 = vmatpush1.msra.mxu0 0.0
        %1675 = vmatprep.subr.mxu0 0.0
        %1676 = vmatpush1.msra.mxu0 0.0
        %1677 = vmatprep.subr.mxu0 0.0
        %1678 = vmatpush1.msra.mxu0 0.0
        %1679 = vmatprep.subr.mxu0 0.0
        %1680 = vmatpush1.msra.mxu0 0.0
        %1681 = vmatprep.subr.mxu0 0.0
        %1682 = vmatpush1.msra.mxu0 0.0
        %1683 = vmatprep.subr.mxu0 0.0
        %1684 = vmatpush1.msra.mxu0 0.0
        %1685 = vmatprep.subr.mxu0 0.0
        %1686 = vmatpush1.msra.mxu0 0.0
        %1687 = vmatprep.subr.mxu0 0.0
        %1688 = vmatpush1.msra.mxu0 0.0
        %1689 = vmatprep.subr.mxu0 0.0
        %1690 = vmatpush1.msra.mxu0 0.0
        %1691 = vmatprep.subr.mxu0 0.0
        %1692 = vmatpush1.msra.mxu0 0.0
        %1693 = vmatprep.subr.mxu0 0.0
        %1694 = vmatpush1.msra.mxu0 0.0
        %1695 = vmatprep.subr.mxu0 0.0
        %1696 = vmatpush1.msra.mxu0 0.0
        %1697 = vmatprep.subr.mxu0 0.0
        %1698 = vmatpush1.msra.mxu0 0.0
        %1699 = vmatprep.subr.mxu0 0.0
        %1700 = vmatpush1.msra.mxu0 0.0
        %1701 = vmatprep.subr.mxu0 0.0
        %1702 = vmatpush1.msra.mxu0 0.0
        %1703 = vmatprep.subr.mxu0 0.0
        %1704 = vmatpush1.msra.mxu0 0.0
        %1705 = vmatprep.subr.mxu0 0.0
        %1706 = vmatpush1.msra.mxu0 0.0
        %1707 = vmatprep.subr.mxu0 0.0
        %1708 = vmatpush1.msra.mxu0 0.0
        %1709 = vmatprep.subr.mxu0 0.0
        %1710 = vmatpush1.msra.mxu0 0.0
        %1711 = vmatprep.subr.mxu0 0.0
        %1712 = vmatpush1.msra.mxu0 0.0
        %1713 = vmatprep.subr.mxu0 0.0
        %1714 = vmatpush1.msra.mxu0 0.0
        %1715 = vmatprep.subr.mxu0 0.0
        %1716 = vmatpush1.msra.mxu0 0.0
        %1717 = vmatprep.subr.mxu0 0.0
        %1718 = vmatpush1.msra.mxu0 0.0
        %1719 = vmatprep.subr.mxu0 0.0
        %1720 = vmatpush1.msra.mxu0 0.0
        %1721 = vmatprep.subr.mxu0 0.0
        %1722 = vmatpush1.msra.mxu0 0.0
        %1723 = vmatprep.mubr.f32.mxu0 0.0
        %1724 = vmatmul.mubr.f32.gmra.mrb[0].mxu0 %v1470
        %v1725 = vpop.f32.mrb[0].mxu0
        %v1726 = vadd.f32 %v1452, %v1725
        %v1727 = vpop.f32.mrb[0].mxu0
        %v1728 = vadd.f32 %v1452, %v1727
        %1729 = vmatprep.mubr.f32.mxu0 0.0
        %1730 = vmatmul.mubr.f32.gmra.mrb[0].mxu0 %v1473
        %v1731 = vpop.f32.mrb[0].mxu0
        %v1732 = vadd.f32 %v1457, %v1731
        %v1733 = vpop.f32.mrb[0].mxu0
        %v1734 = vadd.f32 %v1457, %v1733
        %1735 = vmatprep.mubr.f32.mxu0 0.0
        %1736 = vmatmul.mubr.f32.gmra.mrb[0].mxu0 %v1476
        %v1737 = vpop.f32.mrb[0].mxu0
        %v1738 = vadd.f32 %v1462, %v1737
        %v1739 = vpop.f32.mrb[0].mxu0
        %v1740 = vadd.f32 %v1462, %v1739
        %1741 = vmatprep.mubr.f32.mxu0 0.0
        %1742 = vmatmul.mubr.f32.gmra.mrb[0].mxu0 %v1479
        %v1743 = vpop.f32.mrb[0].mxu0
        %v1744 = vadd.f32 %v1467, %v1743
        %v1745 = vpop.f32.mrb[0].mxu0
        %v1746 = vadd.f32 %v1467, %v1745
        %1747 = vdwg.mxu0
        %v1748 = vtanh.pop %v1548
        %v1749 = vtanh.pop %v1550
        %v1750 = vtanh.pop %v1637
        %v1751 = vtanh.pop %v1639
        %v1752 = vtanh.pop %v1726
        %v1753 = vtanh.pop %v1728
        %v1754 = vtanh.pop %v1554
        %v1755 = vtanh.pop %v1556
        %v1756 = vtanh.pop %v1643
        %v1757 = vtanh.pop %v1645
        %v1758 = vtanh.pop %v1732
        %v1759 = vtanh.pop %v1734
        %v1760 = vmul.f32 %v1560, 0.5
        %v1761 = vmul.f32 %v1562, 0.5
        %v1762 = vmul.f32 %v1649, 0.5
        %v1763 = vmul.f32 %v1651, 0.5
        %v1764 = vmul.f32 %v1738, 0.5
        %v1765 = vmul.f32 %v1740, 0.5
        %v1766 = vmul.f32 %v1566, 0.5
        %v1767 = vmul.f32 %v1568, 0.5
        %v1768 = vmul.f32 %v1655, 0.5
        %v1769 = vmul.f32 %v1657, 0.5
        %v1770 = vmul.f32 %v1744, 0.5
        %v1771 = vmul.f32 %v1746, 0.5
        %v1772 = vtanh.pop %v1760
        %v1773 = vtanh.pop %v1761
        %v1774 = vtanh.pop %v1762
        %v1775 = vtanh.pop %v1763
        %v1776 = vtanh.pop %v1764
        %v1777 = vtanh.pop %v1765
        %v1778 = vtanh.pop %v1766
        %v1779 = vtanh.pop %v1767
        %v1780 = vtanh.pop %v1768
        %v1781 = vtanh.pop %v1769
        %v1782 = vtanh.pop %v1770
        %v1783 = vtanh.pop %v1771
        %v1784 = vadd.f32 %v1772, 1.0
        %v1785 = vadd.f32 %v1773, 1.0
        %v1786 = vadd.f32 %v1774, 1.0
        %v1787 = vadd.f32 %v1775, 1.0
        %v1788 = vadd.f32 %v1776, 1.0
        %v1789 = vadd.f32 %v1777, 1.0
        %v1790 = vadd.f32 %v1778, 1.0
        %v1791 = vadd.f32 %v1779, 1.0
        %v1792 = vadd.f32 %v1780, 1.0
        %v1793 = vadd.f32 %v1781, 1.0
        %v1794 = vadd.f32 %v1782, 1.0
        %v1795 = vadd.f32 %v1783, 1.0
        %v1796 = vmul.f32 %v1784, 0.5
        %v1797 = vmul.f32 %v1785, 0.5
        %v1798 = vmul.f32 %v1786, 0.5
        %v1799 = vmul.f32 %v1787, 0.5
        %v1800 = vmul.f32 %v1788, 0.5
        %v1801 = vmul.f32 %v1789, 0.5
        %v1802 = vmul.f32 %v1790, 0.5
        %v1803 = vmul.f32 %v1791, 0.5
        %v1804 = vmul.f32 %v1792, 0.5
        %v1805 = vmul.f32 %v1793, 0.5
        %v1806 = vmul.f32 %v1794, 0.5
        %v1807 = vmul.f32 %v1795, 0.5
        %v1808 = vmul.f32 %v1748, %v1796
        %v1809 = vmul.f32 %v1749, %v1797
        %v1810 = vmul.f32 %v1750, %v1798
        %v1811 = vmul.f32 %v1751, %v1799
        %v1812 = vmul.f32 %v1752, %v1800
        %v1813 = vmul.f32 %v1753, %v1801
        %v1814 = vmul.f32 %v1754, %v1802
        %v1815 = vmul.f32 %v1755, %v1803
        %v1816 = vmul.f32 %v1756, %v1804
        %v1817 = vmul.f32 %v1757, %v1805
        %v1818 = vmul.f32 %v1758, %v1806
        %v1819 = vmul.f32 %v1759, %v1807
        %s1820 = scalar_lea.vmem %s5, 16
        %v1821 = vld [vmem:[%s1820] sm:$0xff]
        %v1822 = vld [vmem:[%s1820 + $0x8] sm:$0xff]
        %s1823 = scalar_lea.vmem %s6, 16
        %v1824 = vld [vmem:[%s1823] sm:$0xff]
        %v1825 = vld [vmem:[%s1823 + $0x8] sm:$0xff]
        %1827 = vset.pattern.permute.xlu0 0
        %1828 = vperm.xlu0 %1827, %v1824
        %v1829 = vpop.permute.xlu0 %1828
        %1832 = vset.pattern.permute.xlu0 0
        %1833 = vperm.xlu0 %1832, %v1825
        %v1834 = vpop.permute.xlu0 %1833
        %v1837 = vsel %vm1107, %v1821, 0
        %v1840 = vsel %vm1107, %v1822, 0
        %1842 = vmatprep.subr.mxu0 %v1809
        %1843 = vmatpush1.msra.mxu0 %v1808
        %1844 = vmatprep.subr.mxu0 %v1815
        %1845 = vmatpush1.msra.mxu0 %v1814
        %1846 = vmatprep.subr.mxu0 0.0
        %1847 = vmatpush1.msra.mxu0 0.0
        %1848 = vmatprep.subr.mxu0 0.0
        %1849 = vmatpush1.msra.mxu0 0.0
        %1850 = vmatprep.subr.mxu0 0.0
        %1851 = vmatpush1.msra.mxu0 0.0
        %1852 = vmatprep.subr.mxu0 0.0
        %1853 = vmatpush1.msra.mxu0 0.0
        %1854 = vmatprep.subr.mxu0 0.0
        %1855 = vmatpush1.msra.mxu0 0.0
        %1856 = vmatprep.subr.mxu0 0.0
        %1857 = vmatpush1.msra.mxu0 0.0
        %1858 = vmatprep.subr.mxu0 0.0
        %1859 = vmatpush1.msra.mxu0 0.0
        %1860 = vmatprep.subr.mxu0 0.0
        %1861 = vmatpush1.msra.mxu0 0.0
        %1862 = vmatprep.subr.mxu0 0.0
        %1863 = vmatpush1.msra.mxu0 0.0
        %1864 = vmatprep.subr.mxu0 0.0
        %1865 = vmatpush1.msra.mxu0 0.0
        %1866 = vmatprep.subr.mxu0 0.0
        %1867 = vmatpush1.msra.mxu0 0.0
        %1868 = vmatprep.subr.mxu0 0.0
        %1869 = vmatpush1.msra.mxu0 0.0
        %1870 = vmatprep.subr.mxu0 0.0
        %1871 = vmatpush1.msra.mxu0 0.0
        %1872 = vmatprep.subr.mxu0 0.0
        %1873 = vmatpush1.msra.mxu0 0.0
        %1874 = vmatprep.subr.mxu0 0.0
        %1875 = vmatpush1.msra.mxu0 0.0
        %1876 = vmatprep.subr.mxu0 0.0
        %1877 = vmatpush1.msra.mxu0 0.0
        %1878 = vmatprep.subr.mxu0 0.0
        %1879 = vmatpush1.msra.mxu0 0.0
        %1880 = vmatprep.subr.mxu0 0.0
        %1881 = vmatpush1.msra.mxu0 0.0
        %1882 = vmatprep.subr.mxu0 0.0
        %1883 = vmatpush1.msra.mxu0 0.0
        %1884 = vmatprep.subr.mxu0 0.0
        %1885 = vmatpush1.msra.mxu0 0.0
        %1886 = vmatprep.subr.mxu0 0.0
        %1887 = vmatpush1.msra.mxu0 0.0
        %1888 = vmatprep.subr.mxu0 0.0
        %1889 = vmatpush1.msra.mxu0 0.0
        %1890 = vmatprep.subr.mxu0 0.0
        %1891 = vmatpush1.msra.mxu0 0.0
        %1892 = vmatprep.subr.mxu0 0.0
        %1893 = vmatpush1.msra.mxu0 0.0
        %1894 = vmatprep.subr.mxu0 0.0
        %1895 = vmatpush1.msra.mxu0 0.0
        %1896 = vmatprep.subr.mxu0 0.0
        %1897 = vmatpush1.msra.mxu0 0.0
        %1898 = vmatprep.subr.mxu0 0.0
        %1899 = vmatpush1.msra.mxu0 0.0
        %1900 = vmatprep.subr.mxu0 0.0
        %1901 = vmatpush1.msra.mxu0 0.0
        %1902 = vmatprep.subr.mxu0 0.0
        %1903 = vmatpush1.msra.mxu0 0.0
        %1904 = vmatprep.subr.mxu0 0.0
        %1905 = vmatpush1.msra.mxu0 0.0
        %1906 = vmatprep.mubr.f32.mxu0 0.0
        %1907 = vmatmul.mubr.f32.gmra.mrb[0].mxu0 %v1837
        %v1908 = vpop.f32.mrb[0].mxu0
        %v1909 = vadd.f32 %v1829, %v1908
        %v1910 = vpop.f32.mrb[0].mxu0
        %v1911 = vadd.f32 %v1829, %v1910
        %1912 = vmatprep.mubr.f32.mxu0 0.0
        %1913 = vmatmul.mubr.f32.gmra.mrb[0].mxu0 %v1840
        %v1914 = vpop.f32.mrb[0].mxu0
        %v1915 = vadd.f32 %v1834, %v1914
        %v1916 = vpop.f32.mrb[0].mxu0
        %v1917 = vadd.f32 %v1834, %v1916
        %1918 = vdwg.mxu0
        %1919 = vmatprep.subr.mxu0 %v1811
        %1920 = vmatpush1.msra.mxu0 %v1810
        %1921 = vmatprep.subr.mxu0 %v1817
        %1922 = vmatpush1.msra.mxu0 %v1816
        %1923 = vmatprep.subr.mxu0 0.0
        %1924 = vmatpush1.msra.mxu0 0.0
        %1925 = vmatprep.subr.mxu0 0.0
        %1926 = vmatpush1.msra.mxu0 0.0
        %1927 = vmatprep.subr.mxu0 0.0
        %1928 = vmatpush1.msra.mxu0 0.0
        %1929 = vmatprep.subr.mxu0 0.0
        %1930 = vmatpush1.msra.mxu0 0.0
        %1931 = vmatprep.subr.mxu0 0.0
        %1932 = vmatpush1.msra.mxu0 0.0
        %1933 = vmatprep.subr.mxu0 0.0
        %1934 = vmatpush1.msra.mxu0 0.0
        %1935 = vmatprep.subr.mxu0 0.0
        %1936 = vmatpush1.msra.mxu0 0.0
        %1937 = vmatprep.subr.mxu0 0.0
        %1938 = vmatpush1.msra.mxu0 0.0
        %1939 = vmatprep.subr.mxu0 0.0
        %1940 = vmatpush1.msra.mxu0 0.0
        %1941 = vmatprep.subr.mxu0 0.0
        %1942 = vmatpush1.msra.mxu0 0.0
        %1943 = vmatprep.subr.mxu0 0.0
        %1944 = vmatpush1.msra.mxu0 0.0
        %1945 = vmatprep.subr.mxu0 0.0
        %1946 = vmatpush1.msra.mxu0 0.0
        %1947 = vmatprep.subr.mxu0 0.0
        %1948 = vmatpush1.msra.mxu0 0.0
        %1949 = vmatprep.subr.mxu0 0.0
        %1950 = vmatpush1.msra.mxu0 0.0
        %1951 = vmatprep.subr.mxu0 0.0
        %1952 = vmatpush1.msra.mxu0 0.0
        %1953 = vmatprep.subr.mxu0 0.0
        %1954 = vmatpush1.msra.mxu0 0.0
        %1955 = vmatprep.subr.mxu0 0.0
        %1956 = vmatpush1.msra.mxu0 0.0
        %1957 = vmatprep.subr.mxu0 0.0
        %1958 = vmatpush1.msra.mxu0 0.0
        %1959 = vmatprep.subr.mxu0 0.0
        %1960 = vmatpush1.msra.mxu0 0.0
        %1961 = vmatprep.subr.mxu0 0.0
        %1962 = vmatpush1.msra.mxu0 0.0
        %1963 = vmatprep.subr.mxu0 0.0
        %1964 = vmatpush1.msra.mxu0 0.0
        %1965 = vmatprep.subr.mxu0 0.0
        %1966 = vmatpush1.msra.mxu0 0.0
        %1967 = vmatprep.subr.mxu0 0.0
        %1968 = vmatpush1.msra.mxu0 0.0
        %1969 = vmatprep.subr.mxu0 0.0
        %1970 = vmatpush1.msra.mxu0 0.0
        %1971 = vmatprep.subr.mxu0 0.0
        %1972 = vmatpush1.msra.mxu0 0.0
        %1973 = vmatprep.subr.mxu0 0.0
        %1974 = vmatpush1.msra.mxu0 0.0
        %1975 = vmatprep.subr.mxu0 0.0
        %1976 = vmatpush1.msra.mxu0 0.0
        %1977 = vmatprep.subr.mxu0 0.0
        %1978 = vmatpush1.msra.mxu0 0.0
        %1979 = vmatprep.subr.mxu0 0.0
        %1980 = vmatpush1.msra.mxu0 0.0
        %1981 = vmatprep.subr.mxu0 0.0
        %1982 = vmatpush1.msra.mxu0 0.0
        %1983 = vmatprep.mubr.f32.mxu0 0.0
        %1984 = vmatmul.mubr.f32.gmra.mrb[0].mxu0 %v1837
        %v1985 = vpop.f32.mrb[0].mxu0
        %v1986 = vadd.f32 %v1829, %v1985
        %v1987 = vpop.f32.mrb[0].mxu0
        %v1988 = vadd.f32 %v1829, %v1987
        %1989 = vmatprep.mubr.f32.mxu0 0.0
        %1990 = vmatmul.mubr.f32.gmra.mrb[0].mxu0 %v1840
        %v1991 = vpop.f32.mrb[0].mxu0
        %v1992 = vadd.f32 %v1834, %v1991
        %v1993 = vpop.f32.mrb[0].mxu0
        %v1994 = vadd.f32 %v1834, %v1993
        %1995 = vdwg.mxu0
        %1996 = vmatprep.subr.mxu0 %v1813
        %1997 = vmatpush1.msra.mxu0 %v1812
        %1998 = vmatprep.subr.mxu0 %v1819
        %1999 = vmatpush1.msra.mxu0 %v1818
        %2000 = vmatprep.subr.mxu0 0.0
        %2001 = vmatpush1.msra.mxu0 0.0
        %2002 = vmatprep.subr.mxu0 0.0
        %2003 = vmatpush1.msra.mxu0 0.0
        %2004 = vmatprep.subr.mxu0 0.0
        %2005 = vmatpush1.msra.mxu0 0.0
        %2006 = vmatprep.subr.mxu0 0.0
        %2007 = vmatpush1.msra.mxu0 0.0
        %2008 = vmatprep.subr.mxu0 0.0
        %2009 = vmatpush1.msra.mxu0 0.0
        %2010 = vmatprep.subr.mxu0 0.0
        %2011 = vmatpush1.msra.mxu0 0.0
        %2012 = vmatprep.subr.mxu0 0.0
        %2013 = vmatpush1.msra.mxu0 0.0
        %2014 = vmatprep.subr.mxu0 0.0
        %2015 = vmatpush1.msra.mxu0 0.0
        %2016 = vmatprep.subr.mxu0 0.0
        %2017 = vmatpush1.msra.mxu0 0.0
        %2018 = vmatprep.subr.mxu0 0.0
        %2019 = vmatpush1.msra.mxu0 0.0
        %2020 = vmatprep.subr.mxu0 0.0
        %2021 = vmatpush1.msra.mxu0 0.0
        %2022 = vmatprep.subr.mxu0 0.0
        %2023 = vmatpush1.msra.mxu0 0.0
        %2024 = vmatprep.subr.mxu0 0.0
        %2025 = vmatpush1.msra.mxu0 0.0
        %2026 = vmatprep.subr.mxu0 0.0
        %2027 = vmatpush1.msra.mxu0 0.0
        %2028 = vmatprep.subr.mxu0 0.0
        %2029 = vmatpush1.msra.mxu0 0.0
        %2030 = vmatprep.subr.mxu0 0.0
        %2031 = vmatpush1.msra.mxu0 0.0
        %2032 = vmatprep.subr.mxu0 0.0
        %2033 = vmatpush1.msra.mxu0 0.0
        %2034 = vmatprep.subr.mxu0 0.0
        %2035 = vmatpush1.msra.mxu0 0.0
        %2036 = vmatprep.subr.mxu0 0.0
        %2037 = vmatpush1.msra.mxu0 0.0
        %2038 = vmatprep.subr.mxu0 0.0
        %2039 = vmatpush1.msra.mxu0 0.0
        %2040 = vmatprep.subr.mxu0 0.0
        %2041 = vmatpush1.msra.mxu0 0.0
        %2042 = vmatprep.subr.mxu0 0.0
        %2043 = vmatpush1.msra.mxu0 0.0
        %2044 = vmatprep.subr.mxu0 0.0
        %2045 = vmatpush1.msra.mxu0 0.0
        %2046 = vmatprep.subr.mxu0 0.0
        %2047 = vmatpush1.msra.mxu0 0.0
        %2048 = vmatprep.subr.mxu0 0.0
        %2049 = vmatpush1.msra.mxu0 0.0
        %2050 = vmatprep.subr.mxu0 0.0
        %2051 = vmatpush1.msra.mxu0 0.0
        %2052 = vmatprep.subr.mxu0 0.0
        %2053 = vmatpush1.msra.mxu0 0.0
        %2054 = vmatprep.subr.mxu0 0.0
        %2055 = vmatpush1.msra.mxu0 0.0
        %2056 = vmatprep.subr.mxu0 0.0
        %2057 = vmatpush1.msra.mxu0 0.0
        %2058 = vmatprep.subr.mxu0 0.0
        %2059 = vmatpush1.msra.mxu0 0.0
        %2060 = vmatprep.mubr.f32.mxu0 0.0
        %2061 = vmatmul.mubr.f32.gmra.mrb[0].mxu0 %v1837
        %v2062 = vpop.f32.mrb[0].mxu0
        %v2063 = vadd.f32 %v1829, %v2062
        %v2064 = vpop.f32.mrb[0].mxu0
        %v2065 = vadd.f32 %v1829, %v2064
        %2066 = vmatprep.mubr.f32.mxu0 0.0
        %2067 = vmatmul.mubr.f32.gmra.mrb[0].mxu0 %v1840
        %v2068 = vpop.f32.mrb[0].mxu0
        %v2069 = vadd.f32 %v1834, %v2068
        %v2070 = vpop.f32.mrb[0].mxu0
        %v2071 = vadd.f32 %v1834, %v2070
        %2072 = vdwg.mxu0
        %v2073 = vsel %vm363, %v1909, 0.0
        %v2074 = vsel %vm364, %v1911, 0.0
        %v2075 = vsel %vm365, %v1986, 0.0
        %v2076 = vsel %vm366, %v1988, 0.0
        %v2077 = vsel %vm367, %v2063, 0.0
        %v2078 = vsel %vm368, %v2065, 0.0
        %v2079 = vsel %vm363, %v1915, 0.0
        %v2080 = vsel %vm364, %v1917, 0.0
        %v2081 = vsel %vm365, %v1992, 0.0
        %v2082 = vsel %vm366, %v1994, 0.0
        %v2083 = vsel %vm367, %v2069, 0.0
        %v2084 = vsel %vm368, %v2071, 0.0
        %v2085 = vadd.f32 %v1357, %v2074
        %v2086 = vadd.f32 %v1358, %v2075
        %v2087 = vadd.f32 %v1359, %v2076
        %v2088 = vadd.f32 %v1360, %v2077
        %v2089 = vadd.f32 %v1361, %v2080
        %v2090 = vadd.f32 %v1362, %v2081
        %v2091 = vadd.f32 %v1363, %v2082
        %v2092 = vadd.f32 %v1364, %v2083
        %2093 = vrot.lane.b32.xlu0 %v2073, 4
        %v2094 = vpop.permute.xlu0 %2093
        %2095 = vrot.lane.b32.xlu0 %v2079, 4
        %v2096 = vpop.permute.xlu0 %2095
        %2097 = vrot.lane.b32.xlu0 %v2074, 4
        %v2098 = vpop.permute.xlu0 %2097
        %2099 = vrot.lane.b32.xlu0 %v2080, 4
        %v2100 = vpop.permute.xlu0 %2099
        %2101 = vrot.lane.b32.xlu0 %v2075, 4
        %v2102 = vpop.permute.xlu0 %2101
        %2103 = vrot.lane.b32.xlu0 %v2081, 4
        %v2104 = vpop.permute.xlu0 %2103
        %2105 = vrot.lane.b32.xlu0 %v2076, 4
        %v2106 = vpop.permute.xlu0 %2105
        %2107 = vrot.lane.b32.xlu0 %v2082, 4
        %v2108 = vpop.permute.xlu0 %2107
        %2109 = vrot.lane.b32.xlu0 %v2077, 4
        %v2110 = vpop.permute.xlu0 %2109
        %2111 = vrot.lane.b32.xlu0 %v2083, 4
        %v2112 = vpop.permute.xlu0 %2111
        %2113 = vrot.lane.b32.xlu0 %v2078, 4
        %v2114 = vpop.permute.xlu0 %2113
        %2115 = vrot.lane.b32.xlu0 %v2084, 4
        %v2116 = vpop.permute.xlu0 %2115
        %vm2117 = vcmp.lt.s32.totalorder %v325, 4
        %v2118 = vsel %vm2117, %v2110, %v2114
        %v2119 = vsel %vm2117, %v2112, %v2116
        %v2120 = vsel %vm2117, %v2106, %v2110
        %v2121 = vsel %vm2117, %v2108, %v2112
        %v2122 = vsel %vm2117, %v2102, %v2106
        %v2123 = vsel %vm2117, %v2104, %v2108
        %v2124 = vsel %vm2117, %v2098, %v2102
        %v2125 = vsel %vm2117, %v2100, %v2104
        %v2126 = vsel %vm2117, %v2094, %v2098
        %v2127 = vsel %vm2117, %v2096, %v2100
        %v2128 = vsel %vm2117, %v2114, %v2094
        %v2129 = vsel %vm2117, %v2116, %v2096
        %2130 = vrot.lane.b32.xlu0 %v2073, 124
        %v2131 = vpop.permute.xlu0 %2130
        %2132 = vrot.lane.b32.xlu0 %v2079, 124
        %v2133 = vpop.permute.xlu0 %2132
        %2134 = vrot.lane.b32.xlu0 %v2074, 124
        %v2135 = vpop.permute.xlu0 %2134
        %2136 = vrot.lane.b32.xlu0 %v2080, 124
        %v2137 = vpop.permute.xlu0 %2136
        %2138 = vrot.lane.b32.xlu0 %v2075, 124
        %v2139 = vpop.permute.xlu0 %2138
        %2140 = vrot.lane.b32.xlu0 %v2081, 124
        %v2141 = vpop.permute.xlu0 %2140
        %2142 = vrot.lane.b32.xlu0 %v2076, 124
        %v2143 = vpop.permute.xlu0 %2142
        %2144 = vrot.lane.b32.xlu0 %v2082, 124
        %v2145 = vpop.permute.xlu0 %2144
        %2146 = vrot.lane.b32.xlu0 %v2077, 124
        %v2147 = vpop.permute.xlu0 %2146
        %2148 = vrot.lane.b32.xlu0 %v2083, 124
        %v2149 = vpop.permute.xlu0 %2148
        %2150 = vrot.lane.b32.xlu0 %v2078, 124
        %v2151 = vpop.permute.xlu0 %2150
        %2152 = vrot.lane.b32.xlu0 %v2084, 124
        %v2153 = vpop.permute.xlu0 %2152
        %vm2154 = vcmp.lt.s32.totalorder %v325, 124
        %v2155 = vsel %vm2154, %v2147, %v2151
        %v2156 = vsel %vm2154, %v2149, %v2153
        %v2157 = vsel %vm2154, %v2143, %v2147
        %v2158 = vsel %vm2154, %v2145, %v2149
        %v2159 = vsel %vm2154, %v2139, %v2143
        %v2160 = vsel %vm2154, %v2141, %v2145
        %v2161 = vsel %vm2154, %v2135, %v2139
        %v2162 = vsel %vm2154, %v2137, %v2141
        %v2163 = vsel %vm2154, %v2131, %v2135
        %v2164 = vsel %vm2154, %v2133, %v2137
        %v2165 = vsel %vm2154, %v2151, %v2131
        %v2166 = vsel %vm2154, %v2153, %v2133
        %s2167 = scalar_lea.vmem [#allocation4], 64
        %v2168 = vld [vmem:[%s2167] sm:$0xff]
        %v2169 = vld [vmem:[%s2167 + $0x8] sm:$0xff]
        %v2170 = vld [vmem:[%s2167 + $0x10] sm:$0xff]
        %v2171 = vld [vmem:[%s2167 + $0x18] sm:$0xff]
        %s2172 = scalar_lea.vmem %s4, 64
        %v2173 = vld [vmem:[%s2172] sm:$0xff]
        %v2174 = vld [vmem:[%s2172 + $0x8] sm:$0xff]
        %v2175 = vld [vmem:[%s2172 + $0x10] sm:$0xff]
        %v2176 = vld [vmem:[%s2172 + $0x18] sm:$0xff]
        %2178 = vset.pattern.permute.xlu0 0
        %2179 = vperm.xlu0 %2178, %v2173
        %v2180 = vpop.permute.xlu0 %2179
        %2183 = vset.pattern.permute.xlu0 0
        %2184 = vperm.xlu0 %2183, %v2174
        %v2185 = vpop.permute.xlu0 %2184
        %2188 = vset.pattern.permute.xlu0 0
        %2189 = vperm.xlu0 %2188, %v2175
        %v2190 = vpop.permute.xlu0 %2189
        %2193 = vset.pattern.permute.xlu0 0
        %2194 = vperm.xlu0 %2193, %v2176
        %v2195 = vpop.permute.xlu0 %2194
        %v2198 = vsel %vm741, %v2168, 0
        %v2201 = vsel %vm741, %v2169, 0
        %v2204 = vsel %vm741, %v2170, 0
        %v2207 = vsel %vm741, %v2171, 0
        %2209 = vmatprep.subr.mxu0 %v2126
        %2210 = vmatpush1.msra.mxu0 %v2128
        %2211 = vmatprep.subr.mxu0 %v2127
        %2212 = vmatpush1.msra.mxu0 %v2129
        %2213 = vmatprep.subr.mxu0 %v2074
        %2214 = vmatpush1.msra.mxu0 %v2073
        %2215 = vmatprep.subr.mxu0 %v2080
        %2216 = vmatpush1.msra.mxu0 %v2079
        %2217 = vmatprep.subr.mxu0 %v2161
        %2218 = vmatpush1.msra.mxu0 %v2163
        %2219 = vmatprep.subr.mxu0 %v2162
        %2220 = vmatpush1.msra.mxu0 %v2164
        %2221 = vmatprep.subr.mxu0 0.0
        %2222 = vmatpush1.msra.mxu0 0.0
        %2223 = vmatprep.subr.mxu0 0.0
        %2224 = vmatpush1.msra.mxu0 0.0
        %2225 = vmatprep.subr.mxu0 0.0
        %2226 = vmatpush1.msra.mxu0 0.0
        %2227 = vmatprep.subr.mxu0 0.0
        %2228 = vmatpush1.msra.mxu0 0.0
        %2229 = vmatprep.subr.mxu0 0.0
        %2230 = vmatpush1.msra.mxu0 0.0
        %2231 = vmatprep.subr.mxu0 0.0
        %2232 = vmatpush1.msra.mxu0 0.0
        %2233 = vmatprep.subr.mxu0 0.0
        %2234 = vmatpush1.msra.mxu0 0.0
        %2235 = vmatprep.subr.mxu0 0.0
        %2236 = vmatpush1.msra.mxu0 0.0
        %2237 = vmatprep.subr.mxu0 0.0
        %2238 = vmatpush1.msra.mxu0 0.0
        %2239 = vmatprep.subr.mxu0 0.0
        %2240 = vmatpush1.msra.mxu0 0.0
        %2241 = vmatprep.subr.mxu0 0.0
        %2242 = vmatpush1.msra.mxu0 0.0
        %2243 = vmatprep.subr.mxu0 0.0
        %2244 = vmatpush1.msra.mxu0 0.0
        %2245 = vmatprep.subr.mxu0 0.0
        %2246 = vmatpush1.msra.mxu0 0.0
        %2247 = vmatprep.subr.mxu0 0.0
        %2248 = vmatpush1.msra.mxu0 0.0
        %2249 = vmatprep.subr.mxu0 0.0
        %2250 = vmatpush1.msra.mxu0 0.0
        %2251 = vmatprep.subr.mxu0 0.0
        %2252 = vmatpush1.msra.mxu0 0.0
        %2253 = vmatprep.subr.mxu0 0.0
        %2254 = vmatpush1.msra.mxu0 0.0
        %2255 = vmatprep.subr.mxu0 0.0
        %2256 = vmatpush1.msra.mxu0 0.0
        %2257 = vmatprep.subr.mxu0 0.0
        %2258 = vmatpush1.msra.mxu0 0.0
        %2259 = vmatprep.subr.mxu0 0.0
        %2260 = vmatpush1.msra.mxu0 0.0
        %2261 = vmatprep.subr.mxu0 0.0
        %2262 = vmatpush1.msra.mxu0 0.0
        %2263 = vmatprep.subr.mxu0 0.0
        %2264 = vmatpush1.msra.mxu0 0.0
        %2265 = vmatprep.subr.mxu0 0.0
        %2266 = vmatpush1.msra.mxu0 0.0
        %2267 = vmatprep.subr.mxu0 0.0
        %2268 = vmatpush1.msra.mxu0 0.0
        %2269 = vmatprep.subr.mxu0 0.0
        %2270 = vmatpush1.msra.mxu0 0.0
        %2271 = vmatprep.subr.mxu0 0.0
        %2272 = vmatpush1.msra.mxu0 0.0
        %2273 = vmatprep.mubr.f32.mxu0 0.0
        %2274 = vmatmul.mubr.f32.gmra.mrb[0].mxu0 %v2198
        %v2275 = vpop.f32.mrb[0].mxu0
        %v2276 = vadd.f32 %v2180, %v2275
        %v2277 = vpop.f32.mrb[0].mxu0
        %v2278 = vadd.f32 %v2180, %v2277
        %2279 = vmatprep.mubr.f32.mxu0 0.0
        %2280 = vmatmul.mubr.f32.gmra.mrb[0].mxu0 %v2201
        %v2281 = vpop.f32.mrb[0].mxu0
        %v2282 = vadd.f32 %v2185, %v2281
        %v2283 = vpop.f32.mrb[0].mxu0
        %v2284 = vadd.f32 %v2185, %v2283
        %2285 = vmatprep.mubr.f32.mxu0 0.0
        %2286 = vmatmul.mubr.f32.gmra.mrb[0].mxu0 %v2204
        %v2287 = vpop.f32.mrb[0].mxu0
        %v2288 = vadd.f32 %v2190, %v2287
        %v2289 = vpop.f32.mrb[0].mxu0
        %v2290 = vadd.f32 %v2190, %v2289
        %2291 = vmatprep.mubr.f32.mxu0 0.0
        %2292 = vmatmul.mubr.f32.gmra.mrb[0].mxu0 %v2207
        %v2293 = vpop.f32.mrb[0].mxu0
        %v2294 = vadd.f32 %v2195, %v2293
        %v2295 = vpop.f32.mrb[0].mxu0
        %v2296 = vadd.f32 %v2195, %v2295
        %2297 = vdwg.mxu0
        %2298 = vmatprep.subr.mxu0 %v2122
        %2299 = vmatpush1.msra.mxu0 %v2124
        %2300 = vmatprep.subr.mxu0 %v2123
        %2301 = vmatpush1.msra.mxu0 %v2125
        %2302 = vmatprep.subr.mxu0 %v2076
        %2303 = vmatpush1.msra.mxu0 %v2075
        %2304 = vmatprep.subr.mxu0 %v2082
        %2305 = vmatpush1.msra.mxu0 %v2081
        %2306 = vmatprep.subr.mxu0 %v2157
        %2307 = vmatpush1.msra.mxu0 %v2159
        %2308 = vmatprep.subr.mxu0 %v2158
        %2309 = vmatpush1.msra.mxu0 %v2160
        %2310 = vmatprep.subr.mxu0 0.0
        %2311 = vmatpush1.msra.mxu0 0.0
        %2312 = vmatprep.subr.mxu0 0.0
        %2313 = vmatpush1.msra.mxu0 0.0
        %2314 = vmatprep.subr.mxu0 0.0
        %2315 = vmatpush1.msra.mxu0 0.0
        %2316 = vmatprep.subr.mxu0 0.0
        %2317 = vmatpush1.msra.mxu0 0.0
        %2318 = vmatprep.subr.mxu0 0.0
        %2319 = vmatpush1.msra.mxu0 0.0
        %2320 = vmatprep.subr.mxu0 0.0
        %2321 = vmatpush1.msra.mxu0 0.0
        %2322 = vmatprep.subr.mxu0 0.0
        %2323 = vmatpush1.msra.mxu0 0.0
        %2324 = vmatprep.subr.mxu0 0.0
        %2325 = vmatpush1.msra.mxu0 0.0
        %2326 = vmatprep.subr.mxu0 0.0
        %2327 = vmatpush1.msra.mxu0 0.0
        %2328 = vmatprep.subr.mxu0 0.0
        %2329 = vmatpush1.msra.mxu0 0.0
        %2330 = vmatprep.subr.mxu0 0.0
        %2331 = vmatpush1.msra.mxu0 0.0
        %2332 = vmatprep.subr.mxu0 0.0
        %2333 = vmatpush1.msra.mxu0 0.0
        %2334 = vmatprep.subr.mxu0 0.0
        %2335 = vmatpush1.msra.mxu0 0.0
        %2336 = vmatprep.subr.mxu0 0.0
        %2337 = vmatpush1.msra.mxu0 0.0
        %2338 = vmatprep.subr.mxu0 0.0
        %2339 = vmatpush1.msra.mxu0 0.0
        %2340 = vmatprep.subr.mxu0 0.0
        %2341 = vmatpush1.msra.mxu0 0.0
        %2342 = vmatprep.subr.mxu0 0.0
        %2343 = vmatpush1.msra.mxu0 0.0
        %2344 = vmatprep.subr.mxu0 0.0
        %2345 = vmatpush1.msra.mxu0 0.0
        %2346 = vmatprep.subr.mxu0 0.0
        %2347 = vmatpush1.msra.mxu0 0.0
        %2348 = vmatprep.subr.mxu0 0.0
        %2349 = vmatpush1.msra.mxu0 0.0
        %2350 = vmatprep.subr.mxu0 0.0
        %2351 = vmatpush1.msra.mxu0 0.0
        %2352 = vmatprep.subr.mxu0 0.0
        %2353 = vmatpush1.msra.mxu0 0.0
        %2354 = vmatprep.subr.mxu0 0.0
        %2355 = vmatpush1.msra.mxu0 0.0
        %2356 = vmatprep.subr.mxu0 0.0
        %2357 = vmatpush1.msra.mxu0 0.0
        %2358 = vmatprep.subr.mxu0 0.0
        %2359 = vmatpush1.msra.mxu0 0.0
        %2360 = vmatprep.subr.mxu0 0.0
        %2361 = vmatpush1.msra.mxu0 0.0
        %2362 = vmatprep.mubr.f32.mxu0 0.0
        %2363 = vmatmul.mubr.f32.gmra.mrb[0].mxu0 %v2198
        %v2364 = vpop.f32.mrb[0].mxu0
        %v2365 = vadd.f32 %v2180, %v2364
        %v2366 = vpop.f32.mrb[0].mxu0
        %v2367 = vadd.f32 %v2180, %v2366
        %2368 = vmatprep.mubr.f32.mxu0 0.0
        %2369 = vmatmul.mubr.f32.gmra.mrb[0].mxu0 %v2201
        %v2370 = vpop.f32.mrb[0].mxu0
        %v2371 = vadd.f32 %v2185, %v2370
        %v2372 = vpop.f32.mrb[0].mxu0
        %v2373 = vadd.f32 %v2185, %v2372
        %2374 = vmatprep.mubr.f32.mxu0 0.0
        %2375 = vmatmul.mubr.f32.gmra.mrb[0].mxu0 %v2204
        %v2376 = vpop.f32.mrb[0].mxu0
        %v2377 = vadd.f32 %v2190, %v2376
        %v2378 = vpop.f32.mrb[0].mxu0
        %v2379 = vadd.f32 %v2190, %v2378
        %2380 = vmatprep.mubr.f32.mxu0 0.0
        %2381 = vmatmul.mubr.f32.gmra.mrb[0].mxu0 %v2207
        %v2382 = vpop.f32.mrb[0].mxu0
        %v2383 = vadd.f32 %v2195, %v2382
        %v2384 = vpop.f32.mrb[0].mxu0
        %v2385 = vadd.f32 %v2195, %v2384
        %2386 = vdwg.mxu0
        %2387 = vmatprep.subr.mxu0 %v2118
        %2388 = vmatpush1.msra.mxu0 %v2120
        %2389 = vmatprep.subr.mxu0 %v2119
        %2390 = vmatpush1.msra.mxu0 %v2121
        %2391 = vmatprep.subr.mxu0 %v2078
        %2392 = vmatpush1.msra.mxu0 %v2077
        %2393 = vmatprep.subr.mxu0 %v2084
        %2394 = vmatpush1.msra.mxu0 %v2083
        %2395 = vmatprep.subr.mxu0 %v2165
        %2396 = vmatpush1.msra.mxu0 %v2155
        %2397 = vmatprep.subr.mxu0 %v2166
        %2398 = vmatpush1.msra.mxu0 %v2156
        %2399 = vmatprep.subr.mxu0 0.0
        %2400 = vmatpush1.msra.mxu0 0.0
        %2401 = vmatprep.subr.mxu0 0.0
        %2402 = vmatpush1.msra.mxu0 0.0
        %2403 = vmatprep.subr.mxu0 0.0
        %2404 = vmatpush1.msra.mxu0 0.0
        %2405 = vmatprep.subr.mxu0 0.0
        %2406 = vmatpush1.msra.mxu0 0.0
        %2407 = vmatprep.subr.mxu0 0.0
        %2408 = vmatpush1.msra.mxu0 0.0
        %2409 = vmatprep.subr.mxu0 0.0
        %2410 = vmatpush1.msra.mxu0 0.0
        %2411 = vmatprep.subr.mxu0 0.0
        %2412 = vmatpush1.msra.mxu0 0.0
        %2413 = vmatprep.subr.mxu0 0.0
        %2414 = vmatpush1.msra.mxu0 0.0
        %2415 = vmatprep.subr.mxu0 0.0
        %2416 = vmatpush1.msra.mxu0 0.0
        %2417 = vmatprep.subr.mxu0 0.0
        %2418 = vmatpush1.msra.mxu0 0.0
        %2419 = vmatprep.subr.mxu0 0.0
        %2420 = vmatpush1.msra.mxu0 0.0
        %2421 = vmatprep.subr.mxu0 0.0
        %2422 = vmatpush1.msra.mxu0 0.0
        %2423 = vmatprep.subr.mxu0 0.0
        %2424 = vmatpush1.msra.mxu0 0.0
        %2425 = vmatprep.subr.mxu0 0.0
        %2426 = vmatpush1.msra.mxu0 0.0
        %2427 = vmatprep.subr.mxu0 0.0
        %2428 = vmatpush1.msra.mxu0 0.0
        %2429 = vmatprep.subr.mxu0 0.0
        %2430 = vmatpush1.msra.mxu0 0.0
        %2431 = vmatprep.subr.mxu0 0.0
        %2432 = vmatpush1.msra.mxu0 0.0
        %2433 = vmatprep.subr.mxu0 0.0
        %2434 = vmatpush1.msra.mxu0 0.0
        %2435 = vmatprep.subr.mxu0 0.0
        %2436 = vmatpush1.msra.mxu0 0.0
        %2437 = vmatprep.subr.mxu0 0.0
        %2438 = vmatpush1.msra.mxu0 0.0
        %2439 = vmatprep.subr.mxu0 0.0
        %2440 = vmatpush1.msra.mxu0 0.0
        %2441 = vmatprep.subr.mxu0 0.0
        %2442 = vmatpush1.msra.mxu0 0.0
        %2443 = vmatprep.subr.mxu0 0.0
        %2444 = vmatpush1.msra.mxu0 0.0
        %2445 = vmatprep.subr.mxu0 0.0
        %2446 = vmatpush1.msra.mxu0 0.0
        %2447 = vmatprep.subr.mxu0 0.0
        %2448 = vmatpush1.msra.mxu0 0.0
        %2449 = vmatprep.subr.mxu0 0.0
        %2450 = vmatpush1.msra.mxu0 0.0
        %2451 = vmatprep.mubr.f32.mxu0 0.0
        %2452 = vmatmul.mubr.f32.gmra.mrb[0].mxu0 %v2198
        %v2453 = vpop.f32.mrb[0].mxu0
        %v2454 = vadd.f32 %v2180, %v2453
        %v2455 = vpop.f32.mrb[0].mxu0
        %v2456 = vadd.f32 %v2180, %v2455
        %2457 = vmatprep.mubr.f32.mxu0 0.0
        %2458 = vmatmul.mubr.f32.gmra.mrb[0].mxu0 %v2201
        %v2459 = vpop.f32.mrb[0].mxu0
        %v2460 = vadd.f32 %v2185, %v2459
        %v2461 = vpop.f32.mrb[0].mxu0
        %v2462 = vadd.f32 %v2185, %v2461
        %2463 = vmatprep.mubr.f32.mxu0 0.0
        %2464 = vmatmul.mubr.f32.gmra.mrb[0].mxu0 %v2204
        %v2465 = vpop.f32.mrb[0].mxu0
        %v2466 = vadd.f32 %v2190, %v2465
        %v2467 = vpop.f32.mrb[0].mxu0
        %v2468 = vadd.f32 %v2190, %v2467
        %2469 = vmatprep.mubr.f32.mxu0 0.0
        %2470 = vmatmul.mubr.f32.gmra.mrb[0].mxu0 %v2207
        %v2471 = vpop.f32.mrb[0].mxu0
        %v2472 = vadd.f32 %v2195, %v2471
        %v2473 = vpop.f32.mrb[0].mxu0
        %v2474 = vadd.f32 %v2195, %v2473
        %2475 = vdwg.mxu0
        %v2476 = vtanh.pop %v2276
        %v2477 = vtanh.pop %v2278
        %v2478 = vtanh.pop %v2365
        %v2479 = vtanh.pop %v2367
        %v2480 = vtanh.pop %v2454
        %v2481 = vtanh.pop %v2456
        %v2482 = vtanh.pop %v2282
        %v2483 = vtanh.pop %v2284
        %v2484 = vtanh.pop %v2371
        %v2485 = vtanh.pop %v2373
        %v2486 = vtanh.pop %v2460
        %v2487 = vtanh.pop %v2462
        %v2488 = vmul.f32 %v2288, 0.5
        %v2489 = vmul.f32 %v2290, 0.5
        %v2490 = vmul.f32 %v2377, 0.5
        %v2491 = vmul.f32 %v2379, 0.5
        %v2492 = vmul.f32 %v2466, 0.5
        %v2493 = vmul.f32 %v2468, 0.5
        %v2494 = vmul.f32 %v2294, 0.5
        %v2495 = vmul.f32 %v2296, 0.5
        %v2496 = vmul.f32 %v2383, 0.5
        %v2497 = vmul.f32 %v2385, 0.5
        %v2498 = vmul.f32 %v2472, 0.5
        %v2499 = vmul.f32 %v2474, 0.5
        %v2500 = vtanh.pop %v2488
        %v2501 = vtanh.pop %v2489
        %v2502 = vtanh.pop %v2490
        %v2503 = vtanh.pop %v2491
        %v2504 = vtanh.pop %v2492
        %v2505 = vtanh.pop %v2493
        %v2506 = vtanh.pop %v2494
        %v2507 = vtanh.pop %v2495
        %v2508 = vtanh.pop %v2496
        %v2509 = vtanh.pop %v2497
        %v2510 = vtanh.pop %v2498
        %v2511 = vtanh.pop %v2499
        %v2512 = vadd.f32 %v2500, 1.0
        %v2513 = vadd.f32 %v2501, 1.0
        %v2514 = vadd.f32 %v2502, 1.0
        %v2515 = vadd.f32 %v2503, 1.0
        %v2516 = vadd.f32 %v2504, 1.0
        %v2517 = vadd.f32 %v2505, 1.0
        %v2518 = vadd.f32 %v2506, 1.0
        %v2519 = vadd.f32 %v2507, 1.0
        %v2520 = vadd.f32 %v2508, 1.0
        %v2521 = vadd.f32 %v2509, 1.0
        %v2522 = vadd.f32 %v2510, 1.0
        %v2523 = vadd.f32 %v2511, 1.0
        %v2524 = vmul.f32 %v2512, 0.5
        %v2525 = vmul.f32 %v2513, 0.5
        %v2526 = vmul.f32 %v2514, 0.5
        %v2527 = vmul.f32 %v2515, 0.5
        %v2528 = vmul.f32 %v2516, 0.5
        %v2529 = vmul.f32 %v2517, 0.5
        %v2530 = vmul.f32 %v2518, 0.5
        %v2531 = vmul.f32 %v2519, 0.5
        %v2532 = vmul.f32 %v2520, 0.5
        %v2533 = vmul.f32 %v2521, 0.5
        %v2534 = vmul.f32 %v2522, 0.5
        %v2535 = vmul.f32 %v2523, 0.5
        %v2536 = vmul.f32 %v2476, %v2524
        %v2537 = vmul.f32 %v2477, %v2525
        %v2538 = vmul.f32 %v2478, %v2526
        %v2539 = vmul.f32 %v2479, %v2527
        %v2540 = vmul.f32 %v2480, %v2528
        %v2541 = vmul.f32 %v2481, %v2529
        %v2542 = vmul.f32 %v2482, %v2530
        %v2543 = vmul.f32 %v2483, %v2531
        %v2544 = vmul.f32 %v2484, %v2532
        %v2545 = vmul.f32 %v2485, %v2533
        %v2546 = vmul.f32 %v2486, %v2534
        %v2547 = vmul.f32 %v2487, %v2535
        %s2548 = scalar_lea.vmem %s5, 32
        %v2549 = vld [vmem:[%s2548] sm:$0xff]
        %v2550 = vld [vmem:[%s2548 + $0x8] sm:$0xff]
        %s2551 = scalar_lea.vmem %s6, 32
        %v2552 = vld [vmem:[%s2551] sm:$0xff]
        %v2553 = vld [vmem:[%s2551 + $0x8] sm:$0xff]
        %2555 = vset.pattern.permute.xlu0 0
        %2556 = vperm.xlu0 %2555, %v2552
        %v2557 = vpop.permute.xlu0 %2556
        %2560 = vset.pattern.permute.xlu0 0
        %2561 = vperm.xlu0 %2560, %v2553
        %v2562 = vpop.permute.xlu0 %2561
        %v2565 = vsel %vm1107, %v2549, 0
        %v2568 = vsel %vm1107, %v2550, 0
        %2570 = vmatprep.subr.mxu0 %v2537
        %2571 = vmatpush1.msra.mxu0 %v2536
        %2572 = vmatprep.subr.mxu0 %v2543
        %2573 = vmatpush1.msra.mxu0 %v2542
        %2574 = vmatprep.subr.mxu0 0.0
        %2575 = vmatpush1.msra.mxu0 0.0
        %2576 = vmatprep.subr.mxu0 0.0
        %2577 = vmatpush1.msra.mxu0 0.0
        %2578 = vmatprep.subr.mxu0 0.0
        %2579 = vmatpush1.msra.mxu0 0.0
        %2580 = vmatprep.subr.mxu0 0.0
        %2581 = vmatpush1.msra.mxu0 0.0
        %2582 = vmatprep.subr.mxu0 0.0
        %2583 = vmatpush1.msra.mxu0 0.0
        %2584 = vmatprep.subr.mxu0 0.0
        %2585 = vmatpush1.msra.mxu0 0.0
        %2586 = vmatprep.subr.mxu0 0.0
        %2587 = vmatpush1.msra.mxu0 0.0
        %2588 = vmatprep.subr.mxu0 0.0
        %2589 = vmatpush1.msra.mxu0 0.0
        %2590 = vmatprep.subr.mxu0 0.0
        %2591 = vmatpush1.msra.mxu0 0.0
        %2592 = vmatprep.subr.mxu0 0.0
        %2593 = vmatpush1.msra.mxu0 0.0
        %2594 = vmatprep.subr.mxu0 0.0
        %2595 = vmatpush1.msra.mxu0 0.0
        %2596 = vmatprep.subr.mxu0 0.0
        %2597 = vmatpush1.msra.mxu0 0.0
        %2598 = vmatprep.subr.mxu0 0.0
        %2599 = vmatpush1.msra.mxu0 0.0
        %2600 = vmatprep.subr.mxu0 0.0
        %2601 = vmatpush1.msra.mxu0 0.0
        %2602 = vmatprep.subr.mxu0 0.0
        %2603 = vmatpush1.msra.mxu0 0.0
        %2604 = vmatprep.subr.mxu0 0.0
        %2605 = vmatpush1.msra.mxu0 0.0
        %2606 = vmatprep.subr.mxu0 0.0
        %2607 = vmatpush1.msra.mxu0 0.0
        %2608 = vmatprep.subr.mxu0 0.0
        %2609 = vmatpush1.msra.mxu0 0.0
        %2610 = vmatprep.subr.mxu0 0.0
        %2611 = vmatpush1.msra.mxu0 0.0
        %2612 = vmatprep.subr.mxu0 0.0
        %2613 = vmatpush1.msra.mxu0 0.0
        %2614 = vmatprep.subr.mxu0 0.0
        %2615 = vmatpush1.msra.mxu0 0.0
        %2616 = vmatprep.subr.mxu0 0.0
        %2617 = vmatpush1.msra.mxu0 0.0
        %2618 = vmatprep.subr.mxu0 0.0
        %2619 = vmatpush1.msra.mxu0 0.0
        %2620 = vmatprep.subr.mxu0 0.0
        %2621 = vmatpush1.msra.mxu0 0.0
        %2622 = vmatprep.subr.mxu0 0.0
        %2623 = vmatpush1.msra.mxu0 0.0
        %2624 = vmatprep.subr.mxu0 0.0
        %2625 = vmatpush1.msra.mxu0 0.0
        %2626 = vmatprep.subr.mxu0 0.0
        %2627 = vmatpush1.msra.mxu0 0.0
        %2628 = vmatprep.subr.mxu0 0.0
        %2629 = vmatpush1.msra.mxu0 0.0
        %2630 = vmatprep.subr.mxu0 0.0
        %2631 = vmatpush1.msra.mxu0 0.0
        %2632 = vmatprep.subr.mxu0 0.0
        %2633 = vmatpush1.msra.mxu0 0.0
        %2634 = vmatprep.mubr.f32.mxu0 0.0
        %2635 = vmatmul.mubr.f32.gmra.mrb[0].mxu0 %v2565
        %v2636 = vpop.f32.mrb[0].mxu0
        %v2637 = vpop.f32.mrb[0].mxu0
        %v2638 = vadd.f32 %v2557, %v2637
        %2639 = vmatprep.mubr.f32.mxu0 0.0
        %2640 = vmatmul.mubr.f32.gmra.mrb[0].mxu0 %v2568
        %v2641 = vpop.f32.mrb[0].mxu0
        %v2642 = vpop.f32.mrb[0].mxu0
        %v2643 = vadd.f32 %v2562, %v2642
        %2644 = vdwg.mxu0
        %2645 = vmatprep.subr.mxu0 %v2539
        %2646 = vmatpush1.msra.mxu0 %v2538
        %2647 = vmatprep.subr.mxu0 %v2545
        %2648 = vmatpush1.msra.mxu0 %v2544
        %2649 = vmatprep.subr.mxu0 0.0
        %2650 = vmatpush1.msra.mxu0 0.0
        %2651 = vmatprep.subr.mxu0 0.0
        %2652 = vmatpush1.msra.mxu0 0.0
        %2653 = vmatprep.subr.mxu0 0.0
        %2654 = vmatpush1.msra.mxu0 0.0
        %2655 = vmatprep.subr.mxu0 0.0
        %2656 = vmatpush1.msra.mxu0 0.0
        %2657 = vmatprep.subr.mxu0 0.0
        %2658 = vmatpush1.msra.mxu0 0.0
        %2659 = vmatprep.subr.mxu0 0.0
        %2660 = vmatpush1.msra.mxu0 0.0
        %2661 = vmatprep.subr.mxu0 0.0
        %2662 = vmatpush1.msra.mxu0 0.0
        %2663 = vmatprep.subr.mxu0 0.0
        %2664 = vmatpush1.msra.mxu0 0.0
        %2665 = vmatprep.subr.mxu0 0.0
        %2666 = vmatpush1.msra.mxu0 0.0
        %2667 = vmatprep.subr.mxu0 0.0
        %2668 = vmatpush1.msra.mxu0 0.0
        %2669 = vmatprep.subr.mxu0 0.0
        %2670 = vmatpush1.msra.mxu0 0.0
        %2671 = vmatprep.subr.mxu0 0.0
        %2672 = vmatpush1.msra.mxu0 0.0
        %2673 = vmatprep.subr.mxu0 0.0
        %2674 = vmatpush1.msra.mxu0 0.0
        %2675 = vmatprep.subr.mxu0 0.0
        %2676 = vmatpush1.msra.mxu0 0.0
        %2677 = vmatprep.subr.mxu0 0.0
        %2678 = vmatpush1.msra.mxu0 0.0
        %2679 = vmatprep.subr.mxu0 0.0
        %2680 = vmatpush1.msra.mxu0 0.0
        %2681 = vmatprep.subr.mxu0 0.0
        %2682 = vmatpush1.msra.mxu0 0.0
        %2683 = vmatprep.subr.mxu0 0.0
        %2684 = vmatpush1.msra.mxu0 0.0
        %2685 = vmatprep.subr.mxu0 0.0
        %2686 = vmatpush1.msra.mxu0 0.0
        %2687 = vmatprep.subr.mxu0 0.0
        %2688 = vmatpush1.msra.mxu0 0.0
        %2689 = vmatprep.subr.mxu0 0.0
        %2690 = vmatpush1.msra.mxu0 0.0
        %2691 = vmatprep.subr.mxu0 0.0
        %2692 = vmatpush1.msra.mxu0 0.0
        %2693 = vmatprep.subr.mxu0 0.0
        %2694 = vmatpush1.msra.mxu0 0.0
        %2695 = vmatprep.subr.mxu0 0.0
        %2696 = vmatpush1.msra.mxu0 0.0
        %2697 = vmatprep.subr.mxu0 0.0
        %2698 = vmatpush1.msra.mxu0 0.0
        %2699 = vmatprep.subr.mxu0 0.0
        %2700 = vmatpush1.msra.mxu0 0.0
        %2701 = vmatprep.subr.mxu0 0.0
        %2702 = vmatpush1.msra.mxu0 0.0
        %2703 = vmatprep.subr.mxu0 0.0
        %2704 = vmatpush1.msra.mxu0 0.0
        %2705 = vmatprep.subr.mxu0 0.0
        %2706 = vmatpush1.msra.mxu0 0.0
        %2707 = vmatprep.subr.mxu0 0.0
        %2708 = vmatpush1.msra.mxu0 0.0
        %2709 = vmatprep.mubr.f32.mxu0 0.0
        %2710 = vmatmul.mubr.f32.gmra.mrb[0].mxu0 %v2565
        %v2711 = vpop.f32.mrb[0].mxu0
        %v2712 = vadd.f32 %v2557, %v2711
        %v2713 = vpop.f32.mrb[0].mxu0
        %v2714 = vadd.f32 %v2557, %v2713
        %2715 = vmatprep.mubr.f32.mxu0 0.0
        %2716 = vmatmul.mubr.f32.gmra.mrb[0].mxu0 %v2568
        %v2717 = vpop.f32.mrb[0].mxu0
        %v2718 = vadd.f32 %v2562, %v2717
        %v2719 = vpop.f32.mrb[0].mxu0
        %v2720 = vadd.f32 %v2562, %v2719
        %2721 = vdwg.mxu0
        %2722 = vmatprep.subr.mxu0 %v2541
        %2723 = vmatpush1.msra.mxu0 %v2540
        %2724 = vmatprep.subr.mxu0 %v2547
        %2725 = vmatpush1.msra.mxu0 %v2546
        %2726 = vmatprep.subr.mxu0 0.0
        %2727 = vmatpush1.msra.mxu0 0.0
        %2728 = vmatprep.subr.mxu0 0.0
        %2729 = vmatpush1.msra.mxu0 0.0
        %2730 = vmatprep.subr.mxu0 0.0
        %2731 = vmatpush1.msra.mxu0 0.0
        %2732 = vmatprep.subr.mxu0 0.0
        %2733 = vmatpush1.msra.mxu0 0.0
        %2734 = vmatprep.subr.mxu0 0.0
        %2735 = vmatpush1.msra.mxu0 0.0
        %2736 = vmatprep.subr.mxu0 0.0
        %2737 = vmatpush1.msra.mxu0 0.0
        %2738 = vmatprep.subr.mxu0 0.0
        %2739 = vmatpush1.msra.mxu0 0.0
        %2740 = vmatprep.subr.mxu0 0.0
        %2741 = vmatpush1.msra.mxu0 0.0
        %2742 = vmatprep.subr.mxu0 0.0
        %2743 = vmatpush1.msra.mxu0 0.0
        %2744 = vmatprep.subr.mxu0 0.0
        %2745 = vmatpush1.msra.mxu0 0.0
        %2746 = vmatprep.subr.mxu0 0.0
        %2747 = vmatpush1.msra.mxu0 0.0
        %2748 = vmatprep.subr.mxu0 0.0
        %2749 = vmatpush1.msra.mxu0 0.0
        %2750 = vmatprep.subr.mxu0 0.0
        %2751 = vmatpush1.msra.mxu0 0.0
        %2752 = vmatprep.subr.mxu0 0.0
        %2753 = vmatpush1.msra.mxu0 0.0
        %2754 = vmatprep.subr.mxu0 0.0
        %2755 = vmatpush1.msra.mxu0 0.0
        %2756 = vmatprep.subr.mxu0 0.0
        %2757 = vmatpush1.msra.mxu0 0.0
        %2758 = vmatprep.subr.mxu0 0.0
        %2759 = vmatpush1.msra.mxu0 0.0
        %2760 = vmatprep.subr.mxu0 0.0
        %2761 = vmatpush1.msra.mxu0 0.0
        %2762 = vmatprep.subr.mxu0 0.0
        %2763 = vmatpush1.msra.mxu0 0.0
        %2764 = vmatprep.subr.mxu0 0.0
        %2765 = vmatpush1.msra.mxu0 0.0
        %2766 = vmatprep.subr.mxu0 0.0
        %2767 = vmatpush1.msra.mxu0 0.0
        %2768 = vmatprep.subr.mxu0 0.0
        %2769 = vmatpush1.msra.mxu0 0.0
        %2770 = vmatprep.subr.mxu0 0.0
        %2771 = vmatpush1.msra.mxu0 0.0
        %2772 = vmatprep.subr.mxu0 0.0
        %2773 = vmatpush1.msra.mxu0 0.0
        %2774 = vmatprep.subr.mxu0 0.0
        %2775 = vmatpush1.msra.mxu0 0.0
        %2776 = vmatprep.subr.mxu0 0.0
        %2777 = vmatpush1.msra.mxu0 0.0
        %2778 = vmatprep.subr.mxu0 0.0
        %2779 = vmatpush1.msra.mxu0 0.0
        %2780 = vmatprep.subr.mxu0 0.0
        %2781 = vmatpush1.msra.mxu0 0.0
        %2782 = vmatprep.subr.mxu0 0.0
        %2783 = vmatpush1.msra.mxu0 0.0
        %2784 = vmatprep.subr.mxu0 0.0
        %2785 = vmatpush1.msra.mxu0 0.0
        %2786 = vmatprep.mubr.f32.mxu0 0.0
        %2787 = vmatmul.mubr.f32.gmra.mrb[0].mxu0 %v2565
        %v2788 = vpop.f32.mrb[0].mxu0
        %v2789 = vadd.f32 %v2557, %v2788
        %v2790 = vpop.f32.mrb[0].mxu0
        %2791 = vmatprep.mubr.f32.mxu0 0.0
        %2792 = vmatmul.mubr.f32.gmra.mrb[0].mxu0 %v2568
        %v2793 = vpop.f32.mrb[0].mxu0
        %v2794 = vadd.f32 %v2562, %v2793
        %v2795 = vpop.f32.mrb[0].mxu0
        %2796 = vdwg.mxu0
        %v2797 = vsel %vm364, %v2638, 0.0
        %v2798 = vsel %vm365, %v2712, 0.0
        %v2799 = vsel %vm366, %v2714, 0.0
        %v2800 = vsel %vm367, %v2789, 0.0
        %v2801 = vsel %vm364, %v2643, 0.0
        %v2802 = vsel %vm365, %v2718, 0.0
        %v2803 = vsel %vm366, %v2720, 0.0
        %v2804 = vsel %vm367, %v2794, 0.0
        %v2805 = vadd.f32 %v2085, %v2797
        %v2806 = vadd.f32 %v2086, %v2798
        %v2807 = vadd.f32 %v2087, %v2799
        %v2808 = vadd.f32 %v2088, %v2800
        %v2809 = vadd.f32 %v2089, %v2801
        %v2810 = vadd.f32 %v2090, %v2802
        %v2811 = vadd.f32 %v2091, %v2803
        %v2812 = vadd.f32 %v2092, %v2804
        %2813 = vst [vmem:[%s259] sm:$0xff] %v2805
        %2814 = vst [vmem:[%s259 + $0x8] sm:$0xff] %v2806
        %2815 = vst [vmem:[%s259 + $0x10] sm:$0xff] %v2807
        %2816 = vst [vmem:[%s259 + $0x18] sm:$0xff] %v2808
        %2817 = vst [vmem:[%s259 + $0x20] sm:$0xff] %v2809
        %2818 = vst [vmem:[%s259 + $0x28] sm:$0xff] %v2810
        %2819 = vst [vmem:[%s259 + $0x30] sm:$0xff] %v2811
        %2820 = vst [vmem:[%s259 + $0x38] sm:$0xff] %v2812
        %s2821 = sand.u32 %s170, 1
        %s2822 = scalar_lea.sflag [#allocation6], %s2821
        %s2823 = sand.u32 %s170, 1
        %s2824 = smul.addr %s2823, 64
        %s2825 = scalar_lea.vmem [#allocation7], %s2824
        // Predicated region
        $region83: #{tpu_custom_call.1} parent=43 // pred_check
          %p2826 = pneg %p180
        $region84: #{tpu_custom_call.1} parent=43 // pred_check_branch
          %2828 = sbr.rel (%p2826) target = $region86
        $region85: #{tpu_custom_call.1} parent=43 // pred_region
          %s2829 = smul.u32 4, %s27
          %s2831 = ssub.s32 1024, 1024
          %2832 = vsyncadd %s2822, %s2831
          %s2833 = smul.addr %s26, 16
          %s2834 = sadd.s32 %s2829, %s2833
          %s2835 = smul.addr %s2834, 128
          %s2836 = scalar_lea.hbm %s7, %s2835
          %s2837 = sshll.u32 %s2825, 4
          %s2838 = int_to_ptr.vmem [resolvable:$true] %s2837
          %2843 = dma.vmem_to_hbm [thread:$0]  %s2838, 1024, %s2836, %s2822, 512, 1024, 32
        $region86: #{tpu_custom_call.1} parent=43 // pred_fallthru
          _
      $region44: #{tpu_custom_call.1} parent=5 // pred_fallthru
        _
      %p2844 = scmp.le.s32.totalorder 2, %s17
      // Predicated region
      $region87: #{tpu_custom_call.1} parent=5 // pred_check
        %p2845 = pneg %p2844
      $region88: #{tpu_custom_call.1} parent=5 // pred_check_branch
        %2847 = sbr.rel (%p2845) target = $region90
      $region89: #{tpu_custom_call.1} parent=5 // pred_region
        %s2848 = ssub.s32 %s17, 2
        // Predicated region
        $region91: #{tpu_custom_call.1} parent=89 // pred_check
          %p2849 = pneg %p186
        $region92: #{tpu_custom_call.1} parent=89 // pred_check_branch
          %2851 = sbr.rel (%p2849) target = $region94
        $region93: #{tpu_custom_call.1} parent=89 // pred_region
          %s2852 = sand.u32 %s171, 1
          %s2853 = scalar_lea.sflag [#allocation6], %s2852
          %s2854 = sand.u32 %s171, 1
          %s2855 = smul.addr %s2854, 64
          %s2856 = scalar_lea.vmem [#allocation7], %s2855
          %2857 = dma.done %s2853, 1024
        $region94: #{tpu_custom_call.1} parent=89 // pred_fallthru
          _
      $region90: #{tpu_custom_call.1} parent=5 // pred_fallthru
        _
    $region6: #{tpu_custom_call.1} parent=1 // loop_footer
      %s21 = sadd.s32 1, %s17
    $region7: #{tpu_custom_call.1} parent=1 // loop_footer_branch
      %16 = sbr.rel target = $region3
    $region8: #{tpu_custom_call.1} parent=1 // loop_exit
      _
    %2858 = vsyncpa [#allocation5], 1
    %s2859 = scalar_lea.sflag [#allocation5], 1
    %2860 = vsyncpa %s2859, 1
    %2861 = vsyncpa [#allocation6], 1
    %s2862 = scalar_lea.sflag [#allocation6], 1
    %2863 = vsyncpa %s2862, 1
  %2864 = vsyncmov [#allocation3]
  %s2865 = vpop.sfrf %2864
  %p2866 = scmp.eq.s32.totalorder %s2865, 0
  %p2867 = pneg %p2866
  %2869 = shalt.err (%p2867)

</llo_original>
